<compile_context>
chip_gen: v5e
topology: v5e:2x2
jax: 0.10.0
libtpu: 0.0.40
codegen_flags: <defaults>
</compile_context>

<pallas_src>
import jax
import jax.numpy as jnp
from jax.experimental import pallas as pl
from jax.experimental.pallas import tpu as pltpu

EPS = 1e-5
# Explicit scoped-VMEM cap: >= default on every generation we target and well
# under v7x's 64 MiB physical VMEM (review: budget VMEM explicitly on v7x).
_VMEM_LIMIT = 32 * 1024 * 1024


# ---------------------------------------------------------------------------
# Kernels
# ---------------------------------------------------------------------------
def _make_conv_kernel(*, stride, ho, wo, cin, cout, cdtype, in_affine,
                      shortcut):
    """3x3 conv (pad=1) over one image as 9 accumulated MXU matmuls.

    Taps are gathered in-kernel from the pre-padded, phase-split input block
    (no im2col matrix in HBM).  Optionally fuses a per-channel affine + ReLU
    (the folded BN of the previous layer) onto the input stream, and a
    1x1-stride-2 shortcut conv that reuses the same input read.  Per-image
    sum / sum-of-squares of each conv output are emitted for training-mode BN.
    """
    s = stride
    m = ho * wo
    del cout  # (documented via y_ref shape)

    def kernel(*refs):
        it = iter(refs)
        xp_ref = next(it)                      # (1, P, Hq, Wq, Cin)
        sc_ref = sh_ref = None
        if in_affine:
            sc_ref = next(it)                  # (1, 1, Cin)
            sh_ref = next(it)                  # (1, 1, Cin)
        w_ref = next(it)                       # (9, Cin, Cout)
        wd_ref = next(it) if shortcut else None
        y_ref, su_ref, sq_ref = next(it), next(it), next(it)
        if shortcut:
            y3_ref, su3_ref, sq3_ref = next(it), next(it), next(it)
        acc_ref = next(it)                     # VMEM scratch (m, Cout) f32

        for kh in range(3):
            for kw in range(3):
                t = kh * 3 + kw
                p = (kh % s) * s + (kw % s)    # phase holding this tap
                slab = xp_ref[0, p,
                              kh // s:kh // s + ho,
                              kw // s:kw // s + wo, :]
                if in_affine:                  # fused bn1 + ReLU on the input
                    slab = slab.astype(jnp.float32)
                    slab = jnp.maximum(slab * sc_ref[0] + sh_ref[0], 0.0)
                slab = slab.astype(cdtype).reshape(m, cin)
                part = jnp.dot(slab, w_ref[t],
                               preferred_element_type=jnp.float32)
                if t == 0:
                    acc_ref[...] = part
                else:
                    acc_ref[...] += part

        acc = acc_ref[...]
        y_ref[0] = acc.astype(y_ref.dtype)
        su_ref[0] = jnp.sum(acc, axis=0, keepdims=True)
        sq_ref[0] = jnp.sum(acc * acc, axis=0, keepdims=True)

        if shortcut:
            # 1x1 stride-2 conv: pixels x[2ho, 2wo] == phase (1,1)[ho, wo].
            xs = xp_ref[0, 3, 0:ho, 0:wo, :].astype(cdtype).reshape(m, cin)
            y3 = jnp.dot(xs, wd_ref[...], preferred_element_type=jnp.float32)
            y3_ref[0] = y3.astype(y3_ref.dtype)
            su3_ref[0] = jnp.sum(y3, axis=0, keepdims=True)
            sq3_ref[0] = jnp.sum(y3 * y3, axis=0, keepdims=True)

    return kernel


def _bn_add_relu_kernel(y2_ref, r_ref, p2_ref, pr_ref, o_ref):
    """Lane-dense fused tail: relu(bn2(y2) + bn_d(res))  (identity: res*1+0)."""
    y2 = y2_ref[...].astype(jnp.float32)
    r = r_ref[...].astype(jnp.float32)
    v = y2 * p2_ref[0:1, :] + p2_ref[1:2, :] + r * pr_ref[0:1, :] + pr_ref[1:2, :]
    o_ref[...] = jnp.maximum(v, 0.0)


# ---------------------------------------------------------------------------
# pallas_call wrappers
# ---------------------------------------------------------------------------
def _conv_stage(xph, w_taps, *, stride, ho, wo, cout, cdtype,
                affine=None, wd=None):
    n, p, hq, wq, cin = xph.shape
    m = ho * wo
    kernel = _make_conv_kernel(stride=stride, ho=ho, wo=wo, cin=cin, cout=cout,
                               cdtype=cdtype, in_affine=affine is not None,
                               shortcut=wd is not None)

    in_specs = [pl.BlockSpec((1, p, hq, wq, cin), lambda i: (i, 0, 0, 0, 0))]
    args = [xph]
    if affine is not None:
        sc, sh = affine
        in_specs += [pl.BlockSpec((1, 1, cin), lambda i: (0, 0, 0)),
                     pl.BlockSpec((1, 1, cin), lambda i: (0, 0, 0))]
        args += [sc.reshape(1, 1, cin).astype(jnp.float32),
                 sh.reshape(1, 1, cin).astype(jnp.float32)]
    in_specs.append(pl.BlockSpec((9, cin, cout), lambda i: (0, 0, 0)))
    args.append(w_taps)
    if wd is not None:
        in_specs.append(pl.BlockSpec((cin, cout), lambda i: (0, 0)))
        args.append(wd)

    y_shape = jax.ShapeDtypeStruct((n, m, cout), cdtype)
    st_shape = jax.ShapeDtypeStruct((n, 1, cout), jnp.float32)
    y_spec = pl.BlockSpec((1, m, cout), lambda i: (i, 0, 0))
    st_spec = pl.BlockSpec((1, 1, cout), lambda i: (i, 0, 0))
    out_shape = [y_shape, st_shape, st_shape]
    out_specs = [y_spec, st_spec, st_spec]
    if wd is not None:
        out_shape += [y_shape, st_shape, st_shape]
        out_specs += [y_spec, st_spec, st_spec]

    return pl.pallas_call(
        kernel,
        out_shape=tuple(out_shape),
        grid_spec=pltpu.PrefetchScalarGridSpec(
            num_scalar_prefetch=0,
            grid=(n,),
            in_specs=in_specs,
            out_specs=tuple(out_specs),
            scratch_shapes=[pltpu.VMEM((m, cout), jnp.float32)]),
        compiler_params=pltpu.CompilerParams(
            dimension_semantics=("parallel",),        # both TCs usable on v7x
            vmem_limit_bytes=_VMEM_LIMIT),
    )(*args)


def _pick_rows(rows):
    for d in (2048, 1024, 512, 256, 128, 64, 32, 16, 8):
        if rows % d == 0:
            return d
    return rows          # single full-extent block (only for tiny/odd sizes)


def _bn_add_relu(y2d, resd, p2, pr):
    rows, lane = y2d.shape
    tr = _pick_rows(rows)
    return pl.pallas_call(
        _bn_add_relu_kernel,
        out_shape=jax.ShapeDtypeStruct((rows, lane), jnp.float32),
        grid_spec=pltpu.PrefetchScalarGridSpec(
            num_scalar_prefetch=0,
            grid=(rows // tr,),
            in_specs=[pl.BlockSpec((tr, lane), lambda i: (i, 0)),
                      pl.BlockSpec((tr, lane), lambda i: (i, 0)),
                      pl.BlockSpec((2, lane), lambda i: (0, 0)),
                      pl.BlockSpec((2, lane), lambda i: (0, 0))],
            out_specs=pl.BlockSpec((tr, lane), lambda i: (i, 0))),
        compiler_params=pltpu.CompilerParams(
            dimension_semantics=("parallel",)),
    )(y2d, resd, p2, pr)


# ---------------------------------------------------------------------------
# Layout plumbing (cheap JAX glue; no 9x im2col expansion anywhere)
# ---------------------------------------------------------------------------
def _phase_split(x_nhwc, stride, cdtype):
    """Zero-pad by 1 and split into stride^2 row/col phases so that every 3x3
    tap inside the kernel is a contiguous (non-strided) window."""
    xp = jnp.pad(x_nhwc, ((0, 0), (1, 1), (1, 1), (0, 0)))
    if stride == 1:
        ph = xp[:, None]
    else:
        ph = jnp.stack([xp[:, a::2, b::2, :]
                        for a in range(2) for b in range(2)], axis=1)
    return ph.astype(cdtype)


def _taps(w_oihw, cdtype):
    # (Cout, Cin, 3, 3) -> (9, Cin, Cout), tap index t = kh*3 + kw.
    cout, cin = w_oihw.shape[0], w_oihw.shape[1]
    return jnp.transpose(w_oihw, (2, 3, 1, 0)).reshape(9, cin, cout).astype(cdtype)


def _bn_coeffs(su, sq, m, gamma, beta):
    """Fold training-mode BN (biased batch variance) into scale/shift."""
    mean = jnp.sum(su, axis=0).reshape(-1) / m
    ex2 = jnp.sum(sq, axis=0).reshape(-1) / m
    # NOTE: single-pass E[y^2]-E[y]^2 in f32; adequate here since |mean|~std.
    var = ex2 - mean * mean
    scale = gamma * jax.lax.rsqrt(var + EPS)
    shift = beta - mean * scale
    return scale, shift


# ---------------------------------------------------------------------------
# BasicBlock forward
# ---------------------------------------------------------------------------
def basic_block_forward(x_nchw, params, in_channel, out_channel,
                        compute_dtype=jnp.bfloat16):
    stride = 2 if in_channel != out_channel else 1
    x = jnp.transpose(x_nchw, (0, 2, 3, 1)).astype(jnp.float32)      # NHWC
    n, h, w, _ = x.shape
    assert h % 2 == 0 and w % 2 == 0
    ho, wo = h // stride, w // stride
    m = n * ho * wo

    # --- conv1 (3x3, stride s, pad 1) [+ fused 1x1-s2 shortcut conv] --------
    # Conv biases are dropped: training-mode BN subtracts the batch mean, so a
    # per-channel bias cancels exactly in the forward output.
    xph = _phase_split(x, stride, compute_dtype)
    w1 = _taps(params['w1'], compute_dtype)
    if stride == 2:
        wd = params['wd'][:, :, 0, 0].T.astype(compute_dtype)        # (Cin, Cout)
        y1, su1, sq1, y3, su3, sq3 = _conv_stage(
            xph, w1, stride=stride, ho=ho, wo=wo, cout=out_channel,
            cdtype=compute_dtype, wd=wd)
    else:
        y1, su1, sq1 = _conv_stage(
            xph, w1, stride=stride, ho=ho, wo=wo, cout=out_channel,
            cdtype=compute_dtype)

    # --- bn1 folded to scale/shift; applied *inside* the conv2 kernel -------
    sc1, sh1 = _bn_coeffs(su1, sq1, m, params['g1'], params['be1'])
    # Pad conv2's halo with the value that the fused bn1+relu maps to exactly
    # zero, matching PyTorch's zero-padding of relu(bn1(conv1(x))).
    pad_val = -sh1 / sc1
    y1_nhwc = y1.reshape(n, ho, wo, out_channel).astype(jnp.float32)
    y1p = jnp.pad(y1_nhwc - pad_val, ((0, 0), (1, 1), (1, 1), (0, 0))) + pad_val
    y1ph = y1p[:, None].astype(compute_dtype)          # stride-1 phase layout

    # --- conv2 (3x3, stride 1, pad 1) with fused bn1+relu on its input ------
    w2 = _taps(params['w2'], compute_dtype)
    y2, su2, sq2 = _conv_stage(
        y1ph, w2, stride=1, ho=ho, wo=wo, cout=out_channel,
        cdtype=compute_dtype, affine=(sc1, sh1))

    # --- bn2 (+ shortcut bn) + residual add + relu, fused & lane-dense ------
    sc2, sh2 = _bn_coeffs(su2, sq2, m, params['g2'], params['be2'])
    if stride == 2:
        scd, shd = _bn_coeffs(su3, sq3, m, params['gd'], params['bed'])
        res = y3
    else:
        scd = jnp.ones((out_channel,), jnp.float32)
        shd = jnp.zeros((out_channel,), jnp.float32)
        res = x                                        # identity shortcut

    total = m * out_channel
    lane = 128 if (total % 128 == 0 and 128 % out_channel == 0) else out_channel
    rows = total // lane
    rep = lane // out_channel
    p2 = jnp.stack([jnp.tile(sc2, rep), jnp.tile(sh2, rep)])         # (2, lane)
    pr = jnp.stack([jnp.tile(scd, rep), jnp.tile(shd, rep)])
    out = _bn_add_relu(y2.reshape(rows, lane), res.reshape(rows, lane), p2, pr)
    out = out.reshape(n, ho, wo, out_channel)
    return jnp.transpose(out, (0, 3, 1, 2))            # back to NCHW


# ---------------------------------------------------------------------------
# Deterministic parameter init + pure-JAX reference for validation
# ---------------------------------------------------------------------------
def init_params(key, in_c, out_c):
    ks = jax.random.split(key, 10)
    p = {
        'w1': 0.1 * jax.random.normal(ks[0], (out_c, in_c, 3, 3), jnp.float32),
        'b1': 0.05 * jax.random.normal(ks[1], (out_c,), jnp.float32),
        'g1': 1.0 + 0.1 * jax.random.normal(ks[2], (out_c,), jnp.float32),
        'be1': 0.1 * jax.random.normal(ks[3], (out_c,), jnp.float32),
        'w2': 0.1 * jax.random.normal(ks[4], (out_c, out_c, 3, 3), jnp.float32),
        'b2': 0.05 * jax.random.normal(ks[5], (out_c,), jnp.float32),
        'g2': 1.0 + 0.1 * jax.random.normal(ks[6], (out_c,), jnp.float32),
        'be2': 0.1 * jax.random.normal(ks[7], (out_c,), jnp.float32),
    }
    if in_c != out_c:
        p.update({
            'wd': 0.1 * jax.random.normal(ks[8], (out_c, in_c, 1, 1), jnp.float32),
            'bd': 0.05 * jax.random.normal(ks[9], (out_c,), jnp.float32),
            'gd': jnp.ones((out_c,), jnp.float32),
            'bed': jnp.zeros((out_c,), jnp.float32),
        })
    return p


def reference_forward(x, params, in_c, out_c):
    """Pure-JAX f32 reference (includes the conv biases, which training-mode
    BN cancels — validates that dropping them in the Pallas path is exact)."""
    def conv(z, w, b, stride, pad):
        y = jax.lax.conv_general_dilated(
            z, w, (stride, stride), [(pad, pad), (pad, pad)],
            dimension_numbers=('NCHW', 'OIHW', 'NCHW'))
        return y + b.reshape(1, -1, 1, 1)

    def bn(y, g, bt):
        mean = jnp.mean(y, axis=(0, 2, 3), keepdims=True)
        var = jnp.mean((y - mean) ** 2, axis=(0, 2, 3), keepdims=True)
        return ((y - mean) / jnp.sqrt(var + EPS)) * g.reshape(1, -1, 1, 1) \
            + bt.reshape(1, -1, 1, 1)

    stride = 2 if in_c != out_c else 1
    y = jax.nn.relu(bn(conv(x, params['w1'], params['b1'], stride, 1),
                       params['g1'], params['be1']))
    y = bn(conv(y, params['w2'], params['b2'], 1, 1),
           params['g2'], params['be2'])
    if in_c != out_c:
        x = bn(conv(x, params['wd'], params['bd'], 2, 0),
               params['gd'], params['bed'])
    return jax.nn.relu(x + y)


if __name__ == "__main__":
    fwd = jax.jit(basic_block_forward, static_argnums=(2, 3, 4))

    key = jax.random.PRNGKey(0)
    kx, kp = jax.random.split(key)

    # Case 1: downsampling block (in != out -> stride 2, fused 1x1 shortcut).
    in_c, out_c = 4, 8
    x = jax.random.normal(kx, (2, in_c, 16, 16), jnp.float32)
    params = init_params(kp, in_c, out_c)
    ref = reference_forward(x, params, in_c, out_c)

    out_f32 = jax.block_until_ready(fwd(x, params, in_c, out_c, jnp.float32))
    assert out_f32.shape == ref.shape == (2, out_c, 8, 8)
    assert jnp.allclose(out_f32, ref, rtol=1e-3, atol=1e-3), \
        float(jnp.max(jnp.abs(out_f32 - ref)))

    # bf16 MXU stream (v6e/v7x-native path): looser tolerance vs the f32 ref.
    out_bf = jax.block_until_ready(fwd(x, params, in_c, out_c, jnp.bfloat16))
    assert jnp.allclose(out_bf, ref, rtol=3e-2, atol=3e-2), \
        float(jnp.max(jnp.abs(out_bf - ref)))

    # Case 2: identity block (in == out -> stride 1, identity shortcut).
    in_c2 = out_c2 = 8
    x2 = jax.random.normal(jax.random.PRNGKey(1), (2, in_c2, 16, 16), jnp.float32)
    params2 = init_params(jax.random.PRNGKey(2), in_c2, out_c2)
    ref2 = reference_forward(x2, params2, in_c2, out_c2)

    out2_f32 = jax.block_until_ready(fwd(x2, params2, in_c2, out_c2, jnp.float32))
    assert out2_f32.shape == ref2.shape == (2, out_c2, 16, 16)
    assert jnp.allclose(out2_f32, ref2, rtol=1e-3, atol=1e-3), \
        float(jnp.max(jnp.abs(out2_f32 - ref2)))

    out2_bf = jax.block_until_ready(fwd(x2, params2, in_c2, out_c2, jnp.bfloat16))
    assert jnp.allclose(out2_bf, ref2, rtol=3e-2, atol=3e-2), \
        float(jnp.max(jnp.abs(out2_bf - ref2)))

    print("KERNEL_OK")
</pallas_src>

<mosaic_0001>
module attributes {stable_mosaic.version = 11 : i64} {
  func.func @kernel(%arg0: i32, %arg1: memref<1x4x9x9x4xf32, #tpu.memory_space<vmem>>, %arg2: memref<9x4x8xf32, #tpu.memory_space<vmem>>, %arg3: memref<4x8xf32, #tpu.memory_space<vmem>>, %arg4: memref<1x64x8xf32, #tpu.memory_space<vmem>>, %arg5: memref<1x1x8xf32, #tpu.memory_space<vmem>>, %arg6: memref<1x1x8xf32, #tpu.memory_space<vmem>>, %arg7: memref<1x64x8xf32, #tpu.memory_space<vmem>>, %arg8: memref<1x1x8xf32, #tpu.memory_space<vmem>>, %arg9: memref<1x1x8xf32, #tpu.memory_space<vmem>>, %arg10: memref<64x8xf32, #tpu.memory_space<vmem>>) attributes {dimension_semantics = [#tpu.dimension_semantics<parallel>], iteration_bounds = array<i64: 2>, scalar_prefetch = 0 : i64, scratch_operands = 1 : i64, tpu.core_type = #tpu.core_type<tc>, window_params = [{transform_indices = @transform_0, window_bounds = array<i64: 1, 4, 9, 9, 4>}, {pipeline_mode = #tpu.pipeline_mode<synchronous>, transform_indices = @transform_1, window_bounds = array<i64: 9, 4, 8>}, {pipeline_mode = #tpu.pipeline_mode<synchronous>, transform_indices = @transform_2, window_bounds = array<i64: 4, 8>}, {transform_indices = @transform_3, window_bounds = array<i64: 1, 64, 8>}, {transform_indices = @transform_4, window_bounds = array<i64: 1, 1, 8>}, {transform_indices = @transform_5, window_bounds = array<i64: 1, 1, 8>}, {transform_indices = @transform_6, window_bounds = array<i64: 1, 64, 8>}, {transform_indices = @transform_7, window_bounds = array<i64: 1, 1, 8>}, {transform_indices = @transform_8, window_bounds = array<i64: 1, 1, 8>}]} {
    %c0 = arith.constant 0 : index
    %c0_0 = arith.constant 0 : index
    %c0_1 = arith.constant 0 : index
    %c0_2 = arith.constant 0 : index
    %c0_3 = arith.constant 0 : index
    %0 = vector.load %arg1[%c0, %c0_0, %c0_1, %c0_2, %c0_3] : memref<1x4x9x9x4xf32, #tpu.memory_space<vmem>>, vector<1x1x8x8x4xf32>
    %1 = vector.shape_cast %0 : vector<1x1x8x8x4xf32> to vector<8x8x4xf32>
    %2 = vector.shape_cast %1 : vector<8x8x4xf32> to vector<64x4xf32>
    %c0_4 = arith.constant 0 : index
    %c0_5 = arith.constant 0 : index
    %c0_6 = arith.constant 0 : index
    %3 = vector.load %arg2[%c0_4, %c0_5, %c0_6] : memref<9x4x8xf32, #tpu.memory_space<vmem>>, vector<1x4x8xf32>
    %4 = vector.shape_cast %3 : vector<1x4x8xf32> to vector<4x8xf32>
    %cst = arith.constant dense<0.000000e+00> : vector<64x8xf32>
    %5 = tpu.matmul %2, %4, %cst {dimension_numbers = #tpu.dot_dimension_numbers<[1], [0], [0], [1], [0, 0, 1, 1], [], []>} : vector<64x4xf32>, vector<4x8xf32>, vector<64x8xf32> -> vector<64x8xf32>
    %c0_7 = arith.constant 0 : index
    %c0_8 = arith.constant 0 : index
    %6 = vector.load %arg10[%c0_7, %c0_8] : memref<64x8xf32, #tpu.memory_space<vmem>>, vector<64x8xf32>
    tpu.vector_store %arg10[%c0_7, %c0_8], %5 {strides = array<i32>} : memref<64x8xf32, #tpu.memory_space<vmem>>, vector<64x8xf32>,
    %c0_9 = arith.constant 0 : index
    %c1 = arith.constant 1 : index
    %c0_10 = arith.constant 0 : index
    %c0_11 = arith.constant 0 : index
    %c0_12 = arith.constant 0 : index
    %7 = vector.load %arg1[%c0_9, %c1, %c0_10, %c0_11, %c0_12] : memref<1x4x9x9x4xf32, #tpu.memory_space<vmem>>, vector<1x1x8x8x4xf32>
    %8 = vector.shape_cast %7 : vector<1x1x8x8x4xf32> to vector<8x8x4xf32>
    %9 = vector.shape_cast %8 : vector<8x8x4xf32> to vector<64x4xf32>
    %c1_13 = arith.constant 1 : index
    %c0_14 = arith.constant 0 : index
    %c0_15 = arith.constant 0 : index
    %10 = vector.load %arg2[%c1_13, %c0_14, %c0_15] : memref<9x4x8xf32, #tpu.memory_space<vmem>>, vector<1x4x8xf32>
    %11 = vector.shape_cast %10 : vector<1x4x8xf32> to vector<4x8xf32>
    %cst_16 = arith.constant dense<0.000000e+00> : vector<64x8xf32>
    %12 = tpu.matmul %9, %11, %cst_16 {dimension_numbers = #tpu.dot_dimension_numbers<[1], [0], [0], [1], [0, 0, 1, 1], [], []>} : vector<64x4xf32>, vector<4x8xf32>, vector<64x8xf32> -> vector<64x8xf32>
    %c0_17 = arith.constant 0 : index
    %c0_18 = arith.constant 0 : index
    %13 = vector.load %arg10[%c0_17, %c0_18] : memref<64x8xf32, #tpu.memory_space<vmem>>, vector<64x8xf32>
    %14 = arith.addf %13, %12 : vector<64x8xf32>
    %c0_19 = arith.constant 0 : index
    %c0_20 = arith.constant 0 : index
    %15 = vector.load %arg10[%c0_19, %c0_20] : memref<64x8xf32, #tpu.memory_space<vmem>>, vector<64x8xf32>
    tpu.vector_store %arg10[%c0_19, %c0_20], %14 {strides = array<i32>} : memref<64x8xf32, #tpu.memory_space<vmem>>, vector<64x8xf32>,
    %c0_21 = arith.constant 0 : index
    %c0_22 = arith.constant 0 : index
    %c0_23 = arith.constant 0 : index
    %c1_24 = arith.constant 1 : index
    %c0_25 = arith.constant 0 : index
    %16 = vector.load %arg1[%c0_21, %c0_22, %c0_23, %c1_24, %c0_25] : memref<1x4x9x9x4xf32, #tpu.memory_space<vmem>>, vector<1x1x8x8x4xf32>
    %17 = vector.shape_cast %16 : vector<1x1x8x8x4xf32> to vector<8x8x4xf32>
    %18 = vector.shape_cast %17 : vector<8x8x4xf32> to vector<64x4xf32>
    %c2 = arith.constant 2 : index
    %c0_26 = arith.constant 0 : index
    %c0_27 = arith.constant 0 : index
    %19 = vector.load %arg2[%c2, %c0_26, %c0_27] : memref<9x4x8xf32, #tpu.memory_space<vmem>>, vector<1x4x8xf32>
    %20 = vector.shape_cast %19 : vector<1x4x8xf32> to vector<4x8xf32>
    %cst_28 = arith.constant dense<0.000000e+00> : vector<64x8xf32>
    %21 = tpu.matmul %18, %20, %cst_28 {dimension_numbers = #tpu.dot_dimension_numbers<[1], [0], [0], [1], [0, 0, 1, 1], [], []>} : vector<64x4xf32>, vector<4x8xf32>, vector<64x8xf32> -> vector<64x8xf32>
    %c0_29 = arith.constant 0 : index
    %c0_30 = arith.constant 0 : index
    %22 = vector.load %arg10[%c0_29, %c0_30] : memref<64x8xf32, #tpu.memory_space<vmem>>, vector<64x8xf32>
    %23 = arith.addf %22, %21 : vector<64x8xf32>
    %c0_31 = arith.constant 0 : index
    %c0_32 = arith.constant 0 : index
    %24 = vector.load %arg10[%c0_31, %c0_32] : memref<64x8xf32, #tpu.memory_space<vmem>>, vector<64x8xf32>
    tpu.vector_store %arg10[%c0_31, %c0_32], %23 {strides = array<i32>} : memref<64x8xf32, #tpu.memory_space<vmem>>, vector<64x8xf32>,
    %c0_33 = arith.constant 0 : index
    %c2_34 = arith.constant 2 : index
    %c0_35 = arith.constant 0 : index
    %c0_36 = arith.constant 0 : index
    %c0_37 = arith.constant 0 : index
    %25 = vector.load %arg1[%c0_33, %c2_34, %c0_35, %c0_36, %c0_37] : memref<1x4x9x9x4xf32, #tpu.memory_space<vmem>>, vector<1x1x8x8x4xf32>
    %26 = vector.shape_cast %25 : vector<1x1x8x8x4xf32> to vector<8x8x4xf32>
    %27 = vector.shape_cast %26 : vector<8x8x4xf32> to vector<64x4xf32>
    %c3 = arith.constant 3 : index
    %c0_38 = arith.constant 0 : index
    %c0_39 = arith.constant 0 : index
    %28 = vector.load %arg2[%c3, %c0_38, %c0_39] : memref<9x4x8xf32, #tpu.memory_space<vmem>>, vector<1x4x8xf32>
    %29 = vector.shape_cast %28 : vector<1x4x8xf32> to vector<4x8xf32>
    %cst_40 = arith.constant dense<0.000000e+00> : vector<64x8xf32>
    %30 = tpu.matmul %27, %29, %cst_40 {dimension_numbers = #tpu.dot_dimension_numbers<[1], [0], [0], [1], [0, 0, 1, 1], [], []>} : vector<64x4xf32>, vector<4x8xf32>, vector<64x8xf32> -> vector<64x8xf32>
    %c0_41 = arith.constant 0 : index
    %c0_42 = arith.constant 0 : index
    %31 = vector.load %arg10[%c0_41, %c0_42] : memref<64x8xf32, #tpu.memory_space<vmem>>, vector<64x8xf32>
    %32 = arith.addf %31, %30 : vector<64x8xf32>
    %c0_43 = arith.constant 0 : index
    %c0_44 = arith.constant 0 : index
    %33 = vector.load %arg10[%c0_43, %c0_44] : memref<64x8xf32, #tpu.memory_space<vmem>>, vector<64x8xf32>
    tpu.vector_store %arg10[%c0_43, %c0_44], %32 {strides = array<i32>} : memref<64x8xf32, #tpu.memory_space<vmem>>, vector<64x8xf32>,
    %c0_45 = arith.constant 0 : index
    %c3_46 = arith.constant 3 : index
    %c0_47 = arith.constant 0 : index
    %c0_48 = arith.constant 0 : index
    %c0_49 = arith.constant 0 : index
    %34 = vector.load %arg1[%c0_45, %c3_46, %c0_47, %c0_48, %c0_49] : memref<1x4x9x9x4xf32, #tpu.memory_space<vmem>>, vector<1x1x8x8x4xf32>
    %35 = vector.shape_cast %34 : vector<1x1x8x8x4xf32> to vector<8x8x4xf32>
    %36 = vector.shape_cast %35 : vector<8x8x4xf32> to vector<64x4xf32>
    %c4 = arith.constant 4 : index
    %c0_50 = arith.constant 0 : index
    %c0_51 = arith.constant 0 : index
    %37 = vector.load %arg2[%c4, %c0_50, %c0_51] : memref<9x4x8xf32, #tpu.memory_space<vmem>>, vector<1x4x8xf32>
    %38 = vector.shape_cast %37 : vector<1x4x8xf32> to vector<4x8xf32>
    %cst_52 = arith.constant dense<0.000000e+00> : vector<64x8xf32>
    %39 = tpu.matmul %36, %38, %cst_52 {dimension_numbers = #tpu.dot_dimension_numbers<[1], [0], [0], [1], [0, 0, 1, 1], [], []>} : vector<64x4xf32>, vector<4x8xf32>, vector<64x8xf32> -> vector<64x8xf32>
    %c0_53 = arith.constant 0 : index
    %c0_54 = arith.constant 0 : index
    %40 = vector.load %arg10[%c0_53, %c0_54] : memref<64x8xf32, #tpu.memory_space<vmem>>, vector<64x8xf32>
    %41 = arith.addf %40, %39 : vector<64x8xf32>
    %c0_55 = arith.constant 0 : index
    %c0_56 = arith.constant 0 : index
    %42 = vector.load %arg10[%c0_55, %c0_56] : memref<64x8xf32, #tpu.memory_space<vmem>>, vector<64x8xf32>
    tpu.vector_store %arg10[%c0_55, %c0_56], %41 {strides = array<i32>} : memref<64x8xf32, #tpu.memory_space<vmem>>, vector<64x8xf32>,
    %c0_57 = arith.constant 0 : index
    %c2_58 = arith.constant 2 : index
    %c0_59 = arith.constant 0 : index
    %c1_60 = arith.constant 1 : index
    %c0_61 = arith.constant 0 : index
    %43 = vector.load %arg1[%c0_57, %c2_58, %c0_59, %c1_60, %c0_61] : memref<1x4x9x9x4xf32, #tpu.memory_space<vmem>>, vector<1x1x8x8x4xf32>
    %44 = vector.shape_cast %43 : vector<1x1x8x8x4xf32> to vector<8x8x4xf32>
    %45 = vector.shape_cast %44 : vector<8x8x4xf32> to vector<64x4xf32>
    %c5 = arith.constant 5 : index
    %c0_62 = arith.constant 0 : index
    %c0_63 = arith.constant 0 : index
    %46 = vector.load %arg2[%c5, %c0_62, %c0_63] : memref<9x4x8xf32, #tpu.memory_space<vmem>>, vector<1x4x8xf32>
    %47 = vector.shape_cast %46 : vector<1x4x8xf32> to vector<4x8xf32>
    %cst_64 = arith.constant dense<0.000000e+00> : vector<64x8xf32>
    %48 = tpu.matmul %45, %47, %cst_64 {dimension_numbers = #tpu.dot_dimension_numbers<[1], [0], [0], [1], [0, 0, 1, 1], [], []>} : vector<64x4xf32>, vector<4x8xf32>, vector<64x8xf32> -> vector<64x8xf32>
    %c0_65 = arith.constant 0 : index
    %c0_66 = arith.constant 0 : index
    %49 = vector.load %arg10[%c0_65, %c0_66] : memref<64x8xf32, #tpu.memory_space<vmem>>, vector<64x8xf32>
    %50 = arith.addf %49, %48 : vector<64x8xf32>
    %c0_67 = arith.constant 0 : index
    %c0_68 = arith.constant 0 : index
    %51 = vector.load %arg10[%c0_67, %c0_68] : memref<64x8xf32, #tpu.memory_space<vmem>>, vector<64x8xf32>
    tpu.vector_store %arg10[%c0_67, %c0_68], %50 {strides = array<i32>} : memref<64x8xf32, #tpu.memory_space<vmem>>, vector<64x8xf32>,
    %c0_69 = arith.constant 0 : index
    %c0_70 = arith.constant 0 : index
    %c1_71 = arith.constant 1 : index
    %c0_72 = arith.constant 0 : index
    %c0_73 = arith.constant 0 : index
    %52 = vector.load %arg1[%c0_69, %c0_70, %c1_71, %c0_72, %c0_73] : memref<1x4x9x9x4xf32, #tpu.memory_space<vmem>>, vector<1x1x8x8x4xf32>
    %53 = vector.shape_cast %52 : vector<1x1x8x8x4xf32> to vector<8x8x4xf32>
    %54 = vector.shape_cast %53 : vector<8x8x4xf32> to vector<64x4xf32>
    %c6 = arith.constant 6 : index
    %c0_74 = arith.constant 0 : index
    %c0_75 = arith.constant 0 : index
    %55 = vector.load %arg2[%c6, %c0_74, %c0_75] : memref<9x4x8xf32, #tpu.memory_space<vmem>>, vector<1x4x8xf32>
    %56 = vector.shape_cast %55 : vector<1x4x8xf32> to vector<4x8xf32>
    %cst_76 = arith.constant dense<0.000000e+00> : vector<64x8xf32>
    %57 = tpu.matmul %54, %56, %cst_76 {dimension_numbers = #tpu.dot_dimension_numbers<[1], [0], [0], [1], [0, 0, 1, 1], [], []>} : vector<64x4xf32>, vector<4x8xf32>, vector<64x8xf32> -> vector<64x8xf32>
    %c0_77 = arith.constant 0 : index
    %c0_78 = arith.constant 0 : index
    %58 = vector.load %arg10[%c0_77, %c0_78] : memref<64x8xf32, #tpu.memory_space<vmem>>, vector<64x8xf32>
    %59 = arith.addf %58, %57 : vector<64x8xf32>
    %c0_79 = arith.constant 0 : index
    %c0_80 = arith.constant 0 : index
    %60 = vector.load %arg10[%c0_79, %c0_80] : memref<64x8xf32, #tpu.memory_space<vmem>>, vector<64x8xf32>
    tpu.vector_store %arg10[%c0_79, %c0_80], %59 {strides = array<i32>} : memref<64x8xf32, #tpu.memory_space<vmem>>, vector<64x8xf32>,
    %c0_81 = arith.constant 0 : index
    %c1_82 = arith.constant 1 : index
    %c1_83 = arith.constant 1 : index
    %c0_84 = arith.constant 0 : index
    %c0_85 = arith.constant 0 : index
    %61 = vector.load %arg1[%c0_81, %c1_82, %c1_83, %c0_84, %c0_85] : memref<1x4x9x9x4xf32, #tpu.memory_space<vmem>>, vector<1x1x8x8x4xf32>
    %62 = vector.shape_cast %61 : vector<1x1x8x8x4xf32> to vector<8x8x4xf32>
    %63 = vector.shape_cast %62 : vector<8x8x4xf32> to vector<64x4xf32>
    %c7 = arith.constant 7 : index
    %c0_86 = arith.constant 0 : index
    %c0_87 = arith.constant 0 : index
    %64 = vector.load %arg2[%c7, %c0_86, %c0_87] : memref<9x4x8xf32, #tpu.memory_space<vmem>>, vector<1x4x8xf32>
    %65 = vector.shape_cast %64 : vector<1x4x8xf32> to vector<4x8xf32>
    %cst_88 = arith.constant dense<0.000000e+00> : vector<64x8xf32>
    %66 = tpu.matmul %63, %65, %cst_88 {dimension_numbers = #tpu.dot_dimension_numbers<[1], [0], [0], [1], [0, 0, 1, 1], [], []>} : vector<64x4xf32>, vector<4x8xf32>, vector<64x8xf32> -> vector<64x8xf32>
    %c0_89 = arith.constant 0 : index
    %c0_90 = arith.constant 0 : index
    %67 = vector.load %arg10[%c0_89, %c0_90] : memref<64x8xf32, #tpu.memory_space<vmem>>, vector<64x8xf32>
    %68 = arith.addf %67, %66 : vector<64x8xf32>
    %c0_91 = arith.constant 0 : index
    %c0_92 = arith.constant 0 : index
    %69 = vector.load %arg10[%c0_91, %c0_92] : memref<64x8xf32, #tpu.memory_space<vmem>>, vector<64x8xf32>
    tpu.vector_store %arg10[%c0_91, %c0_92], %68 {strides = array<i32>} : memref<64x8xf32, #tpu.memory_space<vmem>>, vector<64x8xf32>,
    %c0_93 = arith.constant 0 : index
    %c0_94 = arith.constant 0 : index
    %c1_95 = arith.constant 1 : index
    %c1_96 = arith.constant 1 : index
    %c0_97 = arith.constant 0 : index
    %70 = vector.load %arg1[%c0_93, %c0_94, %c1_95, %c1_96, %c0_97] : memref<1x4x9x9x4xf32, #tpu.memory_space<vmem>>, vector<1x1x8x8x4xf32>
    %71 = vector.shape_cast %70 : vector<1x1x8x8x4xf32> to vector<8x8x4xf32>
    %72 = vector.shape_cast %71 : vector<8x8x4xf32> to vector<64x4xf32>
    %c8 = arith.constant 8 : index
    %c0_98 = arith.constant 0 : index
    %c0_99 = arith.constant 0 : index
    %73 = vector.load %arg2[%c8, %c0_98, %c0_99] : memref<9x4x8xf32, #tpu.memory_space<vmem>>, vector<1x4x8xf32>
    %74 = vector.shape_cast %73 : vector<1x4x8xf32> to vector<4x8xf32>
    %cst_100 = arith.constant dense<0.000000e+00> : vector<64x8xf32>
    %75 = tpu.matmul %72, %74, %cst_100 {dimension_numbers = #tpu.dot_dimension_numbers<[1], [0], [0], [1], [0, 0, 1, 1], [], []>} : vector<64x4xf32>, vector<4x8xf32>, vector<64x8xf32> -> vector<64x8xf32>
    %c0_101 = arith.constant 0 : index
    %c0_102 = arith.constant 0 : index
    %76 = vector.load %arg10[%c0_101, %c0_102] : memref<64x8xf32, #tpu.memory_space<vmem>>, vector<64x8xf32>
    %77 = arith.addf %76, %75 : vector<64x8xf32>
    %c0_103 = arith.constant 0 : index
    %c0_104 = arith.constant 0 : index
    %78 = vector.load %arg10[%c0_103, %c0_104] : memref<64x8xf32, #tpu.memory_space<vmem>>, vector<64x8xf32>
    tpu.vector_store %arg10[%c0_103, %c0_104], %77 {strides = array<i32>} : memref<64x8xf32, #tpu.memory_space<vmem>>, vector<64x8xf32>,
    %c0_105 = arith.constant 0 : index
    %c0_106 = arith.constant 0 : index
    %79 = vector.load %arg10[%c0_105, %c0_106] : memref<64x8xf32, #tpu.memory_space<vmem>>, vector<64x8xf32>
    %c0_107 = arith.constant 0 : index
    %c0_108 = arith.constant 0 : index
    %c0_109 = arith.constant 0 : index
    %80 = vector.load %arg4[%c0_107, %c0_108, %c0_109] : memref<1x64x8xf32, #tpu.memory_space<vmem>>, vector<1x64x8xf32>
    %81 = vector.shape_cast %80 : vector<1x64x8xf32> to vector<64x8xf32>
    %82 = vector.shape_cast %79 : vector<64x8xf32> to vector<1x64x8xf32>
    tpu.vector_store %arg4[%c0_107, %c0_108, %c0_109], %82 {strides = array<i32>} : memref<1x64x8xf32, #tpu.memory_space<vmem>>, vector<1x64x8xf32>,
    %cst_110 = arith.constant dense<0.000000e+00> : vector<8xf32>
    %83 = vector.multi_reduction <add>, %79, %cst_110 [0] : vector<64x8xf32> to vector<8xf32>
    %84 = vector.shape_cast %83 : vector<8xf32> to vector<1x8xf32>
    %c0_111 = arith.constant 0 : index
    %c0_112 = arith.constant 0 : index
    %c0_113 = arith.constant 0 : index
    %85 = vector.load %arg5[%c0_111, %c0_112, %c0_113] : memref<1x1x8xf32, #tpu.memory_space<vmem>>, vector<1x1x8xf32>
    %86 = vector.shape_cast %85 : vector<1x1x8xf32> to vector<1x8xf32>
    %87 = vector.shape_cast %84 : vector<1x8xf32> to vector<1x1x8xf32>
    tpu.vector_store %arg5[%c0_111, %c0_112, %c0_113], %87 {strides = array<i32>} : memref<1x1x8xf32, #tpu.memory_space<vmem>>, vector<1x1x8xf32>,
    %88 = arith.mulf %79, %79 : vector<64x8xf32>
    %cst_114 = arith.constant dense<0.000000e+00> : vector<8xf32>
    %89 = vector.multi_reduction <add>, %88, %cst_114 [0] : vector<64x8xf32> to vector<8xf32>
    %90 = vector.shape_cast %89 : vector<8xf32> to vector<1x8xf32>
    %c0_115 = arith.constant 0 : index
    %c0_116 = arith.constant 0 : index
    %c0_117 = arith.constant 0 : index
    %91 = vector.load %arg6[%c0_115, %c0_116, %c0_117] : memref<1x1x8xf32, #tpu.memory_space<vmem>>, vector<1x1x8xf32>
    %92 = vector.shape_cast %91 : vector<1x1x8xf32> to vector<1x8xf32>
    %93 = vector.shape_cast %90 : vector<1x8xf32> to vector<1x1x8xf32>
    tpu.vector_store %arg6[%c0_115, %c0_116, %c0_117], %93 {strides = array<i32>} : memref<1x1x8xf32, #tpu.memory_space<vmem>>, vector<1x1x8xf32>,
    %c0_118 = arith.constant 0 : index
    %c3_119 = arith.constant 3 : index
    %c0_120 = arith.constant 0 : index
    %c0_121 = arith.constant 0 : index
    %c0_122 = arith.constant 0 : index
    %94 = vector.load %arg1[%c0_118, %c3_119, %c0_120, %c0_121, %c0_122] : memref<1x4x9x9x4xf32, #tpu.memory_space<vmem>>, vector<1x1x8x8x4xf32>
    %95 = vector.shape_cast %94 : vector<1x1x8x8x4xf32> to vector<8x8x4xf32>
    %96 = vector.shape_cast %95 : vector<8x8x4xf32> to vector<64x4xf32>
    %c0_123 = arith.constant 0 : index
    %c0_124 = arith.constant 0 : index
    %97 = vector.load %arg3[%c0_123, %c0_124] : memref<4x8xf32, #tpu.memory_space<vmem>>, vector<4x8xf32>
    %cst_125 = arith.constant dense<0.000000e+00> : vector<64x8xf32>
    %98 = tpu.matmul %96, %97, %cst_125 {dimension_numbers = #tpu.dot_dimension_numbers<[1], [0], [0], [1], [0, 0, 1, 1], [], []>} : vector<64x4xf32>, vector<4x8xf32>, vector<64x8xf32> -> vector<64x8xf32>
    %c0_126 = arith.constant 0 : index
    %c0_127 = arith.constant 0 : index
    %c0_128 = arith.constant 0 : index
    %99 = vector.load %arg7[%c0_126, %c0_127, %c0_128] : memref<1x64x8xf32, #tpu.memory_space<vmem>>, vector<1x64x8xf32>
    %100 = vector.shape_cast %99 : vector<1x64x8xf32> to vector<64x8xf32>
    %101 = vector.shape_cast %98 : vector<64x8xf32> to vector<1x64x8xf32>
    tpu.vector_store %arg7[%c0_126, %c0_127, %c0_128], %101 {strides = array<i32>} : memref<1x64x8xf32, #tpu.memory_space<vmem>>, vector<1x64x8xf32>,
    %cst_129 = arith.constant dense<0.000000e+00> : vector<8xf32>
    %102 = vector.multi_reduction <add>, %98, %cst_129 [0] : vector<64x8xf32> to vector<8xf32>
    %103 = vector.shape_cast %102 : vector<8xf32> to vector<1x8xf32>
    %c0_130 = arith.constant 0 : index
    %c0_131 = arith.constant 0 : index
    %c0_132 = arith.constant 0 : index
    %104 = vector.load %arg8[%c0_130, %c0_131, %c0_132] : memref<1x1x8xf32, #tpu.memory_space<vmem>>, vector<1x1x8xf32>
    %105 = vector.shape_cast %104 : vector<1x1x8xf32> to vector<1x8xf32>
    %106 = vector.shape_cast %103 : vector<1x8xf32> to vector<1x1x8xf32>
    tpu.vector_store %arg8[%c0_130, %c0_131, %c0_132], %106 {strides = array<i32>} : memref<1x1x8xf32, #tpu.memory_space<vmem>>, vector<1x1x8xf32>,
    %107 = arith.mulf %98, %98 : vector<64x8xf32>
    %cst_133 = arith.constant dense<0.000000e+00> : vector<8xf32>
    %108 = vector.multi_reduction <add>, %107, %cst_133 [0] : vector<64x8xf32> to vector<8xf32>
    %109 = vector.shape_cast %108 : vector<8xf32> to vector<1x8xf32>
    %c0_134 = arith.constant 0 : index
    %c0_135 = arith.constant 0 : index
    %c0_136 = arith.constant 0 : index
    %110 = vector.load %arg9[%c0_134, %c0_135, %c0_136] : memref<1x1x8xf32, #tpu.memory_space<vmem>>, vector<1x1x8xf32>
    %111 = vector.shape_cast %110 : vector<1x1x8xf32> to vector<1x8xf32>
    %112 = vector.shape_cast %109 : vector<1x8xf32> to vector<1x1x8xf32>
    tpu.vector_store %arg9[%c0_134, %c0_135, %c0_136], %112 {strides = array<i32>} : memref<1x1x8xf32, #tpu.memory_space<vmem>>, vector<1x1x8xf32>,
    return
  }
  func.func @transform_0(%arg0: i32) -> (i32, i32, i32, i32, i32) {
    %c0_i32 = arith.constant 0 : i32
    %c0_i32_0 = arith.constant 0 : i32
    %c0_i32_1 = arith.constant 0 : i32
    %c0_i32_2 = arith.constant 0 : i32
    %c0_i32_3 = arith.constant 0 : i32
    return %arg0, %c0_i32, %c0_i32_0, %c0_i32_1, %c0_i32_2 : i32, i32, i32, i32, i32
  }
  func.func @transform_1(%arg0: i32) -> (i32, i32, i32) {
    %c0_i32 = arith.constant 0 : i32
    %c0_i32_0 = arith.constant 0 : i32
    %c0_i32_1 = arith.constant 0 : i32
    %c0_i32_2 = arith.constant 0 : i32
    return %c0_i32, %c0_i32_0, %c0_i32_1 : i32, i32, i32
  }
  func.func @transform_2(%arg0: i32) -> (i32, i32) {
    %c0_i32 = arith.constant 0 : i32
    %c0_i32_0 = arith.constant 0 : i32
    %c0_i32_1 = arith.constant 0 : i32
    return %c0_i32, %c0_i32_0 : i32, i32
  }
  func.func @transform_3(%arg0: i32) -> (i32, i32, i32) {
    %c0_i32 = arith.constant 0 : i32
    %c0_i32_0 = arith.constant 0 : i32
    %c0_i32_1 = arith.constant 0 : i32
    return %arg0, %c0_i32, %c0_i32_0 : i32, i32, i32
  }
  func.func @transform_4(%arg0: i32) -> (i32, i32, i32) {
    %c0_i32 = arith.constant 0 : i32
    %c0_i32_0 = arith.constant 0 : i32
    %c0_i32_1 = arith.constant 0 : i32
    return %arg0, %c0_i32, %c0_i32_0 : i32, i32, i32
  }
  func.func @transform_5(%arg0: i32) -> (i32, i32, i32) {
    %c0_i32 = arith.constant 0 : i32
    %c0_i32_0 = arith.constant 0 : i32
    %c0_i32_1 = arith.constant 0 : i32
    return %arg0, %c0_i32, %c0_i32_0 : i32, i32, i32
  }
  func.func @transform_6(%arg0: i32) -> (i32, i32, i32) {
    %c0_i32 = arith.constant 0 : i32
    %c0_i32_0 = arith.constant 0 : i32
    %c0_i32_1 = arith.constant 0 : i32
    return %arg0, %c0_i32, %c0_i32_0 : i32, i32, i32
  }
  func.func @transform_7(%arg0: i32) -> (i32, i32, i32) {
    %c0_i32 = arith.constant 0 : i32
    %c0_i32_0 = arith.constant 0 : i32
    %c0_i32_1 = arith.constant 0 : i32
    return %arg0, %c0_i32, %c0_i32_0 : i32, i32, i32
  }
  func.func @transform_8(%arg0: i32) -> (i32, i32, i32) {
    %c0_i32 = arith.constant 0 : i32
    %c0_i32_0 = arith.constant 0 : i32
    %c0_i32_1 = arith.constant 0 : i32
    return %arg0, %c0_i32, %c0_i32_0 : i32, i32, i32
  }
}

module attributes {stable_mosaic.version = 11 : i64} {
  func.func @kernel(%arg0: i32, %arg1: memref<1x1x10x10x8xf32, #tpu.memory_space<vmem>>, %arg2: memref<1x1x8xf32, #tpu.memory_space<vmem>>, %arg3: memref<1x1x8xf32, #tpu.memory_space<vmem>>, %arg4: memref<9x8x8xf32, #tpu.memory_space<vmem>>, %arg5: memref<1x64x8xf32, #tpu.memory_space<vmem>>, %arg6: memref<1x1x8xf32, #tpu.memory_space<vmem>>, %arg7: memref<1x1x8xf32, #tpu.memory_space<vmem>>, %arg8: memref<64x8xf32, #tpu.memory_space<vmem>>) attributes {dimension_semantics = [#tpu.dimension_semantics<parallel>], iteration_bounds = array<i64: 2>, scalar_prefetch = 0 : i64, scratch_operands = 1 : i64, tpu.core_type = #tpu.core_type<tc>, window_params = [{transform_indices = @transform_0, window_bounds = array<i64: 1, 1, 10, 10, 8>}, {pipeline_mode = #tpu.pipeline_mode<synchronous>, transform_indices = @transform_1, window_bounds = array<i64: 1, 1, 8>}, {pipeline_mode = #tpu.pipeline_mode<synchronous>, transform_indices = @transform_2, window_bounds = array<i64: 1, 1, 8>}, {pipeline_mode = #tpu.pipeline_mode<synchronous>, transform_indices = @transform_3, window_bounds = array<i64: 9, 8, 8>}, {transform_indices = @transform_4, window_bounds = array<i64: 1, 64, 8>}, {transform_indices = @transform_5, window_bounds = array<i64: 1, 1, 8>}, {transform_indices = @transform_6, window_bounds = array<i64: 1, 1, 8>}]} {
    %c0 = arith.constant 0 : index
    %c0_0 = arith.constant 0 : index
    %c0_1 = arith.constant 0 : index
    %c0_2 = arith.constant 0 : index
    %c0_3 = arith.constant 0 : index
    %0 = vector.load %arg1[%c0, %c0_0, %c0_1, %c0_2, %c0_3] : memref<1x1x10x10x8xf32, #tpu.memory_space<vmem>>, vector<1x1x8x8x8xf32>
    %1 = vector.shape_cast %0 : vector<1x1x8x8x8xf32> to vector<8x8x8xf32>
    %c0_4 = arith.constant 0 : index
    %c0_5 = arith.constant 0 : index
    %c0_6 = arith.constant 0 : index
    %2 = vector.load %arg2[%c0_4, %c0_5, %c0_6] : memref<1x1x8xf32, #tpu.memory_space<vmem>>, vector<1x1x8xf32>
    %3 = vector.shape_cast %2 : vector<1x1x8xf32> to vector<1x8xf32>
    %4 = vector.shape_cast %3 : vector<1x8xf32> to vector<1x1x8xf32>
    %5 = vector.broadcast %4 : vector<1x1x8xf32> to vector<8x8x8xf32>
    %6 = arith.mulf %1, %5 : vector<8x8x8xf32>
    %c0_7 = arith.constant 0 : index
    %c0_8 = arith.constant 0 : index
    %c0_9 = arith.constant 0 : index
    %7 = vector.load %arg3[%c0_7, %c0_8, %c0_9] : memref<1x1x8xf32, #tpu.memory_space<vmem>>, vector<1x1x8xf32>
    %8 = vector.shape_cast %7 : vector<1x1x8xf32> to vector<1x8xf32>
    %9 = vector.shape_cast %8 : vector<1x8xf32> to vector<1x1x8xf32>
    %10 = vector.broadcast %9 : vector<1x1x8xf32> to vector<8x8x8xf32>
    %11 = arith.addf %6, %10 : vector<8x8x8xf32>
    %cst = arith.constant 0.000000e+00 : f32
    %12 = vector.broadcast %cst : f32 to vector<8x8x8xf32>
    %13 = arith.maximumf %11, %12 : vector<8x8x8xf32>
    %14 = vector.shape_cast %13 : vector<8x8x8xf32> to vector<64x8xf32>
    %c0_10 = arith.constant 0 : index
    %c0_11 = arith.constant 0 : index
    %c0_12 = arith.constant 0 : index
    %15 = vector.load %arg4[%c0_10, %c0_11, %c0_12] : memref<9x8x8xf32, #tpu.memory_space<vmem>>, vector<1x8x8xf32>
    %16 = vector.shape_cast %15 : vector<1x8x8xf32> to vector<8x8xf32>
    %cst_13 = arith.constant dense<0.000000e+00> : vector<64x8xf32>
    %17 = tpu.matmul %14, %16, %cst_13 {dimension_numbers = #tpu.dot_dimension_numbers<[1], [0], [0], [1], [0, 0, 1, 1], [], []>} : vector<64x8xf32>, vector<8x8xf32>, vector<64x8xf32> -> vector<64x8xf32>
    %c0_14 = arith.constant 0 : index
    %c0_15 = arith.constant 0 : index
    %18 = vector.load %arg8[%c0_14, %c0_15] : memref<64x8xf32, #tpu.memory_space<vmem>>, vector<64x8xf32>
    tpu.vector_store %arg8[%c0_14, %c0_15], %17 {strides = array<i32>} : memref<64x8xf32, #tpu.memory_space<vmem>>, vector<64x8xf32>,
    %c0_16 = arith.constant 0 : index
    %c0_17 = arith.constant 0 : index
    %c0_18 = arith.constant 0 : index
    %c1 = arith.constant 1 : index
    %c0_19 = arith.constant 0 : index
    %19 = vector.load %arg1[%c0_16, %c0_17, %c0_18, %c1, %c0_19] : memref<1x1x10x10x8xf32, #tpu.memory_space<vmem>>, vector<1x1x8x8x8xf32>
    %20 = vector.shape_cast %19 : vector<1x1x8x8x8xf32> to vector<8x8x8xf32>
    %c0_20 = arith.constant 0 : index
    %c0_21 = arith.constant 0 : index
    %c0_22 = arith.constant 0 : index
    %21 = vector.load %arg2[%c0_20, %c0_21, %c0_22] : memref<1x1x8xf32, #tpu.memory_space<vmem>>, vector<1x1x8xf32>
    %22 = vector.shape_cast %21 : vector<1x1x8xf32> to vector<1x8xf32>
    %23 = vector.shape_cast %22 : vector<1x8xf32> to vector<1x1x8xf32>
    %24 = vector.broadcast %23 : vector<1x1x8xf32> to vector<8x8x8xf32>
    %25 = arith.mulf %20, %24 : vector<8x8x8xf32>
    %c0_23 = arith.constant 0 : index
    %c0_24 = arith.constant 0 : index
    %c0_25 = arith.constant 0 : index
    %26 = vector.load %arg3[%c0_23, %c0_24, %c0_25] : memref<1x1x8xf32, #tpu.memory_space<vmem>>, vector<1x1x8xf32>
    %27 = vector.shape_cast %26 : vector<1x1x8xf32> to vector<1x8xf32>
    %28 = vector.shape_cast %27 : vector<1x8xf32> to vector<1x1x8xf32>
    %29 = vector.broadcast %28 : vector<1x1x8xf32> to vector<8x8x8xf32>
    %30 = arith.addf %25, %29 : vector<8x8x8xf32>
    %cst_26 = arith.constant 0.000000e+00 : f32
    %31 = vector.broadcast %cst_26 : f32 to vector<8x8x8xf32>
    %32 = arith.maximumf %30, %31 : vector<8x8x8xf32>
    %33 = vector.shape_cast %32 : vector<8x8x8xf32> to vector<64x8xf32>
    %c1_27 = arith.constant 1 : index
    %c0_28 = arith.constant 0 : index
    %c0_29 = arith.constant 0 : index
    %34 = vector.load %arg4[%c1_27, %c0_28, %c0_29] : memref<9x8x8xf32, #tpu.memory_space<vmem>>, vector<1x8x8xf32>
    %35 = vector.shape_cast %34 : vector<1x8x8xf32> to vector<8x8xf32>
    %cst_30 = arith.constant dense<0.000000e+00> : vector<64x8xf32>
    %36 = tpu.matmul %33, %35, %cst_30 {dimension_numbers = #tpu.dot_dimension_numbers<[1], [0], [0], [1], [0, 0, 1, 1], [], []>} : vector<64x8xf32>, vector<8x8xf32>, vector<64x8xf32> -> vector<64x8xf32>
    %c0_31 = arith.constant 0 : index
    %c0_32 = arith.constant 0 : index
    %37 = vector.load %arg8[%c0_31, %c0_32] : memref<64x8xf32, #tpu.memory_space<vmem>>, vector<64x8xf32>
    %38 = arith.addf %37, %36 : vector<64x8xf32>
    %c0_33 = arith.constant 0 : index
    %c0_34 = arith.constant 0 : index
    %39 = vector.load %arg8[%c0_33, %c0_34] : memref<64x8xf32, #tpu.memory_space<vmem>>, vector<64x8xf32>
    tpu.vector_store %arg8[%c0_33, %c0_34], %38 {strides = array<i32>} : memref<64x8xf32, #tpu.memory_space<vmem>>, vector<64x8xf32>,
    %c0_35 = arith.constant 0 : index
    %c0_36 = arith.constant 0 : index
    %c0_37 = arith.constant 0 : index
    %c2 = arith.constant 2 : index
    %c0_38 = arith.constant 0 : index
    %40 = vector.load %arg1[%c0_35, %c0_36, %c0_37, %c2, %c0_38] : memref<1x1x10x10x8xf32, #tpu.memory_space<vmem>>, vector<1x1x8x8x8xf32>
    %41 = vector.shape_cast %40 : vector<1x1x8x8x8xf32> to vector<8x8x8xf32>
    %c0_39 = arith.constant 0 : index
    %c0_40 = arith.constant 0 : index
    %c0_41 = arith.constant 0 : index
    %42 = vector.load %arg2[%c0_39, %c0_40, %c0_41] : memref<1x1x8xf32, #tpu.memory_space<vmem>>, vector<1x1x8xf32>
    %43 = vector.shape_cast %42 : vector<1x1x8xf32> to vector<1x8xf32>
    %44 = vector.shape_cast %43 : vector<1x8xf32> to vector<1x1x8xf32>
    %45 = vector.broadcast %44 : vector<1x1x8xf32> to vector<8x8x8xf32>
    %46 = arith.mulf %41, %45 : vector<8x8x8xf32>
    %c0_42 = arith.constant 0 : index
    %c0_43 = arith.constant 0 : index
    %c0_44 = arith.constant 0 : index
    %47 = vector.load %arg3[%c0_42, %c0_43, %c0_44] : memref<1x1x8xf32, #tpu.memory_space<vmem>>, vector<1x1x8xf32>
    %48 = vector.shape_cast %47 : vector<1x1x8xf32> to vector<1x8xf32>
    %49 = vector.shape_cast %48 : vector<1x8xf32> to vector<1x1x8xf32>
    %50 = vector.broadcast %49 : vector<1x1x8xf32> to vector<8x8x8xf32>
    %51 = arith.addf %46, %50 : vector<8x8x8xf32>
    %cst_45 = arith.constant 0.000000e+00 : f32
    %52 = vector.broadcast %cst_45 : f32 to vector<8x8x8xf32>
    %53 = arith.maximumf %51, %52 : vector<8x8x8xf32>
    %54 = vector.shape_cast %53 : vector<8x8x8xf32> to vector<64x8xf32>
    %c2_46 = arith.constant 2 : index
    %c0_47 = arith.constant 0 : index
    %c0_48 = arith.constant 0 : index
    %55 = vector.load %arg4[%c2_46, %c0_47, %c0_48] : memref<9x8x8xf32, #tpu.memory_space<vmem>>, vector<1x8x8xf32>
    %56 = vector.shape_cast %55 : vector<1x8x8xf32> to vector<8x8xf32>
    %cst_49 = arith.constant dense<0.000000e+00> : vector<64x8xf32>
    %57 = tpu.matmul %54, %56, %cst_49 {dimension_numbers = #tpu.dot_dimension_numbers<[1], [0], [0], [1], [0, 0, 1, 1], [], []>} : vector<64x8xf32>, vector<8x8xf32>, vector<64x8xf32> -> vector<64x8xf32>
    %c0_50 = arith.constant 0 : index
    %c0_51 = arith.constant 0 : index
    %58 = vector.load %arg8[%c0_50, %c0_51] : memref<64x8xf32, #tpu.memory_space<vmem>>, vector<64x8xf32>
    %59 = arith.addf %58, %57 : vector<64x8xf32>
    %c0_52 = arith.constant 0 : index
    %c0_53 = arith.constant 0 : index
    %60 = vector.load %arg8[%c0_52, %c0_53] : memref<64x8xf32, #tpu.memory_space<vmem>>, vector<64x8xf32>
    tpu.vector_store %arg8[%c0_52, %c0_53], %59 {strides = array<i32>} : memref<64x8xf32, #tpu.memory_space<vmem>>, vector<64x8xf32>,
    %c0_54 = arith.constant 0 : index
    %c0_55 = arith.constant 0 : index
    %c1_56 = arith.constant 1 : index
    %c0_57 = arith.constant 0 : index
    %c0_58 = arith.constant 0 : index
    %61 = vector.load %arg1[%c0_54, %c0_55, %c1_56, %c0_57, %c0_58] : memref<1x1x10x10x8xf32, #tpu.memory_space<vmem>>, vector<1x1x8x8x8xf32>
    %62 = vector.shape_cast %61 : vector<1x1x8x8x8xf32> to vector<8x8x8xf32>
    %c0_59 = arith.constant 0 : index
    %c0_60 = arith.constant 0 : index
    %c0_61 = arith.constant 0 : index
    %63 = vector.load %arg2[%c0_59, %c0_60, %c0_61] : memref<1x1x8xf32, #tpu.memory_space<vmem>>, vector<1x1x8xf32>
    %64 = vector.shape_cast %63 : vector<1x1x8xf32> to vector<1x8xf32>
    %65 = vector.shape_cast %64 : vector<1x8xf32> to vector<1x1x8xf32>
    %66 = vector.broadcast %65 : vector<1x1x8xf32> to vector<8x8x8xf32>
    %67 = arith.mulf %62, %66 : vector<8x8x8xf32>
    %c0_62 = arith.constant 0 : index
    %c0_63 = arith.constant 0 : index
    %c0_64 = arith.constant 0 : index
    %68 = vector.load %arg3[%c0_62, %c0_63, %c0_64] : memref<1x1x8xf32, #tpu.memory_space<vmem>>, vector<1x1x8xf32>
    %69 = vector.shape_cast %68 : vector<1x1x8xf32> to vector<1x8xf32>
    %70 = vector.shape_cast %69 : vector<1x8xf32> to vector<1x1x8xf32>
    %71 = vector.broadcast %70 : vector<1x1x8xf32> to vector<8x8x8xf32>
    %72 = arith.addf %67, %71 : vector<8x8x8xf32>
    %cst_65 = arith.constant 0.000000e+00 : f32
    %73 = vector.broadcast %cst_65 : f32 to vector<8x8x8xf32>
    %74 = arith.maximumf %72, %73 : vector<8x8x8xf32>
    %75 = vector.shape_cast %74 : vector<8x8x8xf32> to vector<64x8xf32>
    %c3 = arith.constant 3 : index
    %c0_66 = arith.constant 0 : index
    %c0_67 = arith.constant 0 : index
    %76 = vector.load %arg4[%c3, %c0_66, %c0_67] : memref<9x8x8xf32, #tpu.memory_space<vmem>>, vector<1x8x8xf32>
    %77 = vector.shape_cast %76 : vector<1x8x8xf32> to vector<8x8xf32>
    %cst_68 = arith.constant dense<0.000000e+00> : vector<64x8xf32>
    %78 = tpu.matmul %75, %77, %cst_68 {dimension_numbers = #tpu.dot_dimension_numbers<[1], [0], [0], [1], [0, 0, 1, 1], [], []>} : vector<64x8xf32>, vector<8x8xf32>, vector<64x8xf32> -> vector<64x8xf32>
    %c0_69 = arith.constant 0 : index
    %c0_70 = arith.constant 0 : index
    %79 = vector.load %arg8[%c0_69, %c0_70] : memref<64x8xf32, #tpu.memory_space<vmem>>, vector<64x8xf32>
    %80 = arith.addf %79, %78 : vector<64x8xf32>
    %c0_71 = arith.constant 0 : index
    %c0_72 = arith.constant 0 : index
    %81 = vector.load %arg8[%c0_71, %c0_72] : memref<64x8xf32, #tpu.memory_space<vmem>>, vector<64x8xf32>
    tpu.vector_store %arg8[%c0_71, %c0_72], %80 {strides = array<i32>} : memref<64x8xf32, #tpu.memory_space<vmem>>, vector<64x8xf32>,
    %c0_73 = arith.constant 0 : index
    %c0_74 = arith.constant 0 : index
    %c1_75 = arith.constant 1 : index
    %c1_76 = arith.constant 1 : index
    %c0_77 = arith.constant 0 : index
    %82 = vector.load %arg1[%c0_73, %c0_74, %c1_75, %c1_76, %c0_77] : memref<1x1x10x10x8xf32, #tpu.memory_space<vmem>>, vector<1x1x8x8x8xf32>
    %83 = vector.shape_cast %82 : vector<1x1x8x8x8xf32> to vector<8x8x8xf32>
    %c0_78 = arith.constant 0 : index
    %c0_79 = arith.constant 0 : index
    %c0_80 = arith.constant 0 : index
    %84 = vector.load %arg2[%c0_78, %c0_79, %c0_80] : memref<1x1x8xf32, #tpu.memory_space<vmem>>, vector<1x1x8xf32>
    %85 = vector.shape_cast %84 : vector<1x1x8xf32> to vector<1x8xf32>
    %86 = vector.shape_cast %85 : vector<1x8xf32> to vector<1x1x8xf32>
    %87 = vector.broadcast %86 : vector<1x1x8xf32> to vector<8x8x8xf32>
    %88 = arith.mulf %83, %87 : vector<8x8x8xf32>
    %c0_81 = arith.constant 0 : index
    %c0_82 = arith.constant 0 : index
    %c0_83 = arith.constant 0 : index
    %89 = vector.load %arg3[%c0_81, %c0_82, %c0_83] : memref<1x1x8xf32, #tpu.memory_space<vmem>>, vector<1x1x8xf32>
    %90 = vector.shape_cast %89 : vector<1x1x8xf32> to vector<1x8xf32>
    %91 = vector.shape_cast %90 : vector<1x8xf32> to vector<1x1x8xf32>
    %92 = vector.broadcast %91 : vector<1x1x8xf32> to vector<8x8x8xf32>
    %93 = arith.addf %88, %92 : vector<8x8x8xf32>
    %cst_84 = arith.constant 0.000000e+00 : f32
    %94 = vector.broadcast %cst_84 : f32 to vector<8x8x8xf32>
    %95 = arith.maximumf %93, %94 : vector<8x8x8xf32>
    %96 = vector.shape_cast %95 : vector<8x8x8xf32> to vector<64x8xf32>
    %c4 = arith.constant 4 : index
    %c0_85 = arith.constant 0 : index
    %c0_86 = arith.constant 0 : index
    %97 = vector.load %arg4[%c4, %c0_85, %c0_86] : memref<9x8x8xf32, #tpu.memory_space<vmem>>, vector<1x8x8xf32>
    %98 = vector.shape_cast %97 : vector<1x8x8xf32> to vector<8x8xf32>
    %cst_87 = arith.constant dense<0.000000e+00> : vector<64x8xf32>
    %99 = tpu.matmul %96, %98, %cst_87 {dimension_numbers = #tpu.dot_dimension_numbers<[1], [0], [0], [1], [0, 0, 1, 1], [], []>} : vector<64x8xf32>, vector<8x8xf32>, vector<64x8xf32> -> vector<64x8xf32>
    %c0_88 = arith.constant 0 : index
    %c0_89 = arith.constant 0 : index
    %100 = vector.load %arg8[%c0_88, %c0_89] : memref<64x8xf32, #tpu.memory_space<vmem>>, vector<64x8xf32>
    %101 = arith.addf %100, %99 : vector<64x8xf32>
    %c0_90 = arith.constant 0 : index
    %c0_91 = arith.constant 0 : index
    %102 = vector.load %arg8[%c0_90, %c0_91] : memref<64x8xf32, #tpu.memory_space<vmem>>, vector<64x8xf32>
    tpu.vector_store %arg8[%c0_90, %c0_91], %101 {strides = array<i32>} : memref<64x8xf32, #tpu.memory_space<vmem>>, vector<64x8xf32>,
    %c0_92 = arith.constant 0 : index
    %c0_93 = arith.constant 0 : index
    %c1_94 = arith.constant 1 : index
    %c2_95 = arith.constant 2 : index
    %c0_96 = arith.constant 0 : index
    %103 = vector.load %arg1[%c0_92, %c0_93, %c1_94, %c2_95, %c0_96] : memref<1x1x10x10x8xf32, #tpu.memory_space<vmem>>, vector<1x1x8x8x8xf32>
    %104 = vector.shape_cast %103 : vector<1x1x8x8x8xf32> to vector<8x8x8xf32>
    %c0_97 = arith.constant 0 : index
    %c0_98 = arith.constant 0 : index
    %c0_99 = arith.constant 0 : index
    %105 = vector.load %arg2[%c0_97, %c0_98, %c0_99] : memref<1x1x8xf32, #tpu.memory_space<vmem>>, vector<1x1x8xf32>
    %106 = vector.shape_cast %105 : vector<1x1x8xf32> to vector<1x8xf32>
    %107 = vector.shape_cast %106 : vector<1x8xf32> to vector<1x1x8xf32>
    %108 = vector.broadcast %107 : vector<1x1x8xf32> to vector<8x8x8xf32>
    %109 = arith.mulf %104, %108 : vector<8x8x8xf32>
    %c0_100 = arith.constant 0 : index
    %c0_101 = arith.constant 0 : index
    %c0_102 = arith.constant 0 : index
    %110 = vector.load %arg3[%c0_100, %c0_101, %c0_102] : memref<1x1x8xf32, #tpu.memory_space<vmem>>, vector<1x1x8xf32>
    %111 = vector.shape_cast %110 : vector<1x1x8xf32> to vector<1x8xf32>
    %112 = vector.shape_cast %111 : vector<1x8xf32> to vector<1x1x8xf32>
    %113 = vector.broadcast %112 : vector<1x1x8xf32> to vector<8x8x8xf32>
    %114 = arith.addf %109, %113 : vector<8x8x8xf32>
    %cst_103 = arith.constant 0.000000e+00 : f32
    %115 = vector.broadcast %cst_103 : f32 to vector<8x8x8xf32>
    %116 = arith.maximumf %114, %115 : vector<8x8x8xf32>
    %117 = vector.shape_cast %116 : vector<8x8x8xf32> to vector<64x8xf32>
    %c5 = arith.constant 5 : index
    %c0_104 = arith.constant 0 : index
    %c0_105 = arith.constant 0 : index
    %118 = vector.load %arg4[%c5, %c0_104, %c0_105] : memref<9x8x8xf32, #tpu.memory_space<vmem>>, vector<1x8x8xf32>
    %119 = vector.shape_cast %118 : vector<1x8x8xf32> to vector<8x8xf32>
    %cst_106 = arith.constant dense<0.000000e+00> : vector<64x8xf32>
    %120 = tpu.matmul %117, %119, %cst_106 {dimension_numbers = #tpu.dot_dimension_numbers<[1], [0], [0], [1], [0, 0, 1, 1], [], []>} : vector<64x8xf32>, vector<8x8xf32>, vector<64x8xf32> -> vector<64x8xf32>
    %c0_107 = arith.constant 0 : index
    %c0_108 = arith.constant 0 : index
    %121 = vector.load %arg8[%c0_107, %c0_108] : memref<64x8xf32, #tpu.memory_space<vmem>>, vector<64x8xf32>
    %122 = arith.addf %121, %120 : vector<64x8xf32>
    %c0_109 = arith.constant 0 : index
    %c0_110 = arith.constant 0 : index
    %123 = vector.load %arg8[%c0_109, %c0_110] : memref<64x8xf32, #tpu.memory_space<vmem>>, vector<64x8xf32>
    tpu.vector_store %arg8[%c0_109, %c0_110], %122 {strides = array<i32>} : memref<64x8xf32, #tpu.memory_space<vmem>>, vector<64x8xf32>,
    %c0_111 = arith.constant 0 : index
    %c0_112 = arith.constant 0 : index
    %c2_113 = arith.constant 2 : index
    %c0_114 = arith.constant 0 : index
    %c0_115 = arith.constant 0 : index
    %124 = vector.load %arg1[%c0_111, %c0_112, %c2_113, %c0_114, %c0_115] : memref<1x1x10x10x8xf32, #tpu.memory_space<vmem>>, vector<1x1x8x8x8xf32>
    %125 = vector.shape_cast %124 : vector<1x1x8x8x8xf32> to vector<8x8x8xf32>
    %c0_116 = arith.constant 0 : index
    %c0_117 = arith.constant 0 : index
    %c0_118 = arith.constant 0 : index
    %126 = vector.load %arg2[%c0_116, %c0_117, %c0_118] : memref<1x1x8xf32, #tpu.memory_space<vmem>>, vector<1x1x8xf32>
    %127 = vector.shape_cast %126 : vector<1x1x8xf32> to vector<1x8xf32>
    %128 = vector.shape_cast %127 : vector<1x8xf32> to vector<1x1x8xf32>
    %129 = vector.broadcast %128 : vector<1x1x8xf32> to vector<8x8x8xf32>
    %130 = arith.mulf %125, %129 : vector<8x8x8xf32>
    %c0_119 = arith.constant 0 : index
    %c0_120 = arith.constant 0 : index
    %c0_121 = arith.constant 0 : index
    %131 = vector.load %arg3[%c0_119, %c0_120, %c0_121] : memref<1x1x8xf32, #tpu.memory_space<vmem>>, vector<1x1x8xf32>
    %132 = vector.shape_cast %131 : vector<1x1x8xf32> to vector<1x8xf32>
    %133 = vector.shape_cast %132 : vector<1x8xf32> to vector<1x1x8xf32>
    %134 = vector.broadcast %133 : vector<1x1x8xf32> to vector<8x8x8xf32>
    %135 = arith.addf %130, %134 : vector<8x8x8xf32>
    %cst_122 = arith.constant 0.000000e+00 : f32
    %136 = vector.broadcast %cst_122 : f32 to vector<8x8x8xf32>
    %137 = arith.maximumf %135, %136 : vector<8x8x8xf32>
    %138 = vector.shape_cast %137 : vector<8x8x8xf32> to vector<64x8xf32>
    %c6 = arith.constant 6 : index
    %c0_123 = arith.constant 0 : index
    %c0_124 = arith.constant 0 : index
    %139 = vector.load %arg4[%c6, %c0_123, %c0_124] : memref<9x8x8xf32, #tpu.memory_space<vmem>>, vector<1x8x8xf32>
    %140 = vector.shape_cast %139 : vector<1x8x8xf32> to vector<8x8xf32>
    %cst_125 = arith.constant dense<0.000000e+00> : vector<64x8xf32>
    %141 = tpu.matmul %138, %140, %cst_125 {dimension_numbers = #tpu.dot_dimension_numbers<[1], [0], [0], [1], [0, 0, 1, 1], [], []>} : vector<64x8xf32>, vector<8x8xf32>, vector<64x8xf32> -> vector<64x8xf32>
    %c0_126 = arith.constant 0 : index
    %c0_127 = arith.constant 0 : index
    %142 = vector.load %arg8[%c0_126, %c0_127] : memref<64x8xf32, #tpu.memory_space<vmem>>, vector<64x8xf32>
    %143 = arith.addf %142, %141 : vector<64x8xf32>
    %c0_128 = arith.constant 0 : index
    %c0_129 = arith.constant 0 : index
    %144 = vector.load %arg8[%c0_128, %c0_129] : memref<64x8xf32, #tpu.memory_space<vmem>>, vector<64x8xf32>
    tpu.vector_store %arg8[%c0_128, %c0_129], %143 {strides = array<i32>} : memref<64x8xf32, #tpu.memory_space<vmem>>, vector<64x8xf32>,
    %c0_130 = arith.constant 0 : index
    %c0_131 = arith.constant 0 : index
    %c2_132 = arith.constant 2 : index
    %c1_133 = arith.constant 1 : index
    %c0_134 = arith.constant 0 : index
    %145 = vector.load %arg1[%c0_130, %c0_131, %c2_132, %c1_133, %c0_134] : memref<1x1x10x10x8xf32, #tpu.memory_space<vmem>>, vector<1x1x8x8x8xf32>
    %146 = vector.shape_cast %145 : vector<1x1x8x8x8xf32> to vector<8x8x8xf32>
    %c0_135 = arith.constant 0 : index
    %c0_136 = arith.constant 0 : index
    %c0_137 = arith.constant 0 : index
    %147 = vector.load %arg2[%c0_135, %c0_136, %c0_137] : memref<1x1x8xf32, #tpu.memory_space<vmem>>, vector<1x1x8xf32>
    %148 = vector.shape_cast %147 : vector<1x1x8xf32> to vector<1x8xf32>
    %149 = vector.shape_cast %148 : vector<1x8xf32> to vector<1x1x8xf32>
    %150 = vector.broadcast %149 : vector<1x1x8xf32> to vector<8x8x8xf32>
    %151 = arith.mulf %146, %150 : vector<8x8x8xf32>
    %c0_138 = arith.constant 0 : index
    %c0_139 = arith.constant 0 : index
    %c0_140 = arith.constant 0 : index
    %152 = vector.load %arg3[%c0_138, %c0_139, %c0_140] : memref<1x1x8xf32, #tpu.memory_space<vmem>>, vector<1x1x8xf32>
    %153 = vector.shape_cast %152 : vector<1x1x8xf32> to vector<1x8xf32>
    %154 = vector.shape_cast %153 : vector<1x8xf32> to vector<1x1x8xf32>
    %155 = vector.broadcast %154 : vector<1x1x8xf32> to vector<8x8x8xf32>
    %156 = arith.addf %151, %155 : vector<8x8x8xf32>
    %cst_141 = arith.constant 0.000000e+00 : f32
    %157 = vector.broadcast %cst_141 : f32 to vector<8x8x8xf32>
    %158 = arith.maximumf %156, %157 : vector<8x8x8xf32>
    %159 = vector.shape_cast %158 : vector<8x8x8xf32> to vector<64x8xf32>
    %c7 = arith.constant 7 : index
    %c0_142 = arith.constant 0 : index
    %c0_143 = arith.constant 0 : index
    %160 = vector.load %arg4[%c7, %c0_142, %c0_143] : memref<9x8x8xf32, #tpu.memory_space<vmem>>, vector<1x8x8xf32>
    %161 = vector.shape_cast %160 : vector<1x8x8xf32> to vector<8x8xf32>
    %cst_144 = arith.constant dense<0.000000e+00> : vector<64x8xf32>
    %162 = tpu.matmul %159, %161, %cst_144 {dimension_numbers = #tpu.dot_dimension_numbers<[1], [0], [0], [1], [0, 0, 1, 1], [], []>} : vector<64x8xf32>, vector<8x8xf32>, vector<64x8xf32> -> vector<64x8xf32>
    %c0_145 = arith.constant 0 : index
    %c0_146 = arith.constant 0 : index
    %163 = vector.load %arg8[%c0_145, %c0_146] : memref<64x8xf32, #tpu.memory_space<vmem>>, vector<64x8xf32>
    %164 = arith.addf %163, %162 : vector<64x8xf32>
    %c0_147 = arith.constant 0 : index
    %c0_148 = arith.constant 0 : index
    %165 = vector.load %arg8[%c0_147, %c0_148] : memref<64x8xf32, #tpu.memory_space<vmem>>, vector<64x8xf32>
    tpu.vector_store %arg8[%c0_147, %c0_148], %164 {strides = array<i32>} : memref<64x8xf32, #tpu.memory_space<vmem>>, vector<64x8xf32>,
    %c0_149 = arith.constant 0 : index
    %c0_150 = arith.constant 0 : index
    %c2_151 = arith.constant 2 : index
    %c2_152 = arith.constant 2 : index
    %c0_153 = arith.constant 0 : index
    %166 = vector.load %arg1[%c0_149, %c0_150, %c2_151, %c2_152, %c0_153] : memref<1x1x10x10x8xf32, #tpu.memory_space<vmem>>, vector<1x1x8x8x8xf32>
    %167 = vector.shape_cast %166 : vector<1x1x8x8x8xf32> to vector<8x8x8xf32>
    %c0_154 = arith.constant 0 : index
    %c0_155 = arith.constant 0 : index
    %c0_156 = arith.constant 0 : index
    %168 = vector.load %arg2[%c0_154, %c0_155, %c0_156] : memref<1x1x8xf32, #tpu.memory_space<vmem>>, vector<1x1x8xf32>
    %169 = vector.shape_cast %168 : vector<1x1x8xf32> to vector<1x8xf32>
    %170 = vector.shape_cast %169 : vector<1x8xf32> to vector<1x1x8xf32>
    %171 = vector.broadcast %170 : vector<1x1x8xf32> to vector<8x8x8xf32>
    %172 = arith.mulf %167, %171 : vector<8x8x8xf32>
    %c0_157 = arith.constant 0 : index
    %c0_158 = arith.constant 0 : index
    %c0_159 = arith.constant 0 : index
    %173 = vector.load %arg3[%c0_157, %c0_158, %c0_159] : memref<1x1x8xf32, #tpu.memory_space<vmem>>, vector<1x1x8xf32>
    %174 = vector.shape_cast %173 : vector<1x1x8xf32> to vector<1x8xf32>
    %175 = vector.shape_cast %174 : vector<1x8xf32> to vector<1x1x8xf32>
    %176 = vector.broadcast %175 : vector<1x1x8xf32> to vector<8x8x8xf32>
    %177 = arith.addf %172, %176 : vector<8x8x8xf32>
    %cst_160 = arith.constant 0.000000e+00 : f32
    %178 = vector.broadcast %cst_160 : f32 to vector<8x8x8xf32>
    %179 = arith.maximumf %177, %178 : vector<8x8x8xf32>
    %180 = vector.shape_cast %179 : vector<8x8x8xf32> to vector<64x8xf32>
    %c8 = arith.constant 8 : index
    %c0_161 = arith.constant 0 : index
    %c0_162 = arith.constant 0 : index
    %181 = vector.load %arg4[%c8, %c0_161, %c0_162] : memref<9x8x8xf32, #tpu.memory_space<vmem>>, vector<1x8x8xf32>
    %182 = vector.shape_cast %181 : vector<1x8x8xf32> to vector<8x8xf32>
    %cst_163 = arith.constant dense<0.000000e+00> : vector<64x8xf32>
    %183 = tpu.matmul %180, %182, %cst_163 {dimension_numbers = #tpu.dot_dimension_numbers<[1], [0], [0], [1], [0, 0, 1, 1], [], []>} : vector<64x8xf32>, vector<8x8xf32>, vector<64x8xf32> -> vector<64x8xf32>
    %c0_164 = arith.constant 0 : index
    %c0_165 = arith.constant 0 : index
    %184 = vector.load %arg8[%c0_164, %c0_165] : memref<64x8xf32, #tpu.memory_space<vmem>>, vector<64x8xf32>
    %185 = arith.addf %184, %183 : vector<64x8xf32>
    %c0_166 = arith.constant 0 : index
    %c0_167 = arith.constant 0 : index
    %186 = vector.load %arg8[%c0_166, %c0_167] : memref<64x8xf32, #tpu.memory_space<vmem>>, vector<64x8xf32>
    tpu.vector_store %arg8[%c0_166, %c0_167], %185 {strides = array<i32>} : memref<64x8xf32, #tpu.memory_space<vmem>>, vector<64x8xf32>,
    %c0_168 = arith.constant 0 : index
    %c0_169 = arith.constant 0 : index
    %187 = vector.load %arg8[%c0_168, %c0_169] : memref<64x8xf32, #tpu.memory_space<vmem>>, vector<64x8xf32>
    %c0_170 = arith.constant 0 : index
    %c0_171 = arith.constant 0 : index
    %c0_172 = arith.constant 0 : index
    %188 = vector.load %arg5[%c0_170, %c0_171, %c0_172] : memref<1x64x8xf32, #tpu.memory_space<vmem>>, vector<1x64x8xf32>
    %189 = vector.shape_cast %188 : vector<1x64x8xf32> to vector<64x8xf32>
    %190 = vector.shape_cast %187 : vector<64x8xf32> to vector<1x64x8xf32>
    tpu.vector_store %arg5[%c0_170, %c0_171, %c0_172], %190 {strides = array<i32>} : memref<1x64x8xf32, #tpu.memory_space<vmem>>, vector<1x64x8xf32>,
    %cst_173 = arith.constant dense<0.000000e+00> : vector<8xf32>
    %191 = vector.multi_reduction <add>, %187, %cst_173 [0] : vector<64x8xf32> to vector<8xf32>
    %192 = vector.shape_cast %191 : vector<8xf32> to vector<1x8xf32>
    %c0_174 = arith.constant 0 : index
    %c0_175 = arith.constant 0 : index
    %c0_176 = arith.constant 0 : index
    %193 = vector.load %arg6[%c0_174, %c0_175, %c0_176] : memref<1x1x8xf32, #tpu.memory_space<vmem>>, vector<1x1x8xf32>
    %194 = vector.shape_cast %193 : vector<1x1x8xf32> to vector<1x8xf32>
    %195 = vector.shape_cast %192 : vector<1x8xf32> to vector<1x1x8xf32>
    tpu.vector_store %arg6[%c0_174, %c0_175, %c0_176], %195 {strides = array<i32>} : memref<1x1x8xf32, #tpu.memory_space<vmem>>, vector<1x1x8xf32>,
    %196 = arith.mulf %187, %187 : vector<64x8xf32>
    %cst_177 = arith.constant dense<0.000000e+00> : vector<8xf32>
    %197 = vector.multi_reduction <add>, %196, %cst_177 [0] : vector<64x8xf32> to vector<8xf32>
    %198 = vector.shape_cast %197 : vector<8xf32> to vector<1x8xf32>
    %c0_178 = arith.constant 0 : index
    %c0_179 = arith.constant 0 : index
    %c0_180 = arith.constant 0 : index
    %199 = vector.load %arg7[%c0_178, %c0_179, %c0_180] : memref<1x1x8xf32, #tpu.memory_space<vmem>>, vector<1x1x8xf32>
    %200 = vector.shape_cast %199 : vector<1x1x8xf32> to vector<1x8xf32>
    %201 = vector.shape_cast %198 : vector<1x8xf32> to vector<1x1x8xf32>
    tpu.vector_store %arg7[%c0_178, %c0_179, %c0_180], %201 {strides = array<i32>} : memref<1x1x8xf32, #tpu.memory_space<vmem>>, vector<1x1x8xf32>,
    return
  }
  func.func @transform_0(%arg0: i32) -> (i32, i32, i32, i32, i32) {
    %c0_i32 = arith.constant 0 : i32
    %c0_i32_0 = arith.constant 0 : i32
    %c0_i32_1 = arith.constant 0 : i32
    %c0_i32_2 = arith.constant 0 : i32
    %c0_i32_3 = arith.constant 0 : i32
    return %arg0, %c0_i32, %c0_i32_0, %c0_i32_1, %c0_i32_2 : i32, i32, i32, i32, i32
  }
  func.func @transform_1(%arg0: i32) -> (i32, i32, i32) {
    %c0_i32 = arith.constant 0 : i32
    %c0_i32_0 = arith.constant 0 : i32
    %c0_i32_1 = arith.constant 0 : i32
    %c0_i32_2 = arith.constant 0 : i32
    return %c0_i32, %c0_i32_0, %c0_i32_1 : i32, i32, i32
  }
  func.func @transform_2(%arg0: i32) -> (i32, i32, i32) {
    %c0_i32 = arith.constant 0 : i32
    %c0_i32_0 = arith.constant 0 : i32
    %c0_i32_1 = arith.constant 0 : i32
    %c0_i32_2 = arith.constant 0 : i32
    return %c0_i32, %c0_i32_0, %c0_i32_1 : i32, i32, i32
  }
  func.func @transform_3(%arg0: i32) -> (i32, i32, i32) {
    %c0_i32 = arith.constant 0 : i32
    %c0_i32_0 = arith.constant 0 : i32
    %c0_i32_1 = arith.constant 0 : i32
    %c0_i32_2 = arith.constant 0 : i32
    return %c0_i32, %c0_i32_0, %c0_i32_1 : i32, i32, i32
  }
  func.func @transform_4(%arg0: i32) -> (i32, i32, i32) {
    %c0_i32 = arith.constant 0 : i32
    %c0_i32_0 = arith.constant 0 : i32
    %c0_i32_1 = arith.constant 0 : i32
    return %arg0, %c0_i32, %c0_i32_0 : i32, i32, i32
  }
  func.func @transform_5(%arg0: i32) -> (i32, i32, i32) {
    %c0_i32 = arith.constant 0 : i32
    %c0_i32_0 = arith.constant 0 : i32
    %c0_i32_1 = arith.constant 0 : i32
    return %arg0, %c0_i32, %c0_i32_0 : i32, i32, i32
  }
  func.func @transform_6(%arg0: i32) -> (i32, i32, i32) {
    %c0_i32 = arith.constant 0 : i32
    %c0_i32_0 = arith.constant 0 : i32
    %c0_i32_1 = arith.constant 0 : i32
    return %arg0, %c0_i32, %c0_i32_0 : i32, i32, i32
  }
}

module attributes {stable_mosaic.version = 11 : i64} {
  func.func @_bn_add_relu_kernel(%arg0: i32, %arg1: memref<8x128xf32, #tpu.memory_space<vmem>>, %arg2: memref<8x128xf32, #tpu.memory_space<vmem>>, %arg3: memref<2x128xf32, #tpu.memory_space<vmem>>, %arg4: memref<2x128xf32, #tpu.memory_space<vmem>>, %arg5: memref<8x128xf32, #tpu.memory_space<vmem>>) attributes {dimension_semantics = [#tpu.dimension_semantics<parallel>], iteration_bounds = array<i64: 1>, scalar_prefetch = 0 : i64, scratch_operands = 0 : i64, tpu.core_type = #tpu.core_type<tc>, window_params = [{transform_indices = @transform_0, window_bounds = array<i64: 8, 128>}, {transform_indices = @transform_1, window_bounds = array<i64: 8, 128>}, {pipeline_mode = #tpu.pipeline_mode<synchronous>, transform_indices = @transform_2, window_bounds = array<i64: 2, 128>}, {pipeline_mode = #tpu.pipeline_mode<synchronous>, transform_indices = @transform_3, window_bounds = array<i64: 2, 128>}, {transform_indices = @transform_4, window_bounds = array<i64: 8, 128>}]} {
    %c0 = arith.constant 0 : index
    %c0_0 = arith.constant 0 : index
    %0 = vector.load %arg1[%c0, %c0_0] : memref<8x128xf32, #tpu.memory_space<vmem>>, vector<8x128xf32>
    %c0_1 = arith.constant 0 : index
    %c0_2 = arith.constant 0 : index
    %1 = vector.load %arg2[%c0_1, %c0_2] : memref<8x128xf32, #tpu.memory_space<vmem>>, vector<8x128xf32>
    %c0_3 = arith.constant 0 : index
    %c0_4 = arith.constant 0 : index
    %2 = vector.load %arg3[%c0_3, %c0_4] : memref<2x128xf32, #tpu.memory_space<vmem>>, vector<1x128xf32>
    %3 = vector.broadcast %2 : vector<1x128xf32> to vector<8x128xf32>
    %4 = arith.mulf %0, %3 : vector<8x128xf32>
    %c1 = arith.constant 1 : index
    %c0_5 = arith.constant 0 : index
    %5 = vector.load %arg3[%c1, %c0_5] : memref<2x128xf32, #tpu.memory_space<vmem>>, vector<1x128xf32>
    %6 = vector.broadcast %5 : vector<1x128xf32> to vector<8x128xf32>
    %7 = arith.addf %4, %6 : vector<8x128xf32>
    %c0_6 = arith.constant 0 : index
    %c0_7 = arith.constant 0 : index
    %8 = vector.load %arg4[%c0_6, %c0_7] : memref<2x128xf32, #tpu.memory_space<vmem>>, vector<1x128xf32>
    %9 = vector.broadcast %8 : vector<1x128xf32> to vector<8x128xf32>
    %10 = arith.mulf %1, %9 : vector<8x128xf32>
    %11 = arith.addf %7, %10 : vector<8x128xf32>
    %c1_8 = arith.constant 1 : index
    %c0_9 = arith.constant 0 : index
    %12 = vector.load %arg4[%c1_8, %c0_9] : memref<2x128xf32, #tpu.memory_space<vmem>>, vector<1x128xf32>
    %13 = vector.broadcast %12 : vector<1x128xf32> to vector<8x128xf32>
    %14 = arith.addf %11, %13 : vector<8x128xf32>
    %cst = arith.constant 0.000000e+00 : f32
    %15 = vector.broadcast %cst : f32 to vector<8x128xf32>
    %16 = arith.maximumf %14, %15 : vector<8x128xf32>
    %c0_10 = arith.constant 0 : index
    %c0_11 = arith.constant 0 : index
    %17 = vector.load %arg5[%c0_10, %c0_11] : memref<8x128xf32, #tpu.memory_space<vmem>>, vector<8x128xf32>
    tpu.vector_store %arg5[%c0_10, %c0_11], %16 {strides = array<i32>} : memref<8x128xf32, #tpu.memory_space<vmem>>, vector<8x128xf32>,
    return
  }
  func.func @transform_0(%arg0: i32) -> (i32, i32) {
    %c0_i32 = arith.constant 0 : i32
    %c0_i32_0 = arith.constant 0 : i32
    return %arg0, %c0_i32 : i32, i32
  }
  func.func @transform_1(%arg0: i32) -> (i32, i32) {
    %c0_i32 = arith.constant 0 : i32
    %c0_i32_0 = arith.constant 0 : i32
    return %arg0, %c0_i32 : i32, i32
  }
  func.func @transform_2(%arg0: i32) -> (i32, i32) {
    %c0_i32 = arith.constant 0 : i32
    %c0_i32_0 = arith.constant 0 : i32
    %c0_i32_1 = arith.constant 0 : i32
    return %c0_i32, %c0_i32_0 : i32, i32
  }
  func.func @transform_3(%arg0: i32) -> (i32, i32) {
    %c0_i32 = arith.constant 0 : i32
    %c0_i32_0 = arith.constant 0 : i32
    %c0_i32_1 = arith.constant 0 : i32
    return %c0_i32, %c0_i32_0 : i32, i32
  }
  func.func @transform_4(%arg0: i32) -> (i32, i32) {
    %c0_i32 = arith.constant 0 : i32
    %c0_i32_0 = arith.constant 0 : i32
    return %arg0, %c0_i32 : i32, i32
  }
}

</mosaic_0001>

<llo_original>
// kernel: tile.23
$region0: #{tile.23}
  #allocation0 [shape = 's32[1]{0}', space=sflag, size = 0x4, scoped, tag = 'scoped memory for tile.23']
  %s0 = inlined_call_operand.vmem [shape: f32[8], index: 0, kind: input, shape index: {}]
  %s1 = inlined_call_operand.vmem [shape: f32[16,8], index: 1, kind: output, shape index: {}]
  // Predicated region
  $region2: #{tile.23} parent=0 // pred_check
    _
  $region3: #{tile.23} parent=0 // pred_check_branch
    %3 = sbr.rel (0) target = $region5
  $region4: #{tile.23} parent=0 // pred_region
    _
  $region5: #{tile.23} parent=0 // pred_fallthru
    _
  %v4 = vld [vmem:[%s0] ss:$0 sm:$0xff]
  %5 = vst [vmem:[%s1] sm:$0xff] %v4
  %s6 = scalar_lea.vmem %s1, 8
  %7 = vst [vmem:[%s6] sm:$0xff] %v4

// kernel: tile.28
$region0: #{tile.28}
  %s0 = inlined_call_operand.vmem [shape: f32[16,8], index: 0, kind: input, shape index: {}]
  %s1 = inlined_call_operand.vmem [shape: f32[1,128], index: 1, kind: output, shape index: {}]
  $region1: #{tile.28} parent=0
    #allocation0 [shape = 'u8[4096]{0}', space=vmem, size = 0x1000, scoped, tag = 'scoped mem for output reshape']
    %v2 = vld [vmem:[%s0] sm:$0x1]
    %vm3 = vcmask 64512
    %4 = vst.msk [vmem:[#allocation0] sm:$0x1] %vm3, %v2
    %s5 = scalar_lea.vmem %s0, 15
    %v6 = vld [vmem:[%s5] sm:$0x1]
    %7 = vrot.lane.b32.xlu0 %v6, 120
    %v8 = vpop.permute.xlu0 %7
    %vm9 = vcmask 1048512
    %10 = vst.msk [vmem:[#allocation0] sm:$0x1] %vm9, %v8
    %s11 = scalar_lea.vmem %s0, 14
    %v12 = vld [vmem:[%s11] sm:$0x1]
    %13 = vrot.lane.b32.xlu0 %v12, 112
    %v14 = vpop.permute.xlu0 %13
    %vm15 = vcmask 982912
    %16 = vst.msk [vmem:[#allocation0] sm:$0x1] %vm15, %v14
    %s17 = scalar_lea.vmem %s0, 13
    %v18 = vld [vmem:[%s17] sm:$0x1]
    %19 = vrot.lane.b32.xlu0 %v18, 104
    %v20 = vpop.permute.xlu0 %19
    %vm21 = vcmask 917312
    %22 = vst.msk [vmem:[#allocation0] sm:$0x1] %vm21, %v20
    %s23 = scalar_lea.vmem %s0, 12
    %v24 = vld [vmem:[%s23] sm:$0x1]
    %25 = vrot.lane.b32.xlu0 %v24, 96
    %v26 = vpop.permute.xlu0 %25
    %vm27 = vcmask 851712
    %28 = vst.msk [vmem:[#allocation0] sm:$0x1] %vm27, %v26
    %s29 = scalar_lea.vmem %s0, 11
    %v30 = vld [vmem:[%s29] sm:$0x1]
    %31 = vrot.lane.b32.xlu0 %v30, 88
    %v32 = vpop.permute.xlu0 %31
    %vm33 = vcmask 786112
    %34 = vst.msk [vmem:[#allocation0] sm:$0x1] %vm33, %v32
    %s35 = scalar_lea.vmem %s0, 10
    %v36 = vld [vmem:[%s35] sm:$0x1]
    %37 = vrot.lane.b32.xlu0 %v36, 80
    %v38 = vpop.permute.xlu0 %37
    %vm39 = vcmask 720512
    %40 = vst.msk [vmem:[#allocation0] sm:$0x1] %vm39, %v38
    %s41 = scalar_lea.vmem %s0, 9
    %v42 = vld [vmem:[%s41] sm:$0x1]
    %43 = vrot.lane.b32.xlu0 %v42, 72
    %v44 = vpop.permute.xlu0 %43
    %vm45 = vcmask 654912
    %46 = vst.msk [vmem:[#allocation0] sm:$0x1] %vm45, %v44
    %s47 = scalar_lea.vmem %s0, 8
    %v48 = vld [vmem:[%s47] sm:$0x1]
    %49 = vrot.lane.b32.xlu0 %v48, 64
    %v50 = vpop.permute.xlu0 %49
    %vm51 = vcmask 589312
    %52 = vst.msk [vmem:[#allocation0] sm:$0x1] %vm51, %v50
    %s53 = scalar_lea.vmem %s0, 7
    %v54 = vld [vmem:[%s53] sm:$0x1]
    %55 = vrot.lane.b32.xlu0 %v54, 56
    %v56 = vpop.permute.xlu0 %55
    %vm57 = vcmask 523712
    %58 = vst.msk [vmem:[#allocation0] sm:$0x1] %vm57, %v56
    %s59 = scalar_lea.vmem %s0, 6
    %v60 = vld [vmem:[%s59] sm:$0x1]
    %61 = vrot.lane.b32.xlu0 %v60, 48
    %v62 = vpop.permute.xlu0 %61
    %vm63 = vcmask 458112
    %64 = vst.msk [vmem:[#allocation0] sm:$0x1] %vm63, %v62
    %s65 = scalar_lea.vmem %s0, 5
    %v66 = vld [vmem:[%s65] sm:$0x1]
    %67 = vrot.lane.b32.xlu0 %v66, 40
    %v68 = vpop.permute.xlu0 %67
    %vm69 = vcmask 392512
    %70 = vst.msk [vmem:[#allocation0] sm:$0x1] %vm69, %v68
    %s71 = scalar_lea.vmem %s0, 4
    %v72 = vld [vmem:[%s71] sm:$0x1]
    %73 = vrot.lane.b32.xlu0 %v72, 32
    %v74 = vpop.permute.xlu0 %73
    %vm75 = vcmask 326912
    %76 = vst.msk [vmem:[#allocation0] sm:$0x1] %vm75, %v74
    %s77 = scalar_lea.vmem %s0, 3
    %v78 = vld [vmem:[%s77] sm:$0x1]
    %79 = vrot.lane.b32.xlu0 %v78, 24
    %v80 = vpop.permute.xlu0 %79
    %vm81 = vcmask 261312
    %82 = vst.msk [vmem:[#allocation0] sm:$0x1] %vm81, %v80
    %s83 = scalar_lea.vmem %s0, 2
    %v84 = vld [vmem:[%s83] sm:$0x1]
    %85 = vrot.lane.b32.xlu0 %v84, 16
    %v86 = vpop.permute.xlu0 %85
    %vm87 = vcmask 195712
    %88 = vst.msk [vmem:[#allocation0] sm:$0x1] %vm87, %v86
    %s89 = scalar_lea.vmem %s0, 1
    %v90 = vld [vmem:[%s89] sm:$0x1]
    %91 = vrot.lane.b32.xlu0 %v90, 8
    %v92 = vpop.permute.xlu0 %91
    %vm93 = vcmask 130112
    %94 = vst.msk [vmem:[#allocation0] sm:$0x1] %vm93, %v92
    %s96 = ssub.s32 2, 1
    %v97 = vld [vmem:[#allocation0] sm:%s96]
    %s99 = ssub.s32 2, 1
    %100 = vst [vmem:[%s1] sm:%s99] %v97

// kernel: basic_block_forward.5
$region0: #{basic_block_forward.5}
  #allocation0 [shape = 'u32[]', space=smem, size = 0x4, offset = 0x4, fixed_abs, tag = 'smem constant byte address 0x4 - core index']
  #allocation1 [shape = 'u32[72,128]{1,0:T(1,128)}', space=vmem, size = 0x9000, scoped, tag = 'internal scratch']
  %s0 = inlined_call_operand.vmem [shape: f32[8,128], index: 0, kind: input, shape index: {}]
  %s1 = inlined_call_operand.vmem [shape: f32[8,128], index: 1, kind: input, shape index: {}]
  %s2 = inlined_call_operand.vmem [shape: f32[2,128], index: 2, kind: input, shape index: {}]
  %s3 = inlined_call_operand.vmem [shape: f32[2,128], index: 3, kind: input, shape index: {}]
  %s4 = inlined_call_operand.vmem [shape: f32[8,128], index: 4, kind: output, shape index: {}]
  %s5 = sld [smem:[#allocation0]]
  $region26: #{basic_block_forward.5} parent=0
    _
  %s7 = ssub.s32 1, %s5
  %s8 = scalar_select 0, %s7, %s5
  // Predicated region
  $region2: #{basic_block_forward.5} parent=0 // pred_check
    _
  $region3: #{basic_block_forward.5} parent=0 // pred_check_branch
    %10 = sbr.rel (0) target = $region5
  $region4: #{basic_block_forward.5} parent=0 // pred_region
    _
  $region5: #{basic_block_forward.5} parent=0 // pred_fallthru
    _
  // Predicated region
  $region6: #{basic_block_forward.5} parent=0 // pred_check
    _
  $region7: #{basic_block_forward.5} parent=0 // pred_check_branch
    %12 = sbr.rel (0) target = $region9
  $region8: #{basic_block_forward.5} parent=0 // pred_region
    _
  $region9: #{basic_block_forward.5} parent=0 // pred_fallthru
    _
  // Predicated region
  $region10: #{basic_block_forward.5} parent=0 // pred_check
    _
  $region11: #{basic_block_forward.5} parent=0 // pred_check_branch
    %14 = sbr.rel (0) target = $region13
  $region12: #{basic_block_forward.5} parent=0 // pred_region
    _
  $region13: #{basic_block_forward.5} parent=0 // pred_fallthru
    _
  // Predicated region
  $region14: #{basic_block_forward.5} parent=0 // pred_check
    _
  $region15: #{basic_block_forward.5} parent=0 // pred_check_branch
    %16 = sbr.rel (0) target = $region17
  $region16: #{basic_block_forward.5} parent=0 // pred_region
    _
  $region17: #{basic_block_forward.5} parent=0 // pred_fallthru
    _
  %v17 = vld [vmem:[%s0] sm:$0xff]
  %v18 = vld [vmem:[%s1] sm:$0xff]
  %v19 = vld [vmem:[%s2] sm:$0x1]
  %v20 = vperm.slane %v19, 0
  %v21 = vmul.f32 %v17, %v20
  %v22 = vld [vmem:[%s2 + $0x1] sm:$0x1]
  %v23 = vperm.slane %v22, 0
  %v24 = vadd.f32 %v21, %v23
  %v25 = vld [vmem:[%s3] sm:$0x1]
  %v26 = vperm.slane %v25, 0
  %v27 = vmul.f32 %v18, %v26
  %v28 = vadd.f32 %v24, %v27
  %v29 = vld [vmem:[%s3 + $0x1] sm:$0x1]
  %v30 = vperm.slane %v29, 0
  %v31 = vadd.f32 %v28, %v30
  %v32 = vmax.f32 %v31, 0.0
  %33 = vst [vmem:[%s4] sm:$0xff] %v32
  // Predicated region
  $region18: #{basic_block_forward.5} parent=0 // pred_check
    _
  $region19: #{basic_block_forward.5} parent=0 // pred_check_branch
    %35 = sbr.rel (0) target = $region21
  $region20: #{basic_block_forward.5} parent=0 // pred_region
    _
  $region21: #{basic_block_forward.5} parent=0 // pred_fallthru
    _
  // Predicated region
  $region22: #{basic_block_forward.5} parent=0 // pred_check
    _
  $region23: #{basic_block_forward.5} parent=0 // pred_check_branch
    %37 = sbr.rel (0) target = $region25
  $region24: #{basic_block_forward.5} parent=0 // pred_region
    _
  $region25: #{basic_block_forward.5} parent=0 // pred_fallthru
    _

// kernel: basic_block_forward.3
$region0: #{basic_block_forward.3}
  #allocation0 [shape = 'u32[]', space=smem, size = 0x4, offset = 0x4, fixed_abs, tag = 'smem constant byte address 0x4 - core index']
  #allocation1 [shape = 'u32[72,128]{1,0:T(1,128)}', space=vmem, size = 0x9000, scoped, tag = 'internal scratch']
  #allocation2 [shape = 'f32[64,8]{1,0:T(8,128)}', space=vmem, size = 0x8000, scoped, tag = 'scratch operand']
  %s0 = inlined_call_operand.vmem [shape: f32[2,4,9,9,4], index: 0, kind: input, shape index: {}]
  %s1 = inlined_call_operand.vmem [shape: f32[9,4,8], index: 1, kind: input, shape index: {}]
  %s2 = inlined_call_operand.vmem [shape: f32[4,8], index: 2, kind: input, shape index: {}]
  %s3 = inlined_call_operand.vmem [shape: f32[2,64,8], index: 3, kind: output, shape index: {0}]
  %s4 = inlined_call_operand.vmem [shape: f32[2,1,8], index: 4, kind: output, shape index: {1}]
  %s5 = inlined_call_operand.vmem [shape: f32[2,1,8], index: 5, kind: output, shape index: {2}]
  %s6 = inlined_call_operand.vmem [shape: f32[2,64,8], index: 6, kind: output, shape index: {3}]
  %s7 = inlined_call_operand.vmem [shape: f32[2,1,8], index: 7, kind: output, shape index: {4}]
  %s8 = inlined_call_operand.vmem [shape: f32[2,1,8], index: 8, kind: output, shape index: {5}]
  %9 = xla_tuple %s3, %s4, %s5, %s6, %s7, %s8
  %s10 = sld [smem:[#allocation0]]
  $region85: #{basic_block_forward.3} parent=0
    _
  %s12 = ssub.s32 1, %s10
  %s13 = scalar_select 0, %s12, %s10
  loop: start=0, step=1, limit=4
  $region2: #{basic_block_forward.3} parent=0 // loop_pre_header
    _
  $region3: #{basic_block_forward.3} parent=0 // loop_header
    %s15 = sphi 0, %s19
    %p16 = scmp.ge.s32.totalorder %s15, 4
    %s25 = sphi 0, %s27
    %s28 = sphi 0, %s25
    %s29 = sphi 0, %s28
    %s45 = sphi 0, %s29
    %s49 = sphi 0, %s49
    %s51 = sphi 0, %s49
    %s52 = sphi 0, %s51
    %s66 = sphi 0, %s52
    %s70 = sphi 0, %s70
    %s72 = sphi 0, %s70
    %s73 = sphi 0, %s72
    %s87 = sphi 0, %s73
    %s93 = sphi 0, %s95
    %s96 = sphi 0, %s93
    %s97 = sphi 0, %s96
    %s113 = sphi 0, %s97
    %s119 = sphi 0, %s121
    %s122 = sphi 0, %s119
    %s123 = sphi 0, %s122
    %s139 = sphi 0, %s123
    %s145 = sphi 0, %s147
    %s148 = sphi 0, %s145
    %s149 = sphi 0, %s148
    %s165 = sphi 0, %s149
    %s171 = sphi 0, %s173
    %s174 = sphi 0, %s171
    %s175 = sphi 0, %s174
    %s191 = sphi 0, %s175
    %s197 = sphi 0, %s199
    %s200 = sphi 0, %s197
    %s201 = sphi 0, %s200
    %s217 = sphi 0, %s201
    %s223 = sphi 0, %s225
    %s226 = sphi 0, %s223
    %s227 = sphi 0, %s226
    %s243 = sphi 0, %s227
  $region4: #{basic_block_forward.3} parent=0 // loop_header_branch
    %18 = sbr.rel (%p16) target = $region8
  $region5: #{basic_block_forward.3} parent=0 // loop_body
    %s20 = ssub.s32 %s15, 1
    %s21 = ssub.s32 %s15, 2
    %s22 = sadd.s32 %s15, 1
    %s23 = ssub.s32 %s15, %s22
    %p24 = scmp.eq.s32.totalorder %s23, 0
    %s26 = sadd.s32 %s25, 1
    %s27 = scalar_select %p24, %s25, %s26
    %p30 = pneg %p24
    %p31 = scmp.eq.s32.totalorder %s15, 1
    %p32 = por %p30, %p31
    %p33 = scmp.ne.s32.totalorder %s25, %s28
    %p34 = scmp.eq.s32.totalorder %s15, 0
    %p35 = por %p33, %p34
    %p36 = scmp.ne.s32.totalorder %s25, %s28
    %p37 = scmp.eq.s32.totalorder %s20, 1
    %p38 = por %p36, %p37
    %p39 = scmp.ne.s32.totalorder %s28, %s29
    %p40 = scmp.eq.s32.totalorder %s20, 0
    %p41 = por %p39, %p40
    %p42 = scmp.ne.s32.totalorder %s28, %s29
    %p43 = scmp.eq.s32.totalorder %s21, 1
    %p44 = por %p42, %p43
    %p46 = scmp.ne.s32.totalorder %s29, %s45
    %p47 = scmp.eq.s32.totalorder %s21, 0
    %p48 = por %p46, %p47
    %s50 = sadd.s32 %s49, 1
    %p53 = scmp.eq.s32.totalorder %s15, 1
    %p54 = scmp.ne.s32.totalorder %s49, %s51
    %p55 = scmp.eq.s32.totalorder %s15, 0
    %p56 = por %p54, %p55
    %p57 = scmp.ne.s32.totalorder %s49, %s51
    %p58 = scmp.eq.s32.totalorder %s20, 1
    %p59 = por %p57, %p58
    %p60 = scmp.ne.s32.totalorder %s51, %s52
    %p61 = scmp.eq.s32.totalorder %s20, 0
    %p62 = por %p60, %p61
    %p63 = scmp.ne.s32.totalorder %s51, %s52
    %p64 = scmp.eq.s32.totalorder %s21, 1
    %p65 = por %p63, %p64
    %p67 = scmp.ne.s32.totalorder %s52, %s66
    %p68 = scmp.eq.s32.totalorder %s21, 0
    %p69 = por %p67, %p68
    %s71 = sadd.s32 %s70, 1
    %p74 = scmp.eq.s32.totalorder %s15, 1
    %p75 = scmp.ne.s32.totalorder %s70, %s72
    %p76 = scmp.eq.s32.totalorder %s15, 0
    %p77 = por %p75, %p76
    %p78 = scmp.ne.s32.totalorder %s70, %s72
    %p79 = scmp.eq.s32.totalorder %s20, 1
    %p80 = por %p78, %p79
    %p81 = scmp.ne.s32.totalorder %s72, %s73
    %p82 = scmp.eq.s32.totalorder %s20, 0
    %p83 = por %p81, %p82
    %p84 = scmp.ne.s32.totalorder %s72, %s73
    %p85 = scmp.eq.s32.totalorder %s21, 1
    %p86 = por %p84, %p85
    %p88 = scmp.ne.s32.totalorder %s73, %s87
    %p89 = scmp.eq.s32.totalorder %s21, 0
    %p90 = por %p88, %p89
    %s91 = ssub.s32 %s15, %s22
    %p92 = scmp.eq.s32.totalorder %s91, 0
    %s94 = sadd.s32 %s93, 1
    %s95 = scalar_select %p92, %s93, %s94
    %p98 = pneg %p92
    %p99 = scmp.eq.s32.totalorder %s15, 1
    %p100 = por %p98, %p99
    %p101 = scmp.ne.s32.totalorder %s93, %s96
    %p102 = scmp.eq.s32.totalorder %s15, 0
    %p103 = por %p101, %p102
    %p104 = scmp.ne.s32.totalorder %s93, %s96
    %p105 = scmp.eq.s32.totalorder %s20, 1
    %p106 = por %p104, %p105
    %p107 = scmp.ne.s32.totalorder %s96, %s97
    %p108 = scmp.eq.s32.totalorder %s20, 0
    %p109 = por %p107, %p108
    %p110 = scmp.ne.s32.totalorder %s96, %s97
    %p111 = scmp.eq.s32.totalorder %s21, 1
    %p112 = por %p110, %p111
    %p114 = scmp.ne.s32.totalorder %s97, %s113
    %p115 = scmp.eq.s32.totalorder %s21, 0
    %p116 = por %p114, %p115
    %s117 = ssub.s32 %s15, %s22
    %p118 = scmp.eq.s32.totalorder %s117, 0
    %s120 = sadd.s32 %s119, 1
    %s121 = scalar_select %p118, %s119, %s120
    %p124 = pneg %p118
    %p125 = scmp.eq.s32.totalorder %s15, 1
    %p126 = por %p124, %p125
    %p127 = scmp.ne.s32.totalorder %s119, %s122
    %p128 = scmp.eq.s32.totalorder %s15, 0
    %p129 = por %p127, %p128
    %p130 = scmp.ne.s32.totalorder %s119, %s122
    %p131 = scmp.eq.s32.totalorder %s20, 1
    %p132 = por %p130, %p131
    %p133 = scmp.ne.s32.totalorder %s122, %s123
    %p134 = scmp.eq.s32.totalorder %s20, 0
    %p135 = por %p133, %p134
    %p136 = scmp.ne.s32.totalorder %s122, %s123
    %p137 = scmp.eq.s32.totalorder %s21, 1
    %p138 = por %p136, %p137
    %p140 = scmp.ne.s32.totalorder %s123, %s139
    %p141 = scmp.eq.s32.totalorder %s21, 0
    %p142 = por %p140, %p141
    %s143 = ssub.s32 %s15, %s22
    %p144 = scmp.eq.s32.totalorder %s143, 0
    %s146 = sadd.s32 %s145, 1
    %s147 = scalar_select %p144, %s145, %s146
    %p150 = pneg %p144
    %p151 = scmp.eq.s32.totalorder %s15, 1
    %p152 = por %p150, %p151
    %p153 = scmp.ne.s32.totalorder %s145, %s148
    %p154 = scmp.eq.s32.totalorder %s15, 0
    %p155 = por %p153, %p154
    %p156 = scmp.ne.s32.totalorder %s145, %s148
    %p157 = scmp.eq.s32.totalorder %s20, 1
    %p158 = por %p156, %p157
    %p159 = scmp.ne.s32.totalorder %s148, %s149
    %p160 = scmp.eq.s32.totalorder %s20, 0
    %p161 = por %p159, %p160
    %p162 = scmp.ne.s32.totalorder %s148, %s149
    %p163 = scmp.eq.s32.totalorder %s21, 1
    %p164 = por %p162, %p163
    %p166 = scmp.ne.s32.totalorder %s149, %s165
    %p167 = scmp.eq.s32.totalorder %s21, 0
    %p168 = por %p166, %p167
    %s169 = ssub.s32 %s15, %s22
    %p170 = scmp.eq.s32.totalorder %s169, 0
    %s172 = sadd.s32 %s171, 1
    %s173 = scalar_select %p170, %s171, %s172
    %p176 = pneg %p170
    %p177 = scmp.eq.s32.totalorder %s15, 1
    %p178 = por %p176, %p177
    %p179 = scmp.ne.s32.totalorder %s171, %s174
    %p180 = scmp.eq.s32.totalorder %s15, 0
    %p181 = por %p179, %p180
    %p182 = scmp.ne.s32.totalorder %s171, %s174
    %p183 = scmp.eq.s32.totalorder %s20, 1
    %p184 = por %p182, %p183
    %p185 = scmp.ne.s32.totalorder %s174, %s175
    %p186 = scmp.eq.s32.totalorder %s20, 0
    %p187 = por %p185, %p186
    %p188 = scmp.ne.s32.totalorder %s174, %s175
    %p189 = scmp.eq.s32.totalorder %s21, 1
    %p190 = por %p188, %p189
    %p192 = scmp.ne.s32.totalorder %s175, %s191
    %p193 = scmp.eq.s32.totalorder %s21, 0
    %p194 = por %p192, %p193
    %s195 = ssub.s32 %s15, %s22
    %p196 = scmp.eq.s32.totalorder %s195, 0
    %s198 = sadd.s32 %s197, 1
    %s199 = scalar_select %p196, %s197, %s198
    %p202 = pneg %p196
    %p203 = scmp.eq.s32.totalorder %s15, 1
    %p204 = por %p202, %p203
    %p205 = scmp.ne.s32.totalorder %s197, %s200
    %p206 = scmp.eq.s32.totalorder %s15, 0
    %p207 = por %p205, %p206
    %p208 = scmp.ne.s32.totalorder %s197, %s200
    %p209 = scmp.eq.s32.totalorder %s20, 1
    %p210 = por %p208, %p209
    %p211 = scmp.ne.s32.totalorder %s200, %s201
    %p212 = scmp.eq.s32.totalorder %s20, 0
    %p213 = por %p211, %p212
    %p214 = scmp.ne.s32.totalorder %s200, %s201
    %p215 = scmp.eq.s32.totalorder %s21, 1
    %p216 = por %p214, %p215
    %p218 = scmp.ne.s32.totalorder %s201, %s217
    %p219 = scmp.eq.s32.totalorder %s21, 0
    %p220 = por %p218, %p219
    %s221 = ssub.s32 %s15, %s22
    %p222 = scmp.eq.s32.totalorder %s221, 0
    %s224 = sadd.s32 %s223, 1
    %s225 = scalar_select %p222, %s223, %s224
    %p228 = pneg %p222
    %p229 = scmp.eq.s32.totalorder %s15, 1
    %p230 = por %p228, %p229
    %p231 = scmp.ne.s32.totalorder %s223, %s226
    %p232 = scmp.eq.s32.totalorder %s15, 0
    %p233 = por %p231, %p232
    %p234 = scmp.ne.s32.totalorder %s223, %s226
    %p235 = scmp.eq.s32.totalorder %s20, 1
    %p236 = por %p234, %p235
    %p237 = scmp.ne.s32.totalorder %s226, %s227
    %p238 = scmp.eq.s32.totalorder %s20, 0
    %p239 = por %p237, %p238
    %p240 = scmp.ne.s32.totalorder %s226, %s227
    %p241 = scmp.eq.s32.totalorder %s21, 1
    %p242 = por %p240, %p241
    %p244 = scmp.ne.s32.totalorder %s227, %s243
    %p245 = scmp.eq.s32.totalorder %s21, 0
    %p246 = por %p244, %p245
    %p247 = scmp.le.s32.totalorder 1, %s15
    %p248 = scmp.lt.s32.totalorder %s15, 3
    %p249 = pnand %p247, %p248
    %p250 = pneg %p249
    // Predicated region
    $region9: #{basic_block_forward.3} parent=5 // pred_check
      _
    $region10: #{basic_block_forward.3} parent=5 // pred_check_branch
      %252 = sbr.rel (%p249) target = $region12
    $region11: #{basic_block_forward.3} parent=5 // pred_region
      %s253 = ssub.s32 %s15, 1
      // Predicated region
      $region13: #{basic_block_forward.3} parent=11 // pred_check
        %p254 = pneg %p62
      $region14: #{basic_block_forward.3} parent=11 // pred_check_branch
        %256 = sbr.rel (%p254) target = $region16
      $region15: #{basic_block_forward.3} parent=11 // pred_region
        _
      $region16: #{basic_block_forward.3} parent=11 // pred_fallthru
        _
      // Predicated region
      $region17: #{basic_block_forward.3} parent=11 // pred_check
        %p257 = pneg %p83
      $region18: #{basic_block_forward.3} parent=11 // pred_check_branch
        %259 = sbr.rel (%p257) target = $region20
      $region19: #{basic_block_forward.3} parent=11 // pred_region
        _
      $region20: #{basic_block_forward.3} parent=11 // pred_fallthru
        _
    $region12: #{basic_block_forward.3} parent=5 // pred_fallthru
      _
    %p260 = scmp.lt.s32.totalorder %s15, 2
    // Predicated region
    $region21: #{basic_block_forward.3} parent=5 // pred_check
      %p261 = pneg %p260
    $region22: #{basic_block_forward.3} parent=5 // pred_check_branch
      %263 = sbr.rel (%p261) target = $region24
    $region23: #{basic_block_forward.3} parent=5 // pred_region
      // Predicated region
      $region25: #{basic_block_forward.3} parent=23 // pred_check
        %p264 = pneg %p35
      $region26: #{basic_block_forward.3} parent=23 // pred_check_branch
        %266 = sbr.rel (%p264) target = $region28
      $region27: #{basic_block_forward.3} parent=23 // pred_region
        %p267 = scmp.lt.s32.totalorder %s15, 1
        %s268 = scalar_select %p267, %s15, 1
        %s269 = smul.addr %s268, 72
        %s270 = smul.addr %s269, 8
        %s271 = scalar_lea.vmem %s0, %s270
      $region28: #{basic_block_forward.3} parent=23 // pred_fallthru
        _
    $region24: #{basic_block_forward.3} parent=5 // pred_fallthru
      _
    %p272 = scmp.le.s32.totalorder 1, %s15
    %p273 = scmp.lt.s32.totalorder %s15, 3
    %p274 = pnand %p272, %p273
    %p275 = pneg %p274
    // Predicated region
    $region29: #{basic_block_forward.3} parent=5 // pred_check
      _
    $region30: #{basic_block_forward.3} parent=5 // pred_check_branch
      %277 = sbr.rel (%p274) target = $region32
    $region31: #{basic_block_forward.3} parent=5 // pred_region
      %s278 = ssub.s32 %s15, 1
      %p279 = scmp.lt.s32.totalorder %s20, 1
      %s280 = scalar_select %p279, %s20, 1
      %s281 = smul.addr %s280, 72
      %s282 = smul.addr %s281, 8
      %s283 = scalar_lea.vmem %s0, %s282
      %p284 = pneg %p41
      %p285 = pneg %p38
      %p286 = pneg %p62
      %p287 = pneg %p59
      %p288 = pneg %p83
      %p289 = pneg %p80
      %p290 = pneg %p109
      %p291 = pneg %p106
      %p292 = scmp.lt.s32.totalorder %s20, 1
      %s293 = scalar_select %p292, %s20, 1
      %s294 = smul.addr %s293, 8
      %s295 = smul.addr %s294, 8
      %s296 = scalar_lea.vmem %s3, %s295
      %p297 = pneg %p135
      %p298 = pneg %p132
      %p299 = scmp.lt.s32.totalorder %s20, 1
      %s300 = scalar_select %p299, %s20, 1
      %s301 = scalar_lea.vmem %s4, %s300
      %p302 = pneg %p161
      %p303 = pneg %p158
      %p304 = scmp.lt.s32.totalorder %s20, 1
      %s305 = scalar_select %p304, %s20, 1
      %s306 = scalar_lea.vmem %s5, %s305
      %p307 = pneg %p187
      %p308 = pneg %p184
      %p309 = scmp.lt.s32.totalorder %s20, 1
      %s310 = scalar_select %p309, %s20, 1
      %s311 = smul.addr %s310, 8
      %s312 = smul.addr %s311, 8
      %s313 = scalar_lea.vmem %s6, %s312
      %p314 = pneg %p213
      %p315 = pneg %p210
      %p316 = scmp.lt.s32.totalorder %s20, 1
      %s317 = scalar_select %p316, %s20, 1
      %s318 = scalar_lea.vmem %s7, %s317
      %p319 = pneg %p239
      %p320 = pneg %p236
      %p321 = scmp.lt.s32.totalorder %s20, 1
      %s322 = scalar_select %p321, %s20, 1
      %s323 = scalar_lea.vmem %s8, %s322
      %p324 = scmp.lt.s32.totalorder %s20, 1
      %s325 = scalar_select %p324, %s20, 1
      %s326 = smul.addr %s325, 72
      %s327 = smul.addr %s326, 8
      %s328 = scalar_lea.vmem %s0, %s327
      %p329 = scmp.lt.s32.totalorder %s20, 1
      %s330 = scalar_select %p329, %s20, 1
      %s331 = smul.addr %s330, 8
      %s332 = smul.addr %s331, 8
      %s333 = scalar_lea.vmem %s3, %s332
      %p334 = scmp.lt.s32.totalorder %s20, 1
      %s335 = scalar_select %p334, %s20, 1
      %s336 = scalar_lea.vmem %s4, %s335
      %p337 = scmp.lt.s32.totalorder %s20, 1
      %s338 = scalar_select %p337, %s20, 1
      %s339 = scalar_lea.vmem %s5, %s338
      %p340 = scmp.lt.s32.totalorder %s20, 1
      %s341 = scalar_select %p340, %s20, 1
      %s342 = smul.addr %s341, 8
      %s343 = smul.addr %s342, 8
      %s344 = scalar_lea.vmem %s6, %s343
      %p345 = scmp.lt.s32.totalorder %s20, 1
      %s346 = scalar_select %p345, %s20, 1
      %s347 = scalar_lea.vmem %s7, %s346
      %p348 = scmp.lt.s32.totalorder %s20, 1
      %s349 = scalar_select %p348, %s20, 1
      %s350 = scalar_lea.vmem %s8, %s349
      %v351 = vld [vmem:[%s328] sm:$0xff]
      %v352 = vld [vmem:[%s328 + $0x10] sm:$0xff]
      %v353 = vld [vmem:[%s328 + $0x20] sm:$0xff]
      %v354 = vld [vmem:[%s328 + $0x30] sm:$0xff]
      %v355 = vld [vmem:[%s328 + $0x40] sm:$0xff]
      %v356 = vld [vmem:[%s328 + $0x50] sm:$0xff]
      %v357 = vld [vmem:[%s328 + $0x60] sm:$0xff]
      %v358 = vld [vmem:[%s328 + $0x70] sm:$0xff]
      %v359 = vld [vmem:[%s1] sm:$0xf]
      %vm360 = vcmask 31744
      %v362 = vsel %vm360, %v351, 0
      %v365 = vsel %vm360, %v352, 0
      %v368 = vsel %vm360, %v353, 0
      %v371 = vsel %vm360, %v354, 0
      %v374 = vsel %vm360, %v355, 0
      %v377 = vsel %vm360, %v356, 0
      %v380 = vsel %vm360, %v357, 0
      %v383 = vsel %vm360, %v358, 0
      %vm385 = vcmask 1043456
      %v387 = vsel %vm385, %v359, 0
      %389 = vmatpush.msra.mxu0 0.0
      %390 = vmatpush.msra.mxu0 0.0
      %391 = vmatpush.msra.mxu0 0.0
      %392 = vmatpush.msra.mxu0 0.0
      %393 = vmatpush.msra.mxu0 0.0
      %394 = vmatpush.msra.mxu0 0.0
      %395 = vmatpush.msra.mxu0 0.0
      %396 = vmatpush.msra.mxu0 0.0
      %397 = vmatpush.msra.mxu0 0.0
      %398 = vmatpush.msra.mxu0 0.0
      %399 = vmatpush.msra.mxu0 0.0
      %400 = vmatpush.msra.mxu0 0.0
      %401 = vmatpush.msra.mxu0 0.0
      %402 = vmatpush.msra.mxu0 0.0
      %403 = vmatpush.msra.mxu0 0.0
      %404 = vmatpush.msra.mxu0 %v387
      %405 = vmatmul.f32.gmra.mxu0 %v362
      %v406 = vpop.f32.mrf.mxu0
      %v407 = vadd.f32 0.0, %v406
      %408 = vmatmul.f32.gmra.mxu0 %v365
      %v409 = vpop.f32.mrf.mxu0
      %v410 = vadd.f32 0.0, %v409
      %411 = vmatmul.f32.gmra.mxu0 %v368
      %v412 = vpop.f32.mrf.mxu0
      %v413 = vadd.f32 0.0, %v412
      %414 = vmatmul.f32.gmra.mxu0 %v371
      %v415 = vpop.f32.mrf.mxu0
      %v416 = vadd.f32 0.0, %v415
      %417 = vmatmul.f32.gmra.mxu0 %v374
      %v418 = vpop.f32.mrf.mxu0
      %v419 = vadd.f32 0.0, %v418
      %420 = vmatmul.f32.gmra.mxu0 %v377
      %v421 = vpop.f32.mrf.mxu0
      %v422 = vadd.f32 0.0, %v421
      %423 = vmatmul.f32.gmra.mxu0 %v380
      %v424 = vpop.f32.mrf.mxu0
      %v425 = vadd.f32 0.0, %v424
      %426 = vmatmul.f32.gmra.mxu0 %v383
      %v427 = vpop.f32.mrf.mxu0
      %v428 = vadd.f32 0.0, %v427
      %429 = vdwg.mxu0
      %vm430 = vcmask 64512
      %431 = vst.msk [vmem:[#allocation2] sm:$0xff] %vm430, %v407
      %432 = vst.msk [vmem:[#allocation2 + $0x8] sm:$0xff] %vm430, %v410
      %433 = vst.msk [vmem:[#allocation2 + $0x10] sm:$0xff] %vm430, %v413
      %434 = vst.msk [vmem:[#allocation2 + $0x18] sm:$0xff] %vm430, %v416
      %435 = vst.msk [vmem:[#allocation2 + $0x20] sm:$0xff] %vm430, %v419
      %436 = vst.msk [vmem:[#allocation2 + $0x28] sm:$0xff] %vm430, %v422
      %437 = vst.msk [vmem:[#allocation2 + $0x30] sm:$0xff] %vm430, %v425
      %438 = vst.msk [vmem:[#allocation2 + $0x38] sm:$0xff] %vm430, %v428
      %s439 = scalar_lea.vmem %s328, 144
      %v440 = vld [vmem:[%s439] sm:$0xff]
      %v441 = vld [vmem:[%s439 + $0x10] sm:$0xff]
      %v442 = vld [vmem:[%s439 + $0x20] sm:$0xff]
      %v443 = vld [vmem:[%s439 + $0x30] sm:$0xff]
      %v444 = vld [vmem:[%s439 + $0x40] sm:$0xff]
      %v445 = vld [vmem:[%s439 + $0x50] sm:$0xff]
      %v446 = vld [vmem:[%s439 + $0x60] sm:$0xff]
      %v447 = vld [vmem:[%s439 + $0x70] sm:$0xff]
      %s448 = scalar_lea.vmem %s1, 4
      %v449 = vld [vmem:[%s448] sm:$0xf]
      %v451 = vsel %vm360, %v440, 0
      %v454 = vsel %vm360, %v441, 0
      %v457 = vsel %vm360, %v442, 0
      %v460 = vsel %vm360, %v443, 0
      %v463 = vsel %vm360, %v444, 0
      %v466 = vsel %vm360, %v445, 0
      %v469 = vsel %vm360, %v446, 0
      %v472 = vsel %vm360, %v447, 0
      %v475 = vsel %vm385, %v449, 0
      %477 = vmatpush.msra.mxu0 0.0
      %478 = vmatpush.msra.mxu0 0.0
      %479 = vmatpush.msra.mxu0 0.0
      %480 = vmatpush.msra.mxu0 0.0
      %481 = vmatpush.msra.mxu0 0.0
      %482 = vmatpush.msra.mxu0 0.0
      %483 = vmatpush.msra.mxu0 0.0
      %484 = vmatpush.msra.mxu0 0.0
      %485 = vmatpush.msra.mxu0 0.0
      %486 = vmatpush.msra.mxu0 0.0
      %487 = vmatpush.msra.mxu0 0.0
      %488 = vmatpush.msra.mxu0 0.0
      %489 = vmatpush.msra.mxu0 0.0
      %490 = vmatpush.msra.mxu0 0.0
      %491 = vmatpush.msra.mxu0 0.0
      %492 = vmatpush.msra.mxu0 %v475
      %493 = vmatmul.f32.gmra.mxu0 %v451
      %v494 = vpop.f32.mrf.mxu0
      %v495 = vadd.f32 0.0, %v494
      %496 = vmatmul.f32.gmra.mxu0 %v454
      %v497 = vpop.f32.mrf.mxu0
      %v498 = vadd.f32 0.0, %v497
      %499 = vmatmul.f32.gmra.mxu0 %v457
      %v500 = vpop.f32.mrf.mxu0
      %v501 = vadd.f32 0.0, %v500
      %502 = vmatmul.f32.gmra.mxu0 %v460
      %v503 = vpop.f32.mrf.mxu0
      %v504 = vadd.f32 0.0, %v503
      %505 = vmatmul.f32.gmra.mxu0 %v463
      %v506 = vpop.f32.mrf.mxu0
      %v507 = vadd.f32 0.0, %v506
      %508 = vmatmul.f32.gmra.mxu0 %v466
      %v509 = vpop.f32.mrf.mxu0
      %v510 = vadd.f32 0.0, %v509
      %511 = vmatmul.f32.gmra.mxu0 %v469
      %v512 = vpop.f32.mrf.mxu0
      %v513 = vadd.f32 0.0, %v512
      %514 = vmatmul.f32.gmra.mxu0 %v472
      %v515 = vpop.f32.mrf.mxu0
      %v516 = vadd.f32 0.0, %v515
      %517 = vdwg.mxu0
      %v518 = vld [vmem:[#allocation2] sm:$0xff]
      %v519 = vld [vmem:[#allocation2 + $0x8] sm:$0xff]
      %v520 = vld [vmem:[#allocation2 + $0x10] sm:$0xff]
      %v521 = vld [vmem:[#allocation2 + $0x18] sm:$0xff]
      %v522 = vld [vmem:[#allocation2 + $0x20] sm:$0xff]
      %v523 = vld [vmem:[#allocation2 + $0x28] sm:$0xff]
      %v524 = vld [vmem:[#allocation2 + $0x30] sm:$0xff]
      %v525 = vld [vmem:[#allocation2 + $0x38] sm:$0xff]
      %v526 = vadd.f32 %v518, %v495
      %v527 = vadd.f32 %v519, %v498
      %v528 = vadd.f32 %v520, %v501
      %v529 = vadd.f32 %v521, %v504
      %v530 = vadd.f32 %v522, %v507
      %v531 = vadd.f32 %v523, %v510
      %v532 = vadd.f32 %v524, %v513
      %v533 = vadd.f32 %v525, %v516
      %534 = vst.msk [vmem:[#allocation2] sm:$0xff] %vm430, %v526
      %535 = vst.msk [vmem:[#allocation2 + $0x8] sm:$0xff] %vm430, %v527
      %536 = vst.msk [vmem:[#allocation2 + $0x10] sm:$0xff] %vm430, %v528
      %537 = vst.msk [vmem:[#allocation2 + $0x18] sm:$0xff] %vm430, %v529
      %538 = vst.msk [vmem:[#allocation2 + $0x20] sm:$0xff] %vm430, %v530
      %539 = vst.msk [vmem:[#allocation2 + $0x28] sm:$0xff] %vm430, %v531
      %540 = vst.msk [vmem:[#allocation2 + $0x30] sm:$0xff] %vm430, %v532
      %541 = vst.msk [vmem:[#allocation2 + $0x38] sm:$0xff] %vm430, %v533
      %v542 = vld [vmem:[%s328 + $0x1] sm:$0xff]
      %v543 = vld [vmem:[%s328 + $0x11] sm:$0xff]
      %v544 = vld [vmem:[%s328 + $0x21] sm:$0xff]
      %v545 = vld [vmem:[%s328 + $0x31] sm:$0xff]
      %v546 = vld [vmem:[%s328 + $0x41] sm:$0xff]
      %v547 = vld [vmem:[%s328 + $0x51] sm:$0xff]
      %v548 = vld [vmem:[%s328 + $0x61] sm:$0xff]
      %v549 = vld [vmem:[%s328 + $0x71] sm:$0xff]
      %s550 = scalar_lea.vmem %s1, 8
      %v551 = vld [vmem:[%s550] sm:$0xf]
      %v553 = vsel %vm360, %v542, 0
      %v556 = vsel %vm360, %v543, 0
      %v559 = vsel %vm360, %v544, 0
      %v562 = vsel %vm360, %v545, 0
      %v565 = vsel %vm360, %v546, 0
      %v568 = vsel %vm360, %v547, 0
      %v571 = vsel %vm360, %v548, 0
      %v574 = vsel %vm360, %v549, 0
      %v577 = vsel %vm385, %v551, 0
      %579 = vmatpush.msra.mxu0 0.0
      %580 = vmatpush.msra.mxu0 0.0
      %581 = vmatpush.msra.mxu0 0.0
      %582 = vmatpush.msra.mxu0 0.0
      %583 = vmatpush.msra.mxu0 0.0
      %584 = vmatpush.msra.mxu0 0.0
      %585 = vmatpush.msra.mxu0 0.0
      %586 = vmatpush.msra.mxu0 0.0
      %587 = vmatpush.msra.mxu0 0.0
      %588 = vmatpush.msra.mxu0 0.0
      %589 = vmatpush.msra.mxu0 0.0
      %590 = vmatpush.msra.mxu0 0.0
      %591 = vmatpush.msra.mxu0 0.0
      %592 = vmatpush.msra.mxu0 0.0
      %593 = vmatpush.msra.mxu0 0.0
      %594 = vmatpush.msra.mxu0 %v577
      %595 = vmatmul.f32.gmra.mxu0 %v553
      %v596 = vpop.f32.mrf.mxu0
      %v597 = vadd.f32 0.0, %v596
      %598 = vmatmul.f32.gmra.mxu0 %v556
      %v599 = vpop.f32.mrf.mxu0
      %v600 = vadd.f32 0.0, %v599
      %601 = vmatmul.f32.gmra.mxu0 %v559
      %v602 = vpop.f32.mrf.mxu0
      %v603 = vadd.f32 0.0, %v602
      %604 = vmatmul.f32.gmra.mxu0 %v562
      %v605 = vpop.f32.mrf.mxu0
      %v606 = vadd.f32 0.0, %v605
      %607 = vmatmul.f32.gmra.mxu0 %v565
      %v608 = vpop.f32.mrf.mxu0
      %v609 = vadd.f32 0.0, %v608
      %610 = vmatmul.f32.gmra.mxu0 %v568
      %v611 = vpop.f32.mrf.mxu0
      %v612 = vadd.f32 0.0, %v611
      %613 = vmatmul.f32.gmra.mxu0 %v571
      %v614 = vpop.f32.mrf.mxu0
      %v615 = vadd.f32 0.0, %v614
      %616 = vmatmul.f32.gmra.mxu0 %v574
      %v617 = vpop.f32.mrf.mxu0
      %v618 = vadd.f32 0.0, %v617
      %619 = vdwg.mxu0
      %v620 = vld [vmem:[#allocation2] sm:$0xff]
      %v621 = vld [vmem:[#allocation2 + $0x8] sm:$0xff]
      %v622 = vld [vmem:[#allocation2 + $0x10] sm:$0xff]
      %v623 = vld [vmem:[#allocation2 + $0x18] sm:$0xff]
      %v624 = vld [vmem:[#allocation2 + $0x20] sm:$0xff]
      %v625 = vld [vmem:[#allocation2 + $0x28] sm:$0xff]
      %v626 = vld [vmem:[#allocation2 + $0x30] sm:$0xff]
      %v627 = vld [vmem:[#allocation2 + $0x38] sm:$0xff]
      %v628 = vadd.f32 %v620, %v597
      %v629 = vadd.f32 %v621, %v600
      %v630 = vadd.f32 %v622, %v603
      %v631 = vadd.f32 %v623, %v606
      %v632 = vadd.f32 %v624, %v609
      %v633 = vadd.f32 %v625, %v612
      %v634 = vadd.f32 %v626, %v615
      %v635 = vadd.f32 %v627, %v618
      %636 = vst.msk [vmem:[#allocation2] sm:$0xff] %vm430, %v628
      %637 = vst.msk [vmem:[#allocation2 + $0x8] sm:$0xff] %vm430, %v629
      %638 = vst.msk [vmem:[#allocation2 + $0x10] sm:$0xff] %vm430, %v630
      %639 = vst.msk [vmem:[#allocation2 + $0x18] sm:$0xff] %vm430, %v631
      %640 = vst.msk [vmem:[#allocation2 + $0x20] sm:$0xff] %vm430, %v632
      %641 = vst.msk [vmem:[#allocation2 + $0x28] sm:$0xff] %vm430, %v633
      %642 = vst.msk [vmem:[#allocation2 + $0x30] sm:$0xff] %vm430, %v634
      %643 = vst.msk [vmem:[#allocation2 + $0x38] sm:$0xff] %vm430, %v635
      %s644 = scalar_lea.vmem %s328, 288
      %v645 = vld [vmem:[%s644] sm:$0xff]
      %v646 = vld [vmem:[%s644 + $0x10] sm:$0xff]
      %v647 = vld [vmem:[%s644 + $0x20] sm:$0xff]
      %v648 = vld [vmem:[%s644 + $0x30] sm:$0xff]
      %v649 = vld [vmem:[%s644 + $0x40] sm:$0xff]
      %v650 = vld [vmem:[%s644 + $0x50] sm:$0xff]
      %v651 = vld [vmem:[%s644 + $0x60] sm:$0xff]
      %v652 = vld [vmem:[%s644 + $0x70] sm:$0xff]
      %s653 = scalar_lea.vmem %s1, 12
      %v654 = vld [vmem:[%s653] sm:$0xf]
      %v656 = vsel %vm360, %v645, 0
      %v659 = vsel %vm360, %v646, 0
      %v662 = vsel %vm360, %v647, 0
      %v665 = vsel %vm360, %v648, 0
      %v668 = vsel %vm360, %v649, 0
      %v671 = vsel %vm360, %v650, 0
      %v674 = vsel %vm360, %v651, 0
      %v677 = vsel %vm360, %v652, 0
      %v680 = vsel %vm385, %v654, 0
      %682 = vmatpush.msra.mxu0 0.0
      %683 = vmatpush.msra.mxu0 0.0
      %684 = vmatpush.msra.mxu0 0.0
      %685 = vmatpush.msra.mxu0 0.0
      %686 = vmatpush.msra.mxu0 0.0
      %687 = vmatpush.msra.mxu0 0.0
      %688 = vmatpush.msra.mxu0 0.0
      %689 = vmatpush.msra.mxu0 0.0
      %690 = vmatpush.msra.mxu0 0.0
      %691 = vmatpush.msra.mxu0 0.0
      %692 = vmatpush.msra.mxu0 0.0
      %693 = vmatpush.msra.mxu0 0.0
      %694 = vmatpush.msra.mxu0 0.0
      %695 = vmatpush.msra.mxu0 0.0
      %696 = vmatpush.msra.mxu0 0.0
      %697 = vmatpush.msra.mxu0 %v680
      %698 = vmatmul.f32.gmra.mxu0 %v656
      %v699 = vpop.f32.mrf.mxu0
      %v700 = vadd.f32 0.0, %v699
      %701 = vmatmul.f32.gmra.mxu0 %v659
      %v702 = vpop.f32.mrf.mxu0
      %v703 = vadd.f32 0.0, %v702
      %704 = vmatmul.f32.gmra.mxu0 %v662
      %v705 = vpop.f32.mrf.mxu0
      %v706 = vadd.f32 0.0, %v705
      %707 = vmatmul.f32.gmra.mxu0 %v665
      %v708 = vpop.f32.mrf.mxu0
      %v709 = vadd.f32 0.0, %v708
      %710 = vmatmul.f32.gmra.mxu0 %v668
      %v711 = vpop.f32.mrf.mxu0
      %v712 = vadd.f32 0.0, %v711
      %713 = vmatmul.f32.gmra.mxu0 %v671
      %v714 = vpop.f32.mrf.mxu0
      %v715 = vadd.f32 0.0, %v714
      %716 = vmatmul.f32.gmra.mxu0 %v674
      %v717 = vpop.f32.mrf.mxu0
      %v718 = vadd.f32 0.0, %v717
      %719 = vmatmul.f32.gmra.mxu0 %v677
      %v720 = vpop.f32.mrf.mxu0
      %v721 = vadd.f32 0.0, %v720
      %722 = vdwg.mxu0
      %v723 = vld [vmem:[#allocation2] sm:$0xff]
      %v724 = vld [vmem:[#allocation2 + $0x8] sm:$0xff]
      %v725 = vld [vmem:[#allocation2 + $0x10] sm:$0xff]
      %v726 = vld [vmem:[#allocation2 + $0x18] sm:$0xff]
      %v727 = vld [vmem:[#allocation2 + $0x20] sm:$0xff]
      %v728 = vld [vmem:[#allocation2 + $0x28] sm:$0xff]
      %v729 = vld [vmem:[#allocation2 + $0x30] sm:$0xff]
      %v730 = vld [vmem:[#allocation2 + $0x38] sm:$0xff]
      %v731 = vadd.f32 %v723, %v700
      %v732 = vadd.f32 %v724, %v703
      %v733 = vadd.f32 %v725, %v706
      %v734 = vadd.f32 %v726, %v709
      %v735 = vadd.f32 %v727, %v712
      %v736 = vadd.f32 %v728, %v715
      %v737 = vadd.f32 %v729, %v718
      %v738 = vadd.f32 %v730, %v721
      %739 = vst.msk [vmem:[#allocation2] sm:$0xff] %vm430, %v731
      %740 = vst.msk [vmem:[#allocation2 + $0x8] sm:$0xff] %vm430, %v732
      %741 = vst.msk [vmem:[#allocation2 + $0x10] sm:$0xff] %vm430, %v733
      %742 = vst.msk [vmem:[#allocation2 + $0x18] sm:$0xff] %vm430, %v734
      %743 = vst.msk [vmem:[#allocation2 + $0x20] sm:$0xff] %vm430, %v735
      %744 = vst.msk [vmem:[#allocation2 + $0x28] sm:$0xff] %vm430, %v736
      %745 = vst.msk [vmem:[#allocation2 + $0x30] sm:$0xff] %vm430, %v737
      %746 = vst.msk [vmem:[#allocation2 + $0x38] sm:$0xff] %vm430, %v738
      %s747 = scalar_lea.vmem %s328, 432
      %v748 = vld [vmem:[%s747] sm:$0xff]
      %v749 = vld [vmem:[%s747 + $0x10] sm:$0xff]
      %v750 = vld [vmem:[%s747 + $0x20] sm:$0xff]
      %v751 = vld [vmem:[%s747 + $0x30] sm:$0xff]
      %v752 = vld [vmem:[%s747 + $0x40] sm:$0xff]
      %v753 = vld [vmem:[%s747 + $0x50] sm:$0xff]
      %v754 = vld [vmem:[%s747 + $0x60] sm:$0xff]
      %v755 = vld [vmem:[%s747 + $0x70] sm:$0xff]
      %s756 = scalar_lea.vmem %s1, 16
      %v757 = vld [vmem:[%s756] sm:$0xf]
      %v759 = vsel %vm360, %v748, 0
      %v762 = vsel %vm360, %v749, 0
      %v765 = vsel %vm360, %v750, 0
      %v768 = vsel %vm360, %v751, 0
      %v771 = vsel %vm360, %v752, 0
      %v774 = vsel %vm360, %v753, 0
      %v777 = vsel %vm360, %v754, 0
      %v780 = vsel %vm360, %v755, 0
      %v783 = vsel %vm385, %v757, 0
      %785 = vmatpush.msra.mxu0 0.0
      %786 = vmatpush.msra.mxu0 0.0
      %787 = vmatpush.msra.mxu0 0.0
      %788 = vmatpush.msra.mxu0 0.0
      %789 = vmatpush.msra.mxu0 0.0
      %790 = vmatpush.msra.mxu0 0.0
      %791 = vmatpush.msra.mxu0 0.0
      %792 = vmatpush.msra.mxu0 0.0
      %793 = vmatpush.msra.mxu0 0.0
      %794 = vmatpush.msra.mxu0 0.0
      %795 = vmatpush.msra.mxu0 0.0
      %796 = vmatpush.msra.mxu0 0.0
      %797 = vmatpush.msra.mxu0 0.0
      %798 = vmatpush.msra.mxu0 0.0
      %799 = vmatpush.msra.mxu0 0.0
      %800 = vmatpush.msra.mxu0 %v783
      %801 = vmatmul.f32.gmra.mxu0 %v759
      %v802 = vpop.f32.mrf.mxu0
      %v803 = vadd.f32 0.0, %v802
      %804 = vmatmul.f32.gmra.mxu0 %v762
      %v805 = vpop.f32.mrf.mxu0
      %v806 = vadd.f32 0.0, %v805
      %807 = vmatmul.f32.gmra.mxu0 %v765
      %v808 = vpop.f32.mrf.mxu0
      %v809 = vadd.f32 0.0, %v808
      %810 = vmatmul.f32.gmra.mxu0 %v768
      %v811 = vpop.f32.mrf.mxu0
      %v812 = vadd.f32 0.0, %v811
      %813 = vmatmul.f32.gmra.mxu0 %v771
      %v814 = vpop.f32.mrf.mxu0
      %v815 = vadd.f32 0.0, %v814
      %816 = vmatmul.f32.gmra.mxu0 %v774
      %v817 = vpop.f32.mrf.mxu0
      %v818 = vadd.f32 0.0, %v817
      %819 = vmatmul.f32.gmra.mxu0 %v777
      %v820 = vpop.f32.mrf.mxu0
      %v821 = vadd.f32 0.0, %v820
      %822 = vmatmul.f32.gmra.mxu0 %v780
      %v823 = vpop.f32.mrf.mxu0
      %v824 = vadd.f32 0.0, %v823
      %825 = vdwg.mxu0
      %v826 = vld [vmem:[#allocation2] sm:$0xff]
      %v827 = vld [vmem:[#allocation2 + $0x8] sm:$0xff]
      %v828 = vld [vmem:[#allocation2 + $0x10] sm:$0xff]
      %v829 = vld [vmem:[#allocation2 + $0x18] sm:$0xff]
      %v830 = vld [vmem:[#allocation2 + $0x20] sm:$0xff]
      %v831 = vld [vmem:[#allocation2 + $0x28] sm:$0xff]
      %v832 = vld [vmem:[#allocation2 + $0x30] sm:$0xff]
      %v833 = vld [vmem:[#allocation2 + $0x38] sm:$0xff]
      %v834 = vadd.f32 %v826, %v803
      %v835 = vadd.f32 %v827, %v806
      %v836 = vadd.f32 %v828, %v809
      %v837 = vadd.f32 %v829, %v812
      %v838 = vadd.f32 %v830, %v815
      %v839 = vadd.f32 %v831, %v818
      %v840 = vadd.f32 %v832, %v821
      %v841 = vadd.f32 %v833, %v824
      %842 = vst.msk [vmem:[#allocation2] sm:$0xff] %vm430, %v834
      %843 = vst.msk [vmem:[#allocation2 + $0x8] sm:$0xff] %vm430, %v835
      %844 = vst.msk [vmem:[#allocation2 + $0x10] sm:$0xff] %vm430, %v836
      %845 = vst.msk [vmem:[#allocation2 + $0x18] sm:$0xff] %vm430, %v837
      %846 = vst.msk [vmem:[#allocation2 + $0x20] sm:$0xff] %vm430, %v838
      %847 = vst.msk [vmem:[#allocation2 + $0x28] sm:$0xff] %vm430, %v839
      %848 = vst.msk [vmem:[#allocation2 + $0x30] sm:$0xff] %vm430, %v840
      %849 = vst.msk [vmem:[#allocation2 + $0x38] sm:$0xff] %vm430, %v841
      %v850 = vld [vmem:[%s644 + $0x1] sm:$0xff]
      %v851 = vld [vmem:[%s644 + $0x11] sm:$0xff]
      %v852 = vld [vmem:[%s644 + $0x21] sm:$0xff]
      %v853 = vld [vmem:[%s644 + $0x31] sm:$0xff]
      %v854 = vld [vmem:[%s644 + $0x41] sm:$0xff]
      %v855 = vld [vmem:[%s644 + $0x51] sm:$0xff]
      %v856 = vld [vmem:[%s644 + $0x61] sm:$0xff]
      %v857 = vld [vmem:[%s644 + $0x71] sm:$0xff]
      %s858 = scalar_lea.vmem %s1, 20
      %v859 = vld [vmem:[%s858] sm:$0xf]
      %v861 = vsel %vm360, %v850, 0
      %v864 = vsel %vm360, %v851, 0
      %v867 = vsel %vm360, %v852, 0
      %v870 = vsel %vm360, %v853, 0
      %v873 = vsel %vm360, %v854, 0
      %v876 = vsel %vm360, %v855, 0
      %v879 = vsel %vm360, %v856, 0
      %v882 = vsel %vm360, %v857, 0
      %v885 = vsel %vm385, %v859, 0
      %887 = vmatpush.msra.mxu0 0.0
      %888 = vmatpush.msra.mxu0 0.0
      %889 = vmatpush.msra.mxu0 0.0
      %890 = vmatpush.msra.mxu0 0.0
      %891 = vmatpush.msra.mxu0 0.0
      %892 = vmatpush.msra.mxu0 0.0
      %893 = vmatpush.msra.mxu0 0.0
      %894 = vmatpush.msra.mxu0 0.0
      %895 = vmatpush.msra.mxu0 0.0
      %896 = vmatpush.msra.mxu0 0.0
      %897 = vmatpush.msra.mxu0 0.0
      %898 = vmatpush.msra.mxu0 0.0
      %899 = vmatpush.msra.mxu0 0.0
      %900 = vmatpush.msra.mxu0 0.0
      %901 = vmatpush.msra.mxu0 0.0
      %902 = vmatpush.msra.mxu0 %v885
      %903 = vmatmul.f32.gmra.mxu0 %v861
      %v904 = vpop.f32.mrf.mxu0
      %v905 = vadd.f32 0.0, %v904
      %906 = vmatmul.f32.gmra.mxu0 %v864
      %v907 = vpop.f32.mrf.mxu0
      %v908 = vadd.f32 0.0, %v907
      %909 = vmatmul.f32.gmra.mxu0 %v867
      %v910 = vpop.f32.mrf.mxu0
      %v911 = vadd.f32 0.0, %v910
      %912 = vmatmul.f32.gmra.mxu0 %v870
      %v913 = vpop.f32.mrf.mxu0
      %v914 = vadd.f32 0.0, %v913
      %915 = vmatmul.f32.gmra.mxu0 %v873
      %v916 = vpop.f32.mrf.mxu0
      %v917 = vadd.f32 0.0, %v916
      %918 = vmatmul.f32.gmra.mxu0 %v876
      %v919 = vpop.f32.mrf.mxu0
      %v920 = vadd.f32 0.0, %v919
      %921 = vmatmul.f32.gmra.mxu0 %v879
      %v922 = vpop.f32.mrf.mxu0
      %v923 = vadd.f32 0.0, %v922
      %924 = vmatmul.f32.gmra.mxu0 %v882
      %v925 = vpop.f32.mrf.mxu0
      %v926 = vadd.f32 0.0, %v925
      %927 = vdwg.mxu0
      %v928 = vld [vmem:[#allocation2] sm:$0xff]
      %v929 = vld [vmem:[#allocation2 + $0x8] sm:$0xff]
      %v930 = vld [vmem:[#allocation2 + $0x10] sm:$0xff]
      %v931 = vld [vmem:[#allocation2 + $0x18] sm:$0xff]
      %v932 = vld [vmem:[#allocation2 + $0x20] sm:$0xff]
      %v933 = vld [vmem:[#allocation2 + $0x28] sm:$0xff]
      %v934 = vld [vmem:[#allocation2 + $0x30] sm:$0xff]
      %v935 = vld [vmem:[#allocation2 + $0x38] sm:$0xff]
      %v936 = vadd.f32 %v928, %v905
      %v937 = vadd.f32 %v929, %v908
      %v938 = vadd.f32 %v930, %v911
      %v939 = vadd.f32 %v931, %v914
      %v940 = vadd.f32 %v932, %v917
      %v941 = vadd.f32 %v933, %v920
      %v942 = vadd.f32 %v934, %v923
      %v943 = vadd.f32 %v935, %v926
      %944 = vst.msk [vmem:[#allocation2] sm:$0xff] %vm430, %v936
      %945 = vst.msk [vmem:[#allocation2 + $0x8] sm:$0xff] %vm430, %v937
      %946 = vst.msk [vmem:[#allocation2 + $0x10] sm:$0xff] %vm430, %v938
      %947 = vst.msk [vmem:[#allocation2 + $0x18] sm:$0xff] %vm430, %v939
      %948 = vst.msk [vmem:[#allocation2 + $0x20] sm:$0xff] %vm430, %v940
      %949 = vst.msk [vmem:[#allocation2 + $0x28] sm:$0xff] %vm430, %v941
      %950 = vst.msk [vmem:[#allocation2 + $0x30] sm:$0xff] %vm430, %v942
      %951 = vst.msk [vmem:[#allocation2 + $0x38] sm:$0xff] %vm430, %v943
      %s952 = scalar_lea.vmem %s328, 16
      %v953 = vld [vmem:[%s952] sm:$0xff]
      %v954 = vld [vmem:[%s952 + $0x10] sm:$0xff]
      %v955 = vld [vmem:[%s952 + $0x20] sm:$0xff]
      %v956 = vld [vmem:[%s952 + $0x30] sm:$0xff]
      %v957 = vld [vmem:[%s952 + $0x40] sm:$0xff]
      %v958 = vld [vmem:[%s952 + $0x50] sm:$0xff]
      %v959 = vld [vmem:[%s952 + $0x60] sm:$0xff]
      %v960 = vld [vmem:[%s952 + $0x70] sm:$0xff]
      %s961 = scalar_lea.vmem %s1, 24
      %v962 = vld [vmem:[%s961] sm:$0xf]
      %v964 = vsel %vm360, %v953, 0
      %v967 = vsel %vm360, %v954, 0
      %v970 = vsel %vm360, %v955, 0
      %v973 = vsel %vm360, %v956, 0
      %v976 = vsel %vm360, %v957, 0
      %v979 = vsel %vm360, %v958, 0
      %v982 = vsel %vm360, %v959, 0
      %v985 = vsel %vm360, %v960, 0
      %v988 = vsel %vm385, %v962, 0
      %990 = vmatpush.msra.mxu0 0.0
      %991 = vmatpush.msra.mxu0 0.0
      %992 = vmatpush.msra.mxu0 0.0
      %993 = vmatpush.msra.mxu0 0.0
      %994 = vmatpush.msra.mxu0 0.0
      %995 = vmatpush.msra.mxu0 0.0
      %996 = vmatpush.msra.mxu0 0.0
      %997 = vmatpush.msra.mxu0 0.0
      %998 = vmatpush.msra.mxu0 0.0
      %999 = vmatpush.msra.mxu0 0.0
      %1000 = vmatpush.msra.mxu0 0.0
      %1001 = vmatpush.msra.mxu0 0.0
      %1002 = vmatpush.msra.mxu0 0.0
      %1003 = vmatpush.msra.mxu0 0.0
      %1004 = vmatpush.msra.mxu0 0.0
      %1005 = vmatpush.msra.mxu0 %v988
      %1006 = vmatmul.f32.gmra.mxu0 %v964
      %v1007 = vpop.f32.mrf.mxu0
      %v1008 = vadd.f32 0.0, %v1007
      %1009 = vmatmul.f32.gmra.mxu0 %v967
      %v1010 = vpop.f32.mrf.mxu0
      %v1011 = vadd.f32 0.0, %v1010
      %1012 = vmatmul.f32.gmra.mxu0 %v970
      %v1013 = vpop.f32.mrf.mxu0
      %v1014 = vadd.f32 0.0, %v1013
      %1015 = vmatmul.f32.gmra.mxu0 %v973
      %v1016 = vpop.f32.mrf.mxu0
      %v1017 = vadd.f32 0.0, %v1016
      %1018 = vmatmul.f32.gmra.mxu0 %v976
      %v1019 = vpop.f32.mrf.mxu0
      %v1020 = vadd.f32 0.0, %v1019
      %1021 = vmatmul.f32.gmra.mxu0 %v979
      %v1022 = vpop.f32.mrf.mxu0
      %v1023 = vadd.f32 0.0, %v1022
      %1024 = vmatmul.f32.gmra.mxu0 %v982
      %v1025 = vpop.f32.mrf.mxu0
      %v1026 = vadd.f32 0.0, %v1025
      %1027 = vmatmul.f32.gmra.mxu0 %v985
      %v1028 = vpop.f32.mrf.mxu0
      %v1029 = vadd.f32 0.0, %v1028
      %1030 = vdwg.mxu0
      %v1031 = vld [vmem:[#allocation2] sm:$0xff]
      %v1032 = vld [vmem:[#allocation2 + $0x8] sm:$0xff]
      %v1033 = vld [vmem:[#allocation2 + $0x10] sm:$0xff]
      %v1034 = vld [vmem:[#allocation2 + $0x18] sm:$0xff]
      %v1035 = vld [vmem:[#allocation2 + $0x20] sm:$0xff]
      %v1036 = vld [vmem:[#allocation2 + $0x28] sm:$0xff]
      %v1037 = vld [vmem:[#allocation2 + $0x30] sm:$0xff]
      %v1038 = vld [vmem:[#allocation2 + $0x38] sm:$0xff]
      %v1039 = vadd.f32 %v1031, %v1008
      %v1040 = vadd.f32 %v1032, %v1011
      %v1041 = vadd.f32 %v1033, %v1014
      %v1042 = vadd.f32 %v1034, %v1017
      %v1043 = vadd.f32 %v1035, %v1020
      %v1044 = vadd.f32 %v1036, %v1023
      %v1045 = vadd.f32 %v1037, %v1026
      %v1046 = vadd.f32 %v1038, %v1029
      %1047 = vst.msk [vmem:[#allocation2] sm:$0xff] %vm430, %v1039
      %1048 = vst.msk [vmem:[#allocation2 + $0x8] sm:$0xff] %vm430, %v1040
      %1049 = vst.msk [vmem:[#allocation2 + $0x10] sm:$0xff] %vm430, %v1041
      %1050 = vst.msk [vmem:[#allocation2 + $0x18] sm:$0xff] %vm430, %v1042
      %1051 = vst.msk [vmem:[#allocation2 + $0x20] sm:$0xff] %vm430, %v1043
      %1052 = vst.msk [vmem:[#allocation2 + $0x28] sm:$0xff] %vm430, %v1044
      %1053 = vst.msk [vmem:[#allocation2 + $0x30] sm:$0xff] %vm430, %v1045
      %1054 = vst.msk [vmem:[#allocation2 + $0x38] sm:$0xff] %vm430, %v1046
      %s1055 = scalar_lea.vmem %s328, 160
      %v1056 = vld [vmem:[%s1055] sm:$0xff]
      %v1057 = vld [vmem:[%s1055 + $0x10] sm:$0xff]
      %v1058 = vld [vmem:[%s1055 + $0x20] sm:$0xff]
      %v1059 = vld [vmem:[%s1055 + $0x30] sm:$0xff]
      %v1060 = vld [vmem:[%s1055 + $0x40] sm:$0xff]
      %v1061 = vld [vmem:[%s1055 + $0x50] sm:$0xff]
      %v1062 = vld [vmem:[%s1055 + $0x60] sm:$0xff]
      %v1063 = vld [vmem:[%s1055 + $0x70] sm:$0xff]
      %s1064 = scalar_lea.vmem %s1, 28
      %v1065 = vld [vmem:[%s1064] sm:$0xf]
      %v1067 = vsel %vm360, %v1056, 0
      %v1070 = vsel %vm360, %v1057, 0
      %v1073 = vsel %vm360, %v1058, 0
      %v1076 = vsel %vm360, %v1059, 0
      %v1079 = vsel %vm360, %v1060, 0
      %v1082 = vsel %vm360, %v1061, 0
      %v1085 = vsel %vm360, %v1062, 0
      %v1088 = vsel %vm360, %v1063, 0
      %v1091 = vsel %vm385, %v1065, 0
      %1093 = vmatpush.msra.mxu0 0.0
      %1094 = vmatpush.msra.mxu0 0.0
      %1095 = vmatpush.msra.mxu0 0.0
      %1096 = vmatpush.msra.mxu0 0.0
      %1097 = vmatpush.msra.mxu0 0.0
      %1098 = vmatpush.msra.mxu0 0.0
      %1099 = vmatpush.msra.mxu0 0.0
      %1100 = vmatpush.msra.mxu0 0.0
      %1101 = vmatpush.msra.mxu0 0.0
      %1102 = vmatpush.msra.mxu0 0.0
      %1103 = vmatpush.msra.mxu0 0.0
      %1104 = vmatpush.msra.mxu0 0.0
      %1105 = vmatpush.msra.mxu0 0.0
      %1106 = vmatpush.msra.mxu0 0.0
      %1107 = vmatpush.msra.mxu0 0.0
      %1108 = vmatpush.msra.mxu0 %v1091
      %1109 = vmatmul.f32.gmra.mxu0 %v1067
      %v1110 = vpop.f32.mrf.mxu0
      %v1111 = vadd.f32 0.0, %v1110
      %1112 = vmatmul.f32.gmra.mxu0 %v1070
      %v1113 = vpop.f32.mrf.mxu0
      %v1114 = vadd.f32 0.0, %v1113
      %1115 = vmatmul.f32.gmra.mxu0 %v1073
      %v1116 = vpop.f32.mrf.mxu0
      %v1117 = vadd.f32 0.0, %v1116
      %1118 = vmatmul.f32.gmra.mxu0 %v1076
      %v1119 = vpop.f32.mrf.mxu0
      %v1120 = vadd.f32 0.0, %v1119
      %1121 = vmatmul.f32.gmra.mxu0 %v1079
      %v1122 = vpop.f32.mrf.mxu0
      %v1123 = vadd.f32 0.0, %v1122
      %1124 = vmatmul.f32.gmra.mxu0 %v1082
      %v1125 = vpop.f32.mrf.mxu0
      %v1126 = vadd.f32 0.0, %v1125
      %1127 = vmatmul.f32.gmra.mxu0 %v1085
      %v1128 = vpop.f32.mrf.mxu0
      %v1129 = vadd.f32 0.0, %v1128
      %1130 = vmatmul.f32.gmra.mxu0 %v1088
      %v1131 = vpop.f32.mrf.mxu0
      %v1132 = vadd.f32 0.0, %v1131
      %1133 = vdwg.mxu0
      %v1134 = vld [vmem:[#allocation2] sm:$0xff]
      %v1135 = vld [vmem:[#allocation2 + $0x8] sm:$0xff]
      %v1136 = vld [vmem:[#allocation2 + $0x10] sm:$0xff]
      %v1137 = vld [vmem:[#allocation2 + $0x18] sm:$0xff]
      %v1138 = vld [vmem:[#allocation2 + $0x20] sm:$0xff]
      %v1139 = vld [vmem:[#allocation2 + $0x28] sm:$0xff]
      %v1140 = vld [vmem:[#allocation2 + $0x30] sm:$0xff]
      %v1141 = vld [vmem:[#allocation2 + $0x38] sm:$0xff]
      %v1142 = vadd.f32 %v1134, %v1111
      %v1143 = vadd.f32 %v1135, %v1114
      %v1144 = vadd.f32 %v1136, %v1117
      %v1145 = vadd.f32 %v1137, %v1120
      %v1146 = vadd.f32 %v1138, %v1123
      %v1147 = vadd.f32 %v1139, %v1126
      %v1148 = vadd.f32 %v1140, %v1129
      %v1149 = vadd.f32 %v1141, %v1132
      %1150 = vst.msk [vmem:[#allocation2] sm:$0xff] %vm430, %v1142
      %1151 = vst.msk [vmem:[#allocation2 + $0x8] sm:$0xff] %vm430, %v1143
      %1152 = vst.msk [vmem:[#allocation2 + $0x10] sm:$0xff] %vm430, %v1144
      %1153 = vst.msk [vmem:[#allocation2 + $0x18] sm:$0xff] %vm430, %v1145
      %1154 = vst.msk [vmem:[#allocation2 + $0x20] sm:$0xff] %vm430, %v1146
      %1155 = vst.msk [vmem:[#allocation2 + $0x28] sm:$0xff] %vm430, %v1147
      %1156 = vst.msk [vmem:[#allocation2 + $0x30] sm:$0xff] %vm430, %v1148
      %1157 = vst.msk [vmem:[#allocation2 + $0x38] sm:$0xff] %vm430, %v1149
      %v1158 = vld [vmem:[%s952 + $0x1] sm:$0xff]
      %v1159 = vld [vmem:[%s952 + $0x11] sm:$0xff]
      %v1160 = vld [vmem:[%s952 + $0x21] sm:$0xff]
      %v1161 = vld [vmem:[%s952 + $0x31] sm:$0xff]
      %v1162 = vld [vmem:[%s952 + $0x41] sm:$0xff]
      %v1163 = vld [vmem:[%s952 + $0x51] sm:$0xff]
      %v1164 = vld [vmem:[%s952 + $0x61] sm:$0xff]
      %v1165 = vld [vmem:[%s952 + $0x71] sm:$0xff]
      %s1166 = scalar_lea.vmem %s1, 32
      %v1167 = vld [vmem:[%s1166] sm:$0xf]
      %v1169 = vsel %vm360, %v1158, 0
      %v1172 = vsel %vm360, %v1159, 0
      %v1175 = vsel %vm360, %v1160, 0
      %v1178 = vsel %vm360, %v1161, 0
      %v1181 = vsel %vm360, %v1162, 0
      %v1184 = vsel %vm360, %v1163, 0
      %v1187 = vsel %vm360, %v1164, 0
      %v1190 = vsel %vm360, %v1165, 0
      %v1193 = vsel %vm385, %v1167, 0
      %1195 = vmatpush.msra.mxu0 0.0
      %1196 = vmatpush.msra.mxu0 0.0
      %1197 = vmatpush.msra.mxu0 0.0
      %1198 = vmatpush.msra.mxu0 0.0
      %1199 = vmatpush.msra.mxu0 0.0
      %1200 = vmatpush.msra.mxu0 0.0
      %1201 = vmatpush.msra.mxu0 0.0
      %1202 = vmatpush.msra.mxu0 0.0
      %1203 = vmatpush.msra.mxu0 0.0
      %1204 = vmatpush.msra.mxu0 0.0
      %1205 = vmatpush.msra.mxu0 0.0
      %1206 = vmatpush.msra.mxu0 0.0
      %1207 = vmatpush.msra.mxu0 0.0
      %1208 = vmatpush.msra.mxu0 0.0
      %1209 = vmatpush.msra.mxu0 0.0
      %1210 = vmatpush.msra.mxu0 %v1193
      %1211 = vmatmul.f32.gmra.mxu0 %v1169
      %v1212 = vpop.f32.mrf.mxu0
      %v1213 = vadd.f32 0.0, %v1212
      %1214 = vmatmul.f32.gmra.mxu0 %v1172
      %v1215 = vpop.f32.mrf.mxu0
      %v1216 = vadd.f32 0.0, %v1215
      %1217 = vmatmul.f32.gmra.mxu0 %v1175
      %v1218 = vpop.f32.mrf.mxu0
      %v1219 = vadd.f32 0.0, %v1218
      %1220 = vmatmul.f32.gmra.mxu0 %v1178
      %v1221 = vpop.f32.mrf.mxu0
      %v1222 = vadd.f32 0.0, %v1221
      %1223 = vmatmul.f32.gmra.mxu0 %v1181
      %v1224 = vpop.f32.mrf.mxu0
      %v1225 = vadd.f32 0.0, %v1224
      %1226 = vmatmul.f32.gmra.mxu0 %v1184
      %v1227 = vpop.f32.mrf.mxu0
      %v1228 = vadd.f32 0.0, %v1227
      %1229 = vmatmul.f32.gmra.mxu0 %v1187
      %v1230 = vpop.f32.mrf.mxu0
      %v1231 = vadd.f32 0.0, %v1230
      %1232 = vmatmul.f32.gmra.mxu0 %v1190
      %v1233 = vpop.f32.mrf.mxu0
      %v1234 = vadd.f32 0.0, %v1233
      %1235 = vdwg.mxu0
      %v1236 = vld [vmem:[#allocation2] sm:$0xff]
      %v1237 = vld [vmem:[#allocation2 + $0x8] sm:$0xff]
      %v1238 = vld [vmem:[#allocation2 + $0x10] sm:$0xff]
      %v1239 = vld [vmem:[#allocation2 + $0x18] sm:$0xff]
      %v1240 = vld [vmem:[#allocation2 + $0x20] sm:$0xff]
      %v1241 = vld [vmem:[#allocation2 + $0x28] sm:$0xff]
      %v1242 = vld [vmem:[#allocation2 + $0x30] sm:$0xff]
      %v1243 = vld [vmem:[#allocation2 + $0x38] sm:$0xff]
      %v1244 = vadd.f32 %v1236, %v1213
      %v1245 = vadd.f32 %v1237, %v1216
      %v1246 = vadd.f32 %v1238, %v1219
      %v1247 = vadd.f32 %v1239, %v1222
      %v1248 = vadd.f32 %v1240, %v1225
      %v1249 = vadd.f32 %v1241, %v1228
      %v1250 = vadd.f32 %v1242, %v1231
      %v1251 = vadd.f32 %v1243, %v1234
      %1252 = vst.msk [vmem:[#allocation2] sm:$0xff] %vm430, %v1244
      %1253 = vst.msk [vmem:[#allocation2 + $0x8] sm:$0xff] %vm430, %v1245
      %1254 = vst.msk [vmem:[#allocation2 + $0x10] sm:$0xff] %vm430, %v1246
      %1255 = vst.msk [vmem:[#allocation2 + $0x18] sm:$0xff] %vm430, %v1247
      %1256 = vst.msk [vmem:[#allocation2 + $0x20] sm:$0xff] %vm430, %v1248
      %1257 = vst.msk [vmem:[#allocation2 + $0x28] sm:$0xff] %vm430, %v1249
      %1258 = vst.msk [vmem:[#allocation2 + $0x30] sm:$0xff] %vm430, %v1250
      %1259 = vst.msk [vmem:[#allocation2 + $0x38] sm:$0xff] %vm430, %v1251
      %v1260 = vld [vmem:[#allocation2] sm:$0xff]
      %v1261 = vld [vmem:[#allocation2 + $0x8] sm:$0xff]
      %v1262 = vld [vmem:[#allocation2 + $0x10] sm:$0xff]
      %v1263 = vld [vmem:[#allocation2 + $0x18] sm:$0xff]
      %v1264 = vld [vmem:[#allocation2 + $0x20] sm:$0xff]
      %v1265 = vld [vmem:[#allocation2 + $0x28] sm:$0xff]
      %v1266 = vld [vmem:[#allocation2 + $0x30] sm:$0xff]
      %v1267 = vld [vmem:[#allocation2 + $0x38] sm:$0xff]
      %1268 = vst.msk [vmem:[%s333] sm:$0xff] %vm430, %v1260
      %1269 = vst.msk [vmem:[%s333 + $0x8] sm:$0xff] %vm430, %v1261
      %1270 = vst.msk [vmem:[%s333 + $0x10] sm:$0xff] %vm430, %v1262
      %1271 = vst.msk [vmem:[%s333 + $0x18] sm:$0xff] %vm430, %v1263
      %1272 = vst.msk [vmem:[%s333 + $0x20] sm:$0xff] %vm430, %v1264
      %1273 = vst.msk [vmem:[%s333 + $0x28] sm:$0xff] %vm430, %v1265
      %1274 = vst.msk [vmem:[%s333 + $0x30] sm:$0xff] %vm430, %v1266
      %1275 = vst.msk [vmem:[%s333 + $0x38] sm:$0xff] %vm430, %v1267
      %v1276 = vsel %vm430, %v1260, 0.0
      %v1277 = vsel %vm430, %v1261, 0.0
      %v1278 = vadd.f32 %v1276, %v1277
      %v1279 = vsel %vm430, %v1262, 0.0
      %v1280 = vadd.f32 %v1278, %v1279
      %v1281 = vsel %vm430, %v1263, 0.0
      %v1282 = vadd.f32 %v1280, %v1281
      %v1283 = vsel %vm430, %v1264, 0.0
      %v1284 = vadd.f32 %v1282, %v1283
      %v1285 = vsel %vm430, %v1265, 0.0
      %v1286 = vadd.f32 %v1284, %v1285
      %v1287 = vsel %vm430, %v1266, 0.0
      %v1288 = vadd.f32 %v1286, %v1287
      %v1289 = vsel %vm430, %v1267, 0.0
      %v1290 = vadd.f32 %v1288, %v1289
      %v1291 = vrot.slane %v1290, 4
      %v1292 = vadd.f32 %v1290, %v1291
      %v1293 = vrot.slane %v1292, 2
      %v1294 = vadd.f32 %v1292, %v1293
      %v1295 = vrot.slane %v1294, 1
      %v1296 = vadd.f32 %v1294, %v1295
      %vm1297 = vcmask 57344
      %1298 = vst.msk [vmem:[%s336] sm:$0x1] %vm1297, %v1296
      %v1299 = vmul.f32 %v1260, %v1260
      %v1300 = vmul.f32 %v1261, %v1261
      %v1301 = vmul.f32 %v1262, %v1262
      %v1302 = vmul.f32 %v1263, %v1263
      %v1303 = vmul.f32 %v1264, %v1264
      %v1304 = vmul.f32 %v1265, %v1265
      %v1305 = vmul.f32 %v1266, %v1266
      %v1306 = vmul.f32 %v1267, %v1267
      %v1307 = vsel %vm430, %v1299, 0.0
      %v1308 = vsel %vm430, %v1300, 0.0
      %v1309 = vadd.f32 %v1307, %v1308
      %v1310 = vsel %vm430, %v1301, 0.0
      %v1311 = vadd.f32 %v1309, %v1310
      %v1312 = vsel %vm430, %v1302, 0.0
      %v1313 = vadd.f32 %v1311, %v1312
      %v1314 = vsel %vm430, %v1303, 0.0
      %v1315 = vadd.f32 %v1313, %v1314
      %v1316 = vsel %vm430, %v1304, 0.0
      %v1317 = vadd.f32 %v1315, %v1316
      %v1318 = vsel %vm430, %v1305, 0.0
      %v1319 = vadd.f32 %v1317, %v1318
      %v1320 = vsel %vm430, %v1306, 0.0
      %v1321 = vadd.f32 %v1319, %v1320
      %v1322 = vrot.slane %v1321, 4
      %v1323 = vadd.f32 %v1321, %v1322
      %v1324 = vrot.slane %v1323, 2
      %v1325 = vadd.f32 %v1323, %v1324
      %v1326 = vrot.slane %v1325, 1
      %v1327 = vadd.f32 %v1325, %v1326
      %1328 = vst.msk [vmem:[%s339] sm:$0x1] %vm1297, %v1327
      %v1329 = vld [vmem:[%s747] sm:$0xff]
      %v1330 = vld [vmem:[%s747 + $0x10] sm:$0xff]
      %v1331 = vld [vmem:[%s747 + $0x20] sm:$0xff]
      %v1332 = vld [vmem:[%s747 + $0x30] sm:$0xff]
      %v1333 = vld [vmem:[%s747 + $0x40] sm:$0xff]
      %v1334 = vld [vmem:[%s747 + $0x50] sm:$0xff]
      %v1335 = vld [vmem:[%s747 + $0x60] sm:$0xff]
      %v1336 = vld [vmem:[%s747 + $0x70] sm:$0xff]
      %v1337 = vld [vmem:[%s2] sm:$0xf]
      %v1339 = vsel %vm360, %v1329, 0
      %v1342 = vsel %vm360, %v1330, 0
      %v1345 = vsel %vm360, %v1331, 0
      %v1348 = vsel %vm360, %v1332, 0
      %v1351 = vsel %vm360, %v1333, 0
      %v1354 = vsel %vm360, %v1334, 0
      %v1357 = vsel %vm360, %v1335, 0
      %v1360 = vsel %vm360, %v1336, 0
      %v1363 = vsel %vm385, %v1337, 0
      %1365 = vmatpush.msra.mxu0 0.0
      %1366 = vmatpush.msra.mxu0 0.0
      %1367 = vmatpush.msra.mxu0 0.0
      %1368 = vmatpush.msra.mxu0 0.0
      %1369 = vmatpush.msra.mxu0 0.0
      %1370 = vmatpush.msra.mxu0 0.0
      %1371 = vmatpush.msra.mxu0 0.0
      %1372 = vmatpush.msra.mxu0 0.0
      %1373 = vmatpush.msra.mxu0 0.0
      %1374 = vmatpush.msra.mxu0 0.0
      %1375 = vmatpush.msra.mxu0 0.0
      %1376 = vmatpush.msra.mxu0 0.0
      %1377 = vmatpush.msra.mxu0 0.0
      %1378 = vmatpush.msra.mxu0 0.0
      %1379 = vmatpush.msra.mxu0 0.0
      %1380 = vmatpush.msra.mxu0 %v1363
      %1381 = vmatmul.f32.gmra.mxu0 %v1339
      %v1382 = vpop.f32.mrf.mxu0
      %v1383 = vadd.f32 0.0, %v1382
      %1384 = vmatmul.f32.gmra.mxu0 %v1342
      %v1385 = vpop.f32.mrf.mxu0
      %v1386 = vadd.f32 0.0, %v1385
      %1387 = vmatmul.f32.gmra.mxu0 %v1345
      %v1388 = vpop.f32.mrf.mxu0
      %v1389 = vadd.f32 0.0, %v1388
      %1390 = vmatmul.f32.gmra.mxu0 %v1348
      %v1391 = vpop.f32.mrf.mxu0
      %v1392 = vadd.f32 0.0, %v1391
      %1393 = vmatmul.f32.gmra.mxu0 %v1351
      %v1394 = vpop.f32.mrf.mxu0
      %v1395 = vadd.f32 0.0, %v1394
      %1396 = vmatmul.f32.gmra.mxu0 %v1354
      %v1397 = vpop.f32.mrf.mxu0
      %v1398 = vadd.f32 0.0, %v1397
      %1399 = vmatmul.f32.gmra.mxu0 %v1357
      %v1400 = vpop.f32.mrf.mxu0
      %v1401 = vadd.f32 0.0, %v1400
      %1402 = vmatmul.f32.gmra.mxu0 %v1360
      %v1403 = vpop.f32.mrf.mxu0
      %v1404 = vadd.f32 0.0, %v1403
      %1405 = vdwg.mxu0
      %1406 = vst.msk [vmem:[%s344] sm:$0xff] %vm430, %v1383
      %1407 = vst.msk [vmem:[%s344 + $0x8] sm:$0xff] %vm430, %v1386
      %1408 = vst.msk [vmem:[%s344 + $0x10] sm:$0xff] %vm430, %v1389
      %1409 = vst.msk [vmem:[%s344 + $0x18] sm:$0xff] %vm430, %v1392
      %1410 = vst.msk [vmem:[%s344 + $0x20] sm:$0xff] %vm430, %v1395
      %1411 = vst.msk [vmem:[%s344 + $0x28] sm:$0xff] %vm430, %v1398
      %1412 = vst.msk [vmem:[%s344 + $0x30] sm:$0xff] %vm430, %v1401
      %1413 = vst.msk [vmem:[%s344 + $0x38] sm:$0xff] %vm430, %v1404
      %v1414 = vsel %vm430, %v1383, 0.0
      %v1415 = vsel %vm430, %v1386, 0.0
      %v1416 = vadd.f32 %v1414, %v1415
      %v1417 = vsel %vm430, %v1389, 0.0
      %v1418 = vadd.f32 %v1416, %v1417
      %v1419 = vsel %vm430, %v1392, 0.0
      %v1420 = vadd.f32 %v1418, %v1419
      %v1421 = vsel %vm430, %v1395, 0.0
      %v1422 = vadd.f32 %v1420, %v1421
      %v1423 = vsel %vm430, %v1398, 0.0
      %v1424 = vadd.f32 %v1422, %v1423
      %v1425 = vsel %vm430, %v1401, 0.0
      %v1426 = vadd.f32 %v1424, %v1425
      %v1427 = vsel %vm430, %v1404, 0.0
      %v1428 = vadd.f32 %v1426, %v1427
      %v1429 = vrot.slane %v1428, 4
      %v1430 = vadd.f32 %v1428, %v1429
      %v1431 = vrot.slane %v1430, 2
      %v1432 = vadd.f32 %v1430, %v1431
      %v1433 = vrot.slane %v1432, 1
      %v1434 = vadd.f32 %v1432, %v1433
      %1435 = vst.msk [vmem:[%s347] sm:$0x1] %vm1297, %v1434
      %v1436 = vmul.f32 %v1383, %v1383
      %v1437 = vmul.f32 %v1386, %v1386
      %v1438 = vmul.f32 %v1389, %v1389
      %v1439 = vmul.f32 %v1392, %v1392
      %v1440 = vmul.f32 %v1395, %v1395
      %v1441 = vmul.f32 %v1398, %v1398
      %v1442 = vmul.f32 %v1401, %v1401
      %v1443 = vmul.f32 %v1404, %v1404
      %v1444 = vsel %vm430, %v1436, 0.0
      %v1445 = vsel %vm430, %v1437, 0.0
      %v1446 = vadd.f32 %v1444, %v1445
      %v1447 = vsel %vm430, %v1438, 0.0
      %v1448 = vadd.f32 %v1446, %v1447
      %v1449 = vsel %vm430, %v1439, 0.0
      %v1450 = vadd.f32 %v1448, %v1449
      %v1451 = vsel %vm430, %v1440, 0.0
      %v1452 = vadd.f32 %v1450, %v1451
      %v1453 = vsel %vm430, %v1441, 0.0
      %v1454 = vadd.f32 %v1452, %v1453
      %v1455 = vsel %vm430, %v1442, 0.0
      %v1456 = vadd.f32 %v1454, %v1455
      %v1457 = vsel %vm430, %v1443, 0.0
      %v1458 = vadd.f32 %v1456, %v1457
      %v1459 = vrot.slane %v1458, 4
      %v1460 = vadd.f32 %v1458, %v1459
      %v1461 = vrot.slane %v1460, 2
      %v1462 = vadd.f32 %v1460, %v1461
      %v1463 = vrot.slane %v1462, 1
      %v1464 = vadd.f32 %v1462, %v1463
      %1465 = vst.msk [vmem:[%s350] sm:$0x1] %vm1297, %v1464
      %p1466 = scmp.lt.s32.totalorder %s20, 1
      %s1467 = scalar_select %p1466, %s20, 1
      %s1468 = smul.addr %s1467, 8
      %s1469 = smul.addr %s1468, 8
      %s1470 = scalar_lea.vmem %s3, %s1469
      %p1471 = scmp.lt.s32.totalorder %s20, 1
      %s1472 = scalar_select %p1471, %s20, 1
      %s1473 = scalar_lea.vmem %s4, %s1472
      %p1474 = scmp.lt.s32.totalorder %s20, 1
      %s1475 = scalar_select %p1474, %s20, 1
      %s1476 = scalar_lea.vmem %s5, %s1475
      %p1477 = scmp.lt.s32.totalorder %s20, 1
      %s1478 = scalar_select %p1477, %s20, 1
      %s1479 = smul.addr %s1478, 8
      %s1480 = smul.addr %s1479, 8
      %s1481 = scalar_lea.vmem %s6, %s1480
      %p1482 = scmp.lt.s32.totalorder %s20, 1
      %s1483 = scalar_select %p1482, %s20, 1
      %s1484 = scalar_lea.vmem %s7, %s1483
      %p1485 = scmp.lt.s32.totalorder %s20, 1
      %s1486 = scalar_select %p1485, %s20, 1
      %s1487 = scalar_lea.vmem %s8, %s1486
      // Predicated region
      $region33: #{basic_block_forward.3} parent=31 // pred_check
        %p1488 = pneg %p106
      $region34: #{basic_block_forward.3} parent=31 // pred_check_branch
        %1490 = sbr.rel (%p1488) target = $region36
      $region35: #{basic_block_forward.3} parent=31 // pred_region
        _
      $region36: #{basic_block_forward.3} parent=31 // pred_fallthru
        _
      // Predicated region
      $region37: #{basic_block_forward.3} parent=31 // pred_check
        %p1491 = pneg %p132
      $region38: #{basic_block_forward.3} parent=31 // pred_check_branch
        %1493 = sbr.rel (%p1491) target = $region40
      $region39: #{basic_block_forward.3} parent=31 // pred_region
        _
      $region40: #{basic_block_forward.3} parent=31 // pred_fallthru
        _
      // Predicated region
      $region41: #{basic_block_forward.3} parent=31 // pred_check
        %p1494 = pneg %p158
      $region42: #{basic_block_forward.3} parent=31 // pred_check_branch
        %1496 = sbr.rel (%p1494) target = $region44
      $region43: #{basic_block_forward.3} parent=31 // pred_region
        _
      $region44: #{basic_block_forward.3} parent=31 // pred_fallthru
        _
      // Predicated region
      $region45: #{basic_block_forward.3} parent=31 // pred_check
        %p1497 = pneg %p184
      $region46: #{basic_block_forward.3} parent=31 // pred_check_branch
        %1499 = sbr.rel (%p1497) target = $region48
      $region47: #{basic_block_forward.3} parent=31 // pred_region
        _
      $region48: #{basic_block_forward.3} parent=31 // pred_fallthru
        _
      // Predicated region
      $region49: #{basic_block_forward.3} parent=31 // pred_check
        %p1500 = pneg %p210
      $region50: #{basic_block_forward.3} parent=31 // pred_check_branch
        %1502 = sbr.rel (%p1500) target = $region52
      $region51: #{basic_block_forward.3} parent=31 // pred_region
        _
      $region52: #{basic_block_forward.3} parent=31 // pred_fallthru
        _
      // Predicated region
      $region53: #{basic_block_forward.3} parent=31 // pred_check
        %p1503 = pneg %p236
      $region54: #{basic_block_forward.3} parent=31 // pred_check_branch
        %1505 = sbr.rel (%p1503) target = $region56
      $region55: #{basic_block_forward.3} parent=31 // pred_region
        _
      $region56: #{basic_block_forward.3} parent=31 // pred_fallthru
        _
    $region32: #{basic_block_forward.3} parent=5 // pred_fallthru
      _
    %p1506 = scmp.le.s32.totalorder 2, %s15
    // Predicated region
    $region57: #{basic_block_forward.3} parent=5 // pred_check
      %p1507 = pneg %p1506
    $region58: #{basic_block_forward.3} parent=5 // pred_check_branch
      %1509 = sbr.rel (%p1507) target = $region60
    $region59: #{basic_block_forward.3} parent=5 // pred_region
      %s1510 = ssub.s32 %s15, 2
      // Predicated region
      $region61: #{basic_block_forward.3} parent=59 // pred_check
        %p1511 = pneg %p112
      $region62: #{basic_block_forward.3} parent=59 // pred_check_branch
        %1513 = sbr.rel (%p1511) target = $region64
      $region63: #{basic_block_forward.3} parent=59 // pred_region
        %p1514 = scmp.lt.s32.totalorder %s21, 1
        %s1515 = scalar_select %p1514, %s21, 1
        %s1516 = smul.addr %s1515, 8
        %s1517 = smul.addr %s1516, 8
        %s1518 = scalar_lea.vmem %s3, %s1517
      $region64: #{basic_block_forward.3} parent=59 // pred_fallthru
        _
      // Predicated region
      $region65: #{basic_block_forward.3} parent=59 // pred_check
        %p1519 = pneg %p138
      $region66: #{basic_block_forward.3} parent=59 // pred_check_branch
        %1521 = sbr.rel (%p1519) target = $region68
      $region67: #{basic_block_forward.3} parent=59 // pred_region
        %p1522 = scmp.lt.s32.totalorder %s21, 1
        %s1523 = scalar_select %p1522, %s21, 1
        %s1524 = scalar_lea.vmem %s4, %s1523
      $region68: #{basic_block_forward.3} parent=59 // pred_fallthru
        _
      // Predicated region
      $region69: #{basic_block_forward.3} parent=59 // pred_check
        %p1525 = pneg %p164
      $region70: #{basic_block_forward.3} parent=59 // pred_check_branch
        %1527 = sbr.rel (%p1525) target = $region72
      $region71: #{basic_block_forward.3} parent=59 // pred_region
        %p1528 = scmp.lt.s32.totalorder %s21, 1
        %s1529 = scalar_select %p1528, %s21, 1
        %s1530 = scalar_lea.vmem %s5, %s1529
      $region72: #{basic_block_forward.3} parent=59 // pred_fallthru
        _
      // Predicated region
      $region73: #{basic_block_forward.3} parent=59 // pred_check
        %p1531 = pneg %p190
      $region74: #{basic_block_forward.3} parent=59 // pred_check_branch
        %1533 = sbr.rel (%p1531) target = $region76
      $region75: #{basic_block_forward.3} parent=59 // pred_region
        %p1534 = scmp.lt.s32.totalorder %s21, 1
        %s1535 = scalar_select %p1534, %s21, 1
        %s1536 = smul.addr %s1535, 8
        %s1537 = smul.addr %s1536, 8
        %s1538 = scalar_lea.vmem %s6, %s1537
      $region76: #{basic_block_forward.3} parent=59 // pred_fallthru
        _
      // Predicated region
      $region77: #{basic_block_forward.3} parent=59 // pred_check
        %p1539 = pneg %p216
      $region78: #{basic_block_forward.3} parent=59 // pred_check_branch
        %1541 = sbr.rel (%p1539) target = $region80
      $region79: #{basic_block_forward.3} parent=59 // pred_region
        %p1542 = scmp.lt.s32.totalorder %s21, 1
        %s1543 = scalar_select %p1542, %s21, 1
        %s1544 = scalar_lea.vmem %s7, %s1543
      $region80: #{basic_block_forward.3} parent=59 // pred_fallthru
        _
      // Predicated region
      $region81: #{basic_block_forward.3} parent=59 // pred_check
        %p1545 = pneg %p242
      $region82: #{basic_block_forward.3} parent=59 // pred_check_branch
        %1547 = sbr.rel (%p1545) target = $region84
      $region83: #{basic_block_forward.3} parent=59 // pred_region
        %p1548 = scmp.lt.s32.totalorder %s21, 1
        %s1549 = scalar_select %p1548, %s21, 1
        %s1550 = scalar_lea.vmem %s8, %s1549
      $region84: #{basic_block_forward.3} parent=59 // pred_fallthru
        _
    $region60: #{basic_block_forward.3} parent=5 // pred_fallthru
      _
  $region6: #{basic_block_forward.3} parent=0 // loop_footer
    %s19 = sadd.s32 1, %s15
  $region7: #{basic_block_forward.3} parent=0 // loop_footer_branch
    %14 = sbr.rel target = $region3
  $region8: #{basic_block_forward.3} parent=0 // loop_exit
    _

// kernel: basic_block_forward.4
$region0: #{basic_block_forward.4}
  #allocation0 [shape = 'u32[]', space=smem, size = 0x4, offset = 0x4, fixed_abs, tag = 'smem constant byte address 0x4 - core index']
  #allocation1 [shape = 'u32[72,128]{1,0:T(1,128)}', space=vmem, size = 0x9000, scoped, tag = 'internal scratch']
  #allocation2 [shape = 'f32[64,8]{1,0:T(8,128)}', space=vmem, size = 0x8000, scoped, tag = 'scratch operand']
  %s0 = inlined_call_operand.vmem [shape: f32[2,1,10,10,8], index: 0, kind: input, shape index: {}]
  %s1 = inlined_call_operand.vmem [shape: f32[1,1,8], index: 1, kind: input, shape index: {}]
  %s2 = inlined_call_operand.vmem [shape: f32[1,1,8], index: 2, kind: input, shape index: {}]
  %s3 = inlined_call_operand.vmem [shape: f32[9,8,8], index: 3, kind: input, shape index: {}]
  %s4 = inlined_call_operand.vmem [shape: f32[2,64,8], index: 4, kind: output, shape index: {0}]
  %s5 = inlined_call_operand.vmem [shape: f32[2,1,8], index: 5, kind: output, shape index: {1}]
  %s6 = inlined_call_operand.vmem [shape: f32[2,1,8], index: 6, kind: output, shape index: {2}]
  %7 = xla_tuple %s4, %s5, %s6
  %s8 = sld [smem:[#allocation0]]
  $region65: #{basic_block_forward.4} parent=0
    _
  %s10 = ssub.s32 1, %s8
  %s11 = scalar_select 0, %s10, %s8
  loop: start=0, step=1, limit=4
  $region2: #{basic_block_forward.4} parent=0 // loop_pre_header
    _
  $region3: #{basic_block_forward.4} parent=0 // loop_header
    %s13 = sphi 0, %s17
    %p14 = scmp.ge.s32.totalorder %s13, 4
    %s23 = sphi 0, %s25
    %s26 = sphi 0, %s23
    %s27 = sphi 0, %s26
    %s43 = sphi 0, %s27
    %s47 = sphi 0, %s47
    %s49 = sphi 0, %s47
    %s50 = sphi 0, %s49
    %s64 = sphi 0, %s50
    %s68 = sphi 0, %s68
    %s70 = sphi 0, %s68
    %s71 = sphi 0, %s70
    %s85 = sphi 0, %s71
    %s89 = sphi 0, %s89
    %s91 = sphi 0, %s89
    %s92 = sphi 0, %s91
    %s106 = sphi 0, %s92
    %s112 = sphi 0, %s114
    %s115 = sphi 0, %s112
    %s116 = sphi 0, %s115
    %s132 = sphi 0, %s116
    %s138 = sphi 0, %s140
    %s141 = sphi 0, %s138
    %s142 = sphi 0, %s141
    %s158 = sphi 0, %s142
    %s164 = sphi 0, %s166
    %s167 = sphi 0, %s164
    %s168 = sphi 0, %s167
    %s184 = sphi 0, %s168
  $region4: #{basic_block_forward.4} parent=0 // loop_header_branch
    %16 = sbr.rel (%p14) target = $region8
  $region5: #{basic_block_forward.4} parent=0 // loop_body
    %s18 = ssub.s32 %s13, 1
    %s19 = ssub.s32 %s13, 2
    %s20 = sadd.s32 %s13, 1
    %s21 = ssub.s32 %s13, %s20
    %p22 = scmp.eq.s32.totalorder %s21, 0
    %s24 = sadd.s32 %s23, 1
    %s25 = scalar_select %p22, %s23, %s24
    %p28 = pneg %p22
    %p29 = scmp.eq.s32.totalorder %s13, 1
    %p30 = por %p28, %p29
    %p31 = scmp.ne.s32.totalorder %s23, %s26
    %p32 = scmp.eq.s32.totalorder %s13, 0
    %p33 = por %p31, %p32
    %p34 = scmp.ne.s32.totalorder %s23, %s26
    %p35 = scmp.eq.s32.totalorder %s18, 1
    %p36 = por %p34, %p35
    %p37 = scmp.ne.s32.totalorder %s26, %s27
    %p38 = scmp.eq.s32.totalorder %s18, 0
    %p39 = por %p37, %p38
    %p40 = scmp.ne.s32.totalorder %s26, %s27
    %p41 = scmp.eq.s32.totalorder %s19, 1
    %p42 = por %p40, %p41
    %p44 = scmp.ne.s32.totalorder %s27, %s43
    %p45 = scmp.eq.s32.totalorder %s19, 0
    %p46 = por %p44, %p45
    %s48 = sadd.s32 %s47, 1
    %p51 = scmp.eq.s32.totalorder %s13, 1
    %p52 = scmp.ne.s32.totalorder %s47, %s49
    %p53 = scmp.eq.s32.totalorder %s13, 0
    %p54 = por %p52, %p53
    %p55 = scmp.ne.s32.totalorder %s47, %s49
    %p56 = scmp.eq.s32.totalorder %s18, 1
    %p57 = por %p55, %p56
    %p58 = scmp.ne.s32.totalorder %s49, %s50
    %p59 = scmp.eq.s32.totalorder %s18, 0
    %p60 = por %p58, %p59
    %p61 = scmp.ne.s32.totalorder %s49, %s50
    %p62 = scmp.eq.s32.totalorder %s19, 1
    %p63 = por %p61, %p62
    %p65 = scmp.ne.s32.totalorder %s50, %s64
    %p66 = scmp.eq.s32.totalorder %s19, 0
    %p67 = por %p65, %p66
    %s69 = sadd.s32 %s68, 1
    %p72 = scmp.eq.s32.totalorder %s13, 1
    %p73 = scmp.ne.s32.totalorder %s68, %s70
    %p74 = scmp.eq.s32.totalorder %s13, 0
    %p75 = por %p73, %p74
    %p76 = scmp.ne.s32.totalorder %s68, %s70
    %p77 = scmp.eq.s32.totalorder %s18, 1
    %p78 = por %p76, %p77
    %p79 = scmp.ne.s32.totalorder %s70, %s71
    %p80 = scmp.eq.s32.totalorder %s18, 0
    %p81 = por %p79, %p80
    %p82 = scmp.ne.s32.totalorder %s70, %s71
    %p83 = scmp.eq.s32.totalorder %s19, 1
    %p84 = por %p82, %p83
    %p86 = scmp.ne.s32.totalorder %s71, %s85
    %p87 = scmp.eq.s32.totalorder %s19, 0
    %p88 = por %p86, %p87
    %s90 = sadd.s32 %s89, 1
    %p93 = scmp.eq.s32.totalorder %s13, 1
    %p94 = scmp.ne.s32.totalorder %s89, %s91
    %p95 = scmp.eq.s32.totalorder %s13, 0
    %p96 = por %p94, %p95
    %p97 = scmp.ne.s32.totalorder %s89, %s91
    %p98 = scmp.eq.s32.totalorder %s18, 1
    %p99 = por %p97, %p98
    %p100 = scmp.ne.s32.totalorder %s91, %s92
    %p101 = scmp.eq.s32.totalorder %s18, 0
    %p102 = por %p100, %p101
    %p103 = scmp.ne.s32.totalorder %s91, %s92
    %p104 = scmp.eq.s32.totalorder %s19, 1
    %p105 = por %p103, %p104
    %p107 = scmp.ne.s32.totalorder %s92, %s106
    %p108 = scmp.eq.s32.totalorder %s19, 0
    %p109 = por %p107, %p108
    %s110 = ssub.s32 %s13, %s20
    %p111 = scmp.eq.s32.totalorder %s110, 0
    %s113 = sadd.s32 %s112, 1
    %s114 = scalar_select %p111, %s112, %s113
    %p117 = pneg %p111
    %p118 = scmp.eq.s32.totalorder %s13, 1
    %p119 = por %p117, %p118
    %p120 = scmp.ne.s32.totalorder %s112, %s115
    %p121 = scmp.eq.s32.totalorder %s13, 0
    %p122 = por %p120, %p121
    %p123 = scmp.ne.s32.totalorder %s112, %s115
    %p124 = scmp.eq.s32.totalorder %s18, 1
    %p125 = por %p123, %p124
    %p126 = scmp.ne.s32.totalorder %s115, %s116
    %p127 = scmp.eq.s32.totalorder %s18, 0
    %p128 = por %p126, %p127
    %p129 = scmp.ne.s32.totalorder %s115, %s116
    %p130 = scmp.eq.s32.totalorder %s19, 1
    %p131 = por %p129, %p130
    %p133 = scmp.ne.s32.totalorder %s116, %s132
    %p134 = scmp.eq.s32.totalorder %s19, 0
    %p135 = por %p133, %p134
    %s136 = ssub.s32 %s13, %s20
    %p137 = scmp.eq.s32.totalorder %s136, 0
    %s139 = sadd.s32 %s138, 1
    %s140 = scalar_select %p137, %s138, %s139
    %p143 = pneg %p137
    %p144 = scmp.eq.s32.totalorder %s13, 1
    %p145 = por %p143, %p144
    %p146 = scmp.ne.s32.totalorder %s138, %s141
    %p147 = scmp.eq.s32.totalorder %s13, 0
    %p148 = por %p146, %p147
    %p149 = scmp.ne.s32.totalorder %s138, %s141
    %p150 = scmp.eq.s32.totalorder %s18, 1
    %p151 = por %p149, %p150
    %p152 = scmp.ne.s32.totalorder %s141, %s142
    %p153 = scmp.eq.s32.totalorder %s18, 0
    %p154 = por %p152, %p153
    %p155 = scmp.ne.s32.totalorder %s141, %s142
    %p156 = scmp.eq.s32.totalorder %s19, 1
    %p157 = por %p155, %p156
    %p159 = scmp.ne.s32.totalorder %s142, %s158
    %p160 = scmp.eq.s32.totalorder %s19, 0
    %p161 = por %p159, %p160
    %s162 = ssub.s32 %s13, %s20
    %p163 = scmp.eq.s32.totalorder %s162, 0
    %s165 = sadd.s32 %s164, 1
    %s166 = scalar_select %p163, %s164, %s165
    %p169 = pneg %p163
    %p170 = scmp.eq.s32.totalorder %s13, 1
    %p171 = por %p169, %p170
    %p172 = scmp.ne.s32.totalorder %s164, %s167
    %p173 = scmp.eq.s32.totalorder %s13, 0
    %p174 = por %p172, %p173
    %p175 = scmp.ne.s32.totalorder %s164, %s167
    %p176 = scmp.eq.s32.totalorder %s18, 1
    %p177 = por %p175, %p176
    %p178 = scmp.ne.s32.totalorder %s167, %s168
    %p179 = scmp.eq.s32.totalorder %s18, 0
    %p180 = por %p178, %p179
    %p181 = scmp.ne.s32.totalorder %s167, %s168
    %p182 = scmp.eq.s32.totalorder %s19, 1
    %p183 = por %p181, %p182
    %p185 = scmp.ne.s32.totalorder %s168, %s184
    %p186 = scmp.eq.s32.totalorder %s19, 0
    %p187 = por %p185, %p186
    %p188 = scmp.le.s32.totalorder 1, %s13
    %p189 = scmp.lt.s32.totalorder %s13, 3
    %p190 = pnand %p188, %p189
    %p191 = pneg %p190
    // Predicated region
    $region9: #{basic_block_forward.4} parent=5 // pred_check
      _
    $region10: #{basic_block_forward.4} parent=5 // pred_check_branch
      %193 = sbr.rel (%p190) target = $region12
    $region11: #{basic_block_forward.4} parent=5 // pred_region
      %s194 = ssub.s32 %s13, 1
      // Predicated region
      $region13: #{basic_block_forward.4} parent=11 // pred_check
        %p195 = pneg %p60
      $region14: #{basic_block_forward.4} parent=11 // pred_check_branch
        %197 = sbr.rel (%p195) target = $region16
      $region15: #{basic_block_forward.4} parent=11 // pred_region
        _
      $region16: #{basic_block_forward.4} parent=11 // pred_fallthru
        _
      // Predicated region
      $region17: #{basic_block_forward.4} parent=11 // pred_check
        %p198 = pneg %p81
      $region18: #{basic_block_forward.4} parent=11 // pred_check_branch
        %200 = sbr.rel (%p198) target = $region20
      $region19: #{basic_block_forward.4} parent=11 // pred_region
        _
      $region20: #{basic_block_forward.4} parent=11 // pred_fallthru
        _
      // Predicated region
      $region21: #{basic_block_forward.4} parent=11 // pred_check
        %p201 = pneg %p102
      $region22: #{basic_block_forward.4} parent=11 // pred_check_branch
        %203 = sbr.rel (%p201) target = $region24
      $region23: #{basic_block_forward.4} parent=11 // pred_region
        _
      $region24: #{basic_block_forward.4} parent=11 // pred_fallthru
        _
    $region12: #{basic_block_forward.4} parent=5 // pred_fallthru
      _
    %p204 = scmp.lt.s32.totalorder %s13, 2
    // Predicated region
    $region25: #{basic_block_forward.4} parent=5 // pred_check
      %p205 = pneg %p204
    $region26: #{basic_block_forward.4} parent=5 // pred_check_branch
      %207 = sbr.rel (%p205) target = $region28
    $region27: #{basic_block_forward.4} parent=5 // pred_region
      // Predicated region
      $region29: #{basic_block_forward.4} parent=27 // pred_check
        %p208 = pneg %p33
      $region30: #{basic_block_forward.4} parent=27 // pred_check_branch
        %210 = sbr.rel (%p208) target = $region32
      $region31: #{basic_block_forward.4} parent=27 // pred_region
        %p211 = scmp.lt.s32.totalorder %s13, 1
        %s212 = scalar_select %p211, %s13, 1
        %s213 = smul.addr %s212, 20
        %s214 = smul.addr %s213, 8
        %s215 = scalar_lea.vmem %s0, %s214
      $region32: #{basic_block_forward.4} parent=27 // pred_fallthru
        _
    $region28: #{basic_block_forward.4} parent=5 // pred_fallthru
      _
    %p216 = scmp.le.s32.totalorder 1, %s13
    %p217 = scmp.lt.s32.totalorder %s13, 3
    %p218 = pnand %p216, %p217
    %p219 = pneg %p218
    // Predicated region
    $region33: #{basic_block_forward.4} parent=5 // pred_check
      _
    $region34: #{basic_block_forward.4} parent=5 // pred_check_branch
      %221 = sbr.rel (%p218) target = $region36
    $region35: #{basic_block_forward.4} parent=5 // pred_region
      %s222 = ssub.s32 %s13, 1
      %p223 = scmp.lt.s32.totalorder %s18, 1
      %s224 = scalar_select %p223, %s18, 1
      %s225 = smul.addr %s224, 20
      %s226 = smul.addr %s225, 8
      %s227 = scalar_lea.vmem %s0, %s226
      %p228 = pneg %p39
      %p229 = pneg %p36
      %p230 = pneg %p60
      %p231 = pneg %p57
      %p232 = pneg %p81
      %p233 = pneg %p78
      %p234 = pneg %p102
      %p235 = pneg %p99
      %p236 = pneg %p128
      %p237 = pneg %p125
      %p238 = scmp.lt.s32.totalorder %s18, 1
      %s239 = scalar_select %p238, %s18, 1
      %s240 = smul.addr %s239, 8
      %s241 = smul.addr %s240, 8
      %s242 = scalar_lea.vmem %s4, %s241
      %p243 = pneg %p154
      %p244 = pneg %p151
      %p245 = scmp.lt.s32.totalorder %s18, 1
      %s246 = scalar_select %p245, %s18, 1
      %s247 = scalar_lea.vmem %s5, %s246
      %p248 = pneg %p180
      %p249 = pneg %p177
      %p250 = scmp.lt.s32.totalorder %s18, 1
      %s251 = scalar_select %p250, %s18, 1
      %s252 = scalar_lea.vmem %s6, %s251
      %p253 = scmp.lt.s32.totalorder %s18, 1
      %s254 = scalar_select %p253, %s18, 1
      %s255 = smul.addr %s254, 20
      %s256 = smul.addr %s255, 8
      %s257 = scalar_lea.vmem %s0, %s256
      %p258 = scmp.lt.s32.totalorder %s18, 1
      %s259 = scalar_select %p258, %s18, 1
      %s260 = smul.addr %s259, 8
      %s261 = smul.addr %s260, 8
      %s262 = scalar_lea.vmem %s4, %s261
      %p263 = scmp.lt.s32.totalorder %s18, 1
      %s264 = scalar_select %p263, %s18, 1
      %s265 = scalar_lea.vmem %s5, %s264
      %p266 = scmp.lt.s32.totalorder %s18, 1
      %s267 = scalar_select %p266, %s18, 1
      %s268 = scalar_lea.vmem %s6, %s267
      %v269 = vld [vmem:[%s257] sm:$0xff]
      %v270 = vld [vmem:[%s257 + $0x10] sm:$0xff]
      %v271 = vld [vmem:[%s257 + $0x20] sm:$0xff]
      %v272 = vld [vmem:[%s257 + $0x30] sm:$0xff]
      %v273 = vld [vmem:[%s257 + $0x40] sm:$0xff]
      %v274 = vld [vmem:[%s257 + $0x50] sm:$0xff]
      %v275 = vld [vmem:[%s257 + $0x60] sm:$0xff]
      %v276 = vld [vmem:[%s257 + $0x70] sm:$0xff]
      %v277 = vld [vmem:[%s1] sm:$0x1]
      %v279 = vperm.slane %v277, 0
      %v281 = vmul.f32 %v269, %v279
      %v282 = vmul.f32 %v270, %v279
      %v283 = vmul.f32 %v271, %v279
      %v284 = vmul.f32 %v272, %v279
      %v285 = vmul.f32 %v273, %v279
      %v286 = vmul.f32 %v274, %v279
      %v287 = vmul.f32 %v275, %v279
      %v288 = vmul.f32 %v276, %v279
      %v289 = vld [vmem:[%s2] sm:$0x1]
      %v291 = vperm.slane %v289, 0
      %v293 = vadd.f32 %v281, %v291
      %v294 = vadd.f32 %v282, %v291
      %v295 = vadd.f32 %v283, %v291
      %v296 = vadd.f32 %v284, %v291
      %v297 = vadd.f32 %v285, %v291
      %v298 = vadd.f32 %v286, %v291
      %v299 = vadd.f32 %v287, %v291
      %v300 = vadd.f32 %v288, %v291
      %v301 = vmax.f32 %v293, 0.0
      %v302 = vmax.f32 %v294, 0.0
      %v303 = vmax.f32 %v295, 0.0
      %v304 = vmax.f32 %v296, 0.0
      %v305 = vmax.f32 %v297, 0.0
      %v306 = vmax.f32 %v298, 0.0
      %v307 = vmax.f32 %v299, 0.0
      %v308 = vmax.f32 %v300, 0.0
      %v309 = vld [vmem:[%s3] sm:$0xff]
      %vm310 = vcmask 64512
      %v312 = vsel %vm310, %v301, 0
      %v315 = vsel %vm310, %v302, 0
      %v318 = vsel %vm310, %v303, 0
      %v321 = vsel %vm310, %v304, 0
      %v324 = vsel %vm310, %v305, 0
      %v327 = vsel %vm310, %v306, 0
      %v330 = vsel %vm310, %v307, 0
      %v333 = vsel %vm310, %v308, 0
      %335 = vmatpush.msra.mxu0 0.0
      %336 = vmatpush.msra.mxu0 0.0
      %337 = vmatpush.msra.mxu0 0.0
      %338 = vmatpush.msra.mxu0 0.0
      %339 = vmatpush.msra.mxu0 0.0
      %340 = vmatpush.msra.mxu0 0.0
      %341 = vmatpush.msra.mxu0 0.0
      %342 = vmatpush.msra.mxu0 0.0
      %343 = vmatpush.msra.mxu0 0.0
      %344 = vmatpush.msra.mxu0 0.0
      %345 = vmatpush.msra.mxu0 0.0
      %346 = vmatpush.msra.mxu0 0.0
      %347 = vmatpush.msra.mxu0 0.0
      %348 = vmatpush.msra.mxu0 0.0
      %349 = vmatpush.msra.mxu0 0.0
      %350 = vmatpush.msra.mxu0 %v309
      %351 = vmatmul.f32.gmra.mxu0 %v312
      %v352 = vpop.f32.mrf.mxu0
      %v353 = vadd.f32 0.0, %v352
      %354 = vmatmul.f32.gmra.mxu0 %v315
      %v355 = vpop.f32.mrf.mxu0
      %v356 = vadd.f32 0.0, %v355
      %357 = vmatmul.f32.gmra.mxu0 %v318
      %v358 = vpop.f32.mrf.mxu0
      %v359 = vadd.f32 0.0, %v358
      %360 = vmatmul.f32.gmra.mxu0 %v321
      %v361 = vpop.f32.mrf.mxu0
      %v362 = vadd.f32 0.0, %v361
      %363 = vmatmul.f32.gmra.mxu0 %v324
      %v364 = vpop.f32.mrf.mxu0
      %v365 = vadd.f32 0.0, %v364
      %366 = vmatmul.f32.gmra.mxu0 %v327
      %v367 = vpop.f32.mrf.mxu0
      %v368 = vadd.f32 0.0, %v367
      %369 = vmatmul.f32.gmra.mxu0 %v330
      %v370 = vpop.f32.mrf.mxu0
      %v371 = vadd.f32 0.0, %v370
      %372 = vmatmul.f32.gmra.mxu0 %v333
      %v373 = vpop.f32.mrf.mxu0
      %v374 = vadd.f32 0.0, %v373
      %375 = vdwg.mxu0
      %376 = vst.msk [vmem:[#allocation2] sm:$0xff] %vm310, %v353
      %377 = vst.msk [vmem:[#allocation2 + $0x8] sm:$0xff] %vm310, %v356
      %378 = vst.msk [vmem:[#allocation2 + $0x10] sm:$0xff] %vm310, %v359
      %379 = vst.msk [vmem:[#allocation2 + $0x18] sm:$0xff] %vm310, %v362
      %380 = vst.msk [vmem:[#allocation2 + $0x20] sm:$0xff] %vm310, %v365
      %381 = vst.msk [vmem:[#allocation2 + $0x28] sm:$0xff] %vm310, %v368
      %382 = vst.msk [vmem:[#allocation2 + $0x30] sm:$0xff] %vm310, %v371
      %383 = vst.msk [vmem:[#allocation2 + $0x38] sm:$0xff] %vm310, %v374
      %v384 = vld [vmem:[%s257 + $0x1] sm:$0xff]
      %v385 = vld [vmem:[%s257 + $0x11] sm:$0xff]
      %v386 = vld [vmem:[%s257 + $0x21] sm:$0xff]
      %v387 = vld [vmem:[%s257 + $0x31] sm:$0xff]
      %v388 = vld [vmem:[%s257 + $0x41] sm:$0xff]
      %v389 = vld [vmem:[%s257 + $0x51] sm:$0xff]
      %v390 = vld [vmem:[%s257 + $0x61] sm:$0xff]
      %v391 = vld [vmem:[%s257 + $0x71] sm:$0xff]
      %v392 = vld [vmem:[%s1] sm:$0x1]
      %v394 = vperm.slane %v392, 0
      %v396 = vmul.f32 %v384, %v394
      %v397 = vmul.f32 %v385, %v394
      %v398 = vmul.f32 %v386, %v394
      %v399 = vmul.f32 %v387, %v394
      %v400 = vmul.f32 %v388, %v394
      %v401 = vmul.f32 %v389, %v394
      %v402 = vmul.f32 %v390, %v394
      %v403 = vmul.f32 %v391, %v394
      %v404 = vld [vmem:[%s2] sm:$0x1]
      %v406 = vperm.slane %v404, 0
      %v408 = vadd.f32 %v396, %v406
      %v409 = vadd.f32 %v397, %v406
      %v410 = vadd.f32 %v398, %v406
      %v411 = vadd.f32 %v399, %v406
      %v412 = vadd.f32 %v400, %v406
      %v413 = vadd.f32 %v401, %v406
      %v414 = vadd.f32 %v402, %v406
      %v415 = vadd.f32 %v403, %v406
      %v416 = vmax.f32 %v408, 0.0
      %v417 = vmax.f32 %v409, 0.0
      %v418 = vmax.f32 %v410, 0.0
      %v419 = vmax.f32 %v411, 0.0
      %v420 = vmax.f32 %v412, 0.0
      %v421 = vmax.f32 %v413, 0.0
      %v422 = vmax.f32 %v414, 0.0
      %v423 = vmax.f32 %v415, 0.0
      %s424 = scalar_lea.vmem %s3, 8
      %v425 = vld [vmem:[%s424] sm:$0xff]
      %v427 = vsel %vm310, %v416, 0
      %v430 = vsel %vm310, %v417, 0
      %v433 = vsel %vm310, %v418, 0
      %v436 = vsel %vm310, %v419, 0
      %v439 = vsel %vm310, %v420, 0
      %v442 = vsel %vm310, %v421, 0
      %v445 = vsel %vm310, %v422, 0
      %v448 = vsel %vm310, %v423, 0
      %450 = vmatpush.msra.mxu0 0.0
      %451 = vmatpush.msra.mxu0 0.0
      %452 = vmatpush.msra.mxu0 0.0
      %453 = vmatpush.msra.mxu0 0.0
      %454 = vmatpush.msra.mxu0 0.0
      %455 = vmatpush.msra.mxu0 0.0
      %456 = vmatpush.msra.mxu0 0.0
      %457 = vmatpush.msra.mxu0 0.0
      %458 = vmatpush.msra.mxu0 0.0
      %459 = vmatpush.msra.mxu0 0.0
      %460 = vmatpush.msra.mxu0 0.0
      %461 = vmatpush.msra.mxu0 0.0
      %462 = vmatpush.msra.mxu0 0.0
      %463 = vmatpush.msra.mxu0 0.0
      %464 = vmatpush.msra.mxu0 0.0
      %465 = vmatpush.msra.mxu0 %v425
      %466 = vmatmul.f32.gmra.mxu0 %v427
      %v467 = vpop.f32.mrf.mxu0
      %v468 = vadd.f32 0.0, %v467
      %469 = vmatmul.f32.gmra.mxu0 %v430
      %v470 = vpop.f32.mrf.mxu0
      %v471 = vadd.f32 0.0, %v470
      %472 = vmatmul.f32.gmra.mxu0 %v433
      %v473 = vpop.f32.mrf.mxu0
      %v474 = vadd.f32 0.0, %v473
      %475 = vmatmul.f32.gmra.mxu0 %v436
      %v476 = vpop.f32.mrf.mxu0
      %v477 = vadd.f32 0.0, %v476
      %478 = vmatmul.f32.gmra.mxu0 %v439
      %v479 = vpop.f32.mrf.mxu0
      %v480 = vadd.f32 0.0, %v479
      %481 = vmatmul.f32.gmra.mxu0 %v442
      %v482 = vpop.f32.mrf.mxu0
      %v483 = vadd.f32 0.0, %v482
      %484 = vmatmul.f32.gmra.mxu0 %v445
      %v485 = vpop.f32.mrf.mxu0
      %v486 = vadd.f32 0.0, %v485
      %487 = vmatmul.f32.gmra.mxu0 %v448
      %v488 = vpop.f32.mrf.mxu0
      %v489 = vadd.f32 0.0, %v488
      %490 = vdwg.mxu0
      %v491 = vld [vmem:[#allocation2] sm:$0xff]
      %v492 = vld [vmem:[#allocation2 + $0x8] sm:$0xff]
      %v493 = vld [vmem:[#allocation2 + $0x10] sm:$0xff]
      %v494 = vld [vmem:[#allocation2 + $0x18] sm:$0xff]
      %v495 = vld [vmem:[#allocation2 + $0x20] sm:$0xff]
      %v496 = vld [vmem:[#allocation2 + $0x28] sm:$0xff]
      %v497 = vld [vmem:[#allocation2 + $0x30] sm:$0xff]
      %v498 = vld [vmem:[#allocation2 + $0x38] sm:$0xff]
      %v499 = vadd.f32 %v491, %v468
      %v500 = vadd.f32 %v492, %v471
      %v501 = vadd.f32 %v493, %v474
      %v502 = vadd.f32 %v494, %v477
      %v503 = vadd.f32 %v495, %v480
      %v504 = vadd.f32 %v496, %v483
      %v505 = vadd.f32 %v497, %v486
      %v506 = vadd.f32 %v498, %v489
      %507 = vst.msk [vmem:[#allocation2] sm:$0xff] %vm310, %v499
      %508 = vst.msk [vmem:[#allocation2 + $0x8] sm:$0xff] %vm310, %v500
      %509 = vst.msk [vmem:[#allocation2 + $0x10] sm:$0xff] %vm310, %v501
      %510 = vst.msk [vmem:[#allocation2 + $0x18] sm:$0xff] %vm310, %v502
      %511 = vst.msk [vmem:[#allocation2 + $0x20] sm:$0xff] %vm310, %v503
      %512 = vst.msk [vmem:[#allocation2 + $0x28] sm:$0xff] %vm310, %v504
      %513 = vst.msk [vmem:[#allocation2 + $0x30] sm:$0xff] %vm310, %v505
      %514 = vst.msk [vmem:[#allocation2 + $0x38] sm:$0xff] %vm310, %v506
      %v515 = vld [vmem:[%s257 + $0x2] sm:$0xff]
      %v516 = vld [vmem:[%s257 + $0x12] sm:$0xff]
      %v517 = vld [vmem:[%s257 + $0x22] sm:$0xff]
      %v518 = vld [vmem:[%s257 + $0x32] sm:$0xff]
      %v519 = vld [vmem:[%s257 + $0x42] sm:$0xff]
      %v520 = vld [vmem:[%s257 + $0x52] sm:$0xff]
      %v521 = vld [vmem:[%s257 + $0x62] sm:$0xff]
      %v522 = vld [vmem:[%s257 + $0x72] sm:$0xff]
      %v523 = vld [vmem:[%s1] sm:$0x1]
      %v525 = vperm.slane %v523, 0
      %v527 = vmul.f32 %v515, %v525
      %v528 = vmul.f32 %v516, %v525
      %v529 = vmul.f32 %v517, %v525
      %v530 = vmul.f32 %v518, %v525
      %v531 = vmul.f32 %v519, %v525
      %v532 = vmul.f32 %v520, %v525
      %v533 = vmul.f32 %v521, %v525
      %v534 = vmul.f32 %v522, %v525
      %v535 = vld [vmem:[%s2] sm:$0x1]
      %v537 = vperm.slane %v535, 0
      %v539 = vadd.f32 %v527, %v537
      %v540 = vadd.f32 %v528, %v537
      %v541 = vadd.f32 %v529, %v537
      %v542 = vadd.f32 %v530, %v537
      %v543 = vadd.f32 %v531, %v537
      %v544 = vadd.f32 %v532, %v537
      %v545 = vadd.f32 %v533, %v537
      %v546 = vadd.f32 %v534, %v537
      %v547 = vmax.f32 %v539, 0.0
      %v548 = vmax.f32 %v540, 0.0
      %v549 = vmax.f32 %v541, 0.0
      %v550 = vmax.f32 %v542, 0.0
      %v551 = vmax.f32 %v543, 0.0
      %v552 = vmax.f32 %v544, 0.0
      %v553 = vmax.f32 %v545, 0.0
      %v554 = vmax.f32 %v546, 0.0
      %s555 = scalar_lea.vmem %s3, 16
      %v556 = vld [vmem:[%s555] sm:$0xff]
      %v558 = vsel %vm310, %v547, 0
      %v561 = vsel %vm310, %v548, 0
      %v564 = vsel %vm310, %v549, 0
      %v567 = vsel %vm310, %v550, 0
      %v570 = vsel %vm310, %v551, 0
      %v573 = vsel %vm310, %v552, 0
      %v576 = vsel %vm310, %v553, 0
      %v579 = vsel %vm310, %v554, 0
      %581 = vmatpush.msra.mxu0 0.0
      %582 = vmatpush.msra.mxu0 0.0
      %583 = vmatpush.msra.mxu0 0.0
      %584 = vmatpush.msra.mxu0 0.0
      %585 = vmatpush.msra.mxu0 0.0
      %586 = vmatpush.msra.mxu0 0.0
      %587 = vmatpush.msra.mxu0 0.0
      %588 = vmatpush.msra.mxu0 0.0
      %589 = vmatpush.msra.mxu0 0.0
      %590 = vmatpush.msra.mxu0 0.0
      %591 = vmatpush.msra.mxu0 0.0
      %592 = vmatpush.msra.mxu0 0.0
      %593 = vmatpush.msra.mxu0 0.0
      %594 = vmatpush.msra.mxu0 0.0
      %595 = vmatpush.msra.mxu0 0.0
      %596 = vmatpush.msra.mxu0 %v556
      %597 = vmatmul.f32.gmra.mxu0 %v558
      %v598 = vpop.f32.mrf.mxu0
      %v599 = vadd.f32 0.0, %v598
      %600 = vmatmul.f32.gmra.mxu0 %v561
      %v601 = vpop.f32.mrf.mxu0
      %v602 = vadd.f32 0.0, %v601
      %603 = vmatmul.f32.gmra.mxu0 %v564
      %v604 = vpop.f32.mrf.mxu0
      %v605 = vadd.f32 0.0, %v604
      %606 = vmatmul.f32.gmra.mxu0 %v567
      %v607 = vpop.f32.mrf.mxu0
      %v608 = vadd.f32 0.0, %v607
      %609 = vmatmul.f32.gmra.mxu0 %v570
      %v610 = vpop.f32.mrf.mxu0
      %v611 = vadd.f32 0.0, %v610
      %612 = vmatmul.f32.gmra.mxu0 %v573
      %v613 = vpop.f32.mrf.mxu0
      %v614 = vadd.f32 0.0, %v613
      %615 = vmatmul.f32.gmra.mxu0 %v576
      %v616 = vpop.f32.mrf.mxu0
      %v617 = vadd.f32 0.0, %v616
      %618 = vmatmul.f32.gmra.mxu0 %v579
      %v619 = vpop.f32.mrf.mxu0
      %v620 = vadd.f32 0.0, %v619
      %621 = vdwg.mxu0
      %v622 = vld [vmem:[#allocation2] sm:$0xff]
      %v623 = vld [vmem:[#allocation2 + $0x8] sm:$0xff]
      %v624 = vld [vmem:[#allocation2 + $0x10] sm:$0xff]
      %v625 = vld [vmem:[#allocation2 + $0x18] sm:$0xff]
      %v626 = vld [vmem:[#allocation2 + $0x20] sm:$0xff]
      %v627 = vld [vmem:[#allocation2 + $0x28] sm:$0xff]
      %v628 = vld [vmem:[#allocation2 + $0x30] sm:$0xff]
      %v629 = vld [vmem:[#allocation2 + $0x38] sm:$0xff]
      %v630 = vadd.f32 %v622, %v599
      %v631 = vadd.f32 %v623, %v602
      %v632 = vadd.f32 %v624, %v605
      %v633 = vadd.f32 %v625, %v608
      %v634 = vadd.f32 %v626, %v611
      %v635 = vadd.f32 %v627, %v614
      %v636 = vadd.f32 %v628, %v617
      %v637 = vadd.f32 %v629, %v620
      %638 = vst.msk [vmem:[#allocation2] sm:$0xff] %vm310, %v630
      %639 = vst.msk [vmem:[#allocation2 + $0x8] sm:$0xff] %vm310, %v631
      %640 = vst.msk [vmem:[#allocation2 + $0x10] sm:$0xff] %vm310, %v632
      %641 = vst.msk [vmem:[#allocation2 + $0x18] sm:$0xff] %vm310, %v633
      %642 = vst.msk [vmem:[#allocation2 + $0x20] sm:$0xff] %vm310, %v634
      %643 = vst.msk [vmem:[#allocation2 + $0x28] sm:$0xff] %vm310, %v635
      %644 = vst.msk [vmem:[#allocation2 + $0x30] sm:$0xff] %vm310, %v636
      %645 = vst.msk [vmem:[#allocation2 + $0x38] sm:$0xff] %vm310, %v637
      %s646 = scalar_lea.vmem %s257, 16
      %v647 = vld [vmem:[%s646] sm:$0xff]
      %v648 = vld [vmem:[%s646 + $0x10] sm:$0xff]
      %v649 = vld [vmem:[%s646 + $0x20] sm:$0xff]
      %v650 = vld [vmem:[%s646 + $0x30] sm:$0xff]
      %v651 = vld [vmem:[%s646 + $0x40] sm:$0xff]
      %v652 = vld [vmem:[%s646 + $0x50] sm:$0xff]
      %v653 = vld [vmem:[%s646 + $0x60] sm:$0xff]
      %v654 = vld [vmem:[%s646 + $0x70] sm:$0xff]
      %v655 = vld [vmem:[%s1] sm:$0x1]
      %v657 = vperm.slane %v655, 0
      %v659 = vmul.f32 %v647, %v657
      %v660 = vmul.f32 %v648, %v657
      %v661 = vmul.f32 %v649, %v657
      %v662 = vmul.f32 %v650, %v657
      %v663 = vmul.f32 %v651, %v657
      %v664 = vmul.f32 %v652, %v657
      %v665 = vmul.f32 %v653, %v657
      %v666 = vmul.f32 %v654, %v657
      %v667 = vld [vmem:[%s2] sm:$0x1]
      %v669 = vperm.slane %v667, 0
      %v671 = vadd.f32 %v659, %v669
      %v672 = vadd.f32 %v660, %v669
      %v673 = vadd.f32 %v661, %v669
      %v674 = vadd.f32 %v662, %v669
      %v675 = vadd.f32 %v663, %v669
      %v676 = vadd.f32 %v664, %v669
      %v677 = vadd.f32 %v665, %v669
      %v678 = vadd.f32 %v666, %v669
      %v679 = vmax.f32 %v671, 0.0
      %v680 = vmax.f32 %v672, 0.0
      %v681 = vmax.f32 %v673, 0.0
      %v682 = vmax.f32 %v674, 0.0
      %v683 = vmax.f32 %v675, 0.0
      %v684 = vmax.f32 %v676, 0.0
      %v685 = vmax.f32 %v677, 0.0
      %v686 = vmax.f32 %v678, 0.0
      %s687 = scalar_lea.vmem %s3, 24
      %v688 = vld [vmem:[%s687] sm:$0xff]
      %v690 = vsel %vm310, %v679, 0
      %v693 = vsel %vm310, %v680, 0
      %v696 = vsel %vm310, %v681, 0
      %v699 = vsel %vm310, %v682, 0
      %v702 = vsel %vm310, %v683, 0
      %v705 = vsel %vm310, %v684, 0
      %v708 = vsel %vm310, %v685, 0
      %v711 = vsel %vm310, %v686, 0
      %713 = vmatpush.msra.mxu0 0.0
      %714 = vmatpush.msra.mxu0 0.0
      %715 = vmatpush.msra.mxu0 0.0
      %716 = vmatpush.msra.mxu0 0.0
      %717 = vmatpush.msra.mxu0 0.0
      %718 = vmatpush.msra.mxu0 0.0
      %719 = vmatpush.msra.mxu0 0.0
      %720 = vmatpush.msra.mxu0 0.0
      %721 = vmatpush.msra.mxu0 0.0
      %722 = vmatpush.msra.mxu0 0.0
      %723 = vmatpush.msra.mxu0 0.0
      %724 = vmatpush.msra.mxu0 0.0
      %725 = vmatpush.msra.mxu0 0.0
      %726 = vmatpush.msra.mxu0 0.0
      %727 = vmatpush.msra.mxu0 0.0
      %728 = vmatpush.msra.mxu0 %v688
      %729 = vmatmul.f32.gmra.mxu0 %v690
      %v730 = vpop.f32.mrf.mxu0
      %v731 = vadd.f32 0.0, %v730
      %732 = vmatmul.f32.gmra.mxu0 %v693
      %v733 = vpop.f32.mrf.mxu0
      %v734 = vadd.f32 0.0, %v733
      %735 = vmatmul.f32.gmra.mxu0 %v696
      %v736 = vpop.f32.mrf.mxu0
      %v737 = vadd.f32 0.0, %v736
      %738 = vmatmul.f32.gmra.mxu0 %v699
      %v739 = vpop.f32.mrf.mxu0
      %v740 = vadd.f32 0.0, %v739
      %741 = vmatmul.f32.gmra.mxu0 %v702
      %v742 = vpop.f32.mrf.mxu0
      %v743 = vadd.f32 0.0, %v742
      %744 = vmatmul.f32.gmra.mxu0 %v705
      %v745 = vpop.f32.mrf.mxu0
      %v746 = vadd.f32 0.0, %v745
      %747 = vmatmul.f32.gmra.mxu0 %v708
      %v748 = vpop.f32.mrf.mxu0
      %v749 = vadd.f32 0.0, %v748
      %750 = vmatmul.f32.gmra.mxu0 %v711
      %v751 = vpop.f32.mrf.mxu0
      %v752 = vadd.f32 0.0, %v751
      %753 = vdwg.mxu0
      %v754 = vld [vmem:[#allocation2] sm:$0xff]
      %v755 = vld [vmem:[#allocation2 + $0x8] sm:$0xff]
      %v756 = vld [vmem:[#allocation2 + $0x10] sm:$0xff]
      %v757 = vld [vmem:[#allocation2 + $0x18] sm:$0xff]
      %v758 = vld [vmem:[#allocation2 + $0x20] sm:$0xff]
      %v759 = vld [vmem:[#allocation2 + $0x28] sm:$0xff]
      %v760 = vld [vmem:[#allocation2 + $0x30] sm:$0xff]
      %v761 = vld [vmem:[#allocation2 + $0x38] sm:$0xff]
      %v762 = vadd.f32 %v754, %v731
      %v763 = vadd.f32 %v755, %v734
      %v764 = vadd.f32 %v756, %v737
      %v765 = vadd.f32 %v757, %v740
      %v766 = vadd.f32 %v758, %v743
      %v767 = vadd.f32 %v759, %v746
      %v768 = vadd.f32 %v760, %v749
      %v769 = vadd.f32 %v761, %v752
      %770 = vst.msk [vmem:[#allocation2] sm:$0xff] %vm310, %v762
      %771 = vst.msk [vmem:[#allocation2 + $0x8] sm:$0xff] %vm310, %v763
      %772 = vst.msk [vmem:[#allocation2 + $0x10] sm:$0xff] %vm310, %v764
      %773 = vst.msk [vmem:[#allocation2 + $0x18] sm:$0xff] %vm310, %v765
      %774 = vst.msk [vmem:[#allocation2 + $0x20] sm:$0xff] %vm310, %v766
      %775 = vst.msk [vmem:[#allocation2 + $0x28] sm:$0xff] %vm310, %v767
      %776 = vst.msk [vmem:[#allocation2 + $0x30] sm:$0xff] %vm310, %v768
      %777 = vst.msk [vmem:[#allocation2 + $0x38] sm:$0xff] %vm310, %v769
      %v778 = vld [vmem:[%s646 + $0x1] sm:$0xff]
      %v779 = vld [vmem:[%s646 + $0x11] sm:$0xff]
      %v780 = vld [vmem:[%s646 + $0x21] sm:$0xff]
      %v781 = vld [vmem:[%s646 + $0x31] sm:$0xff]
      %v782 = vld [vmem:[%s646 + $0x41] sm:$0xff]
      %v783 = vld [vmem:[%s646 + $0x51] sm:$0xff]
      %v784 = vld [vmem:[%s646 + $0x61] sm:$0xff]
      %v785 = vld [vmem:[%s646 + $0x71] sm:$0xff]
      %v786 = vld [vmem:[%s1] sm:$0x1]
      %v788 = vperm.slane %v786, 0
      %v790 = vmul.f32 %v778, %v788
      %v791 = vmul.f32 %v779, %v788
      %v792 = vmul.f32 %v780, %v788
      %v793 = vmul.f32 %v781, %v788
      %v794 = vmul.f32 %v782, %v788
      %v795 = vmul.f32 %v783, %v788
      %v796 = vmul.f32 %v784, %v788
      %v797 = vmul.f32 %v785, %v788
      %v798 = vld [vmem:[%s2] sm:$0x1]
      %v800 = vperm.slane %v798, 0
      %v802 = vadd.f32 %v790, %v800
      %v803 = vadd.f32 %v791, %v800
      %v804 = vadd.f32 %v792, %v800
      %v805 = vadd.f32 %v793, %v800
      %v806 = vadd.f32 %v794, %v800
      %v807 = vadd.f32 %v795, %v800
      %v808 = vadd.f32 %v796, %v800
      %v809 = vadd.f32 %v797, %v800
      %v810 = vmax.f32 %v802, 0.0
      %v811 = vmax.f32 %v803, 0.0
      %v812 = vmax.f32 %v804, 0.0
      %v813 = vmax.f32 %v805, 0.0
      %v814 = vmax.f32 %v806, 0.0
      %v815 = vmax.f32 %v807, 0.0
      %v816 = vmax.f32 %v808, 0.0
      %v817 = vmax.f32 %v809, 0.0
      %s818 = scalar_lea.vmem %s3, 32
      %v819 = vld [vmem:[%s818] sm:$0xff]
      %v821 = vsel %vm310, %v810, 0
      %v824 = vsel %vm310, %v811, 0
      %v827 = vsel %vm310, %v812, 0
      %v830 = vsel %vm310, %v813, 0
      %v833 = vsel %vm310, %v814, 0
      %v836 = vsel %vm310, %v815, 0
      %v839 = vsel %vm310, %v816, 0
      %v842 = vsel %vm310, %v817, 0
      %844 = vmatpush.msra.mxu0 0.0
      %845 = vmatpush.msra.mxu0 0.0
      %846 = vmatpush.msra.mxu0 0.0
      %847 = vmatpush.msra.mxu0 0.0
      %848 = vmatpush.msra.mxu0 0.0
      %849 = vmatpush.msra.mxu0 0.0
      %850 = vmatpush.msra.mxu0 0.0
      %851 = vmatpush.msra.mxu0 0.0
      %852 = vmatpush.msra.mxu0 0.0
      %853 = vmatpush.msra.mxu0 0.0
      %854 = vmatpush.msra.mxu0 0.0
      %855 = vmatpush.msra.mxu0 0.0
      %856 = vmatpush.msra.mxu0 0.0
      %857 = vmatpush.msra.mxu0 0.0
      %858 = vmatpush.msra.mxu0 0.0
      %859 = vmatpush.msra.mxu0 %v819
      %860 = vmatmul.f32.gmra.mxu0 %v821
      %v861 = vpop.f32.mrf.mxu0
      %v862 = vadd.f32 0.0, %v861
      %863 = vmatmul.f32.gmra.mxu0 %v824
      %v864 = vpop.f32.mrf.mxu0
      %v865 = vadd.f32 0.0, %v864
      %866 = vmatmul.f32.gmra.mxu0 %v827
      %v867 = vpop.f32.mrf.mxu0
      %v868 = vadd.f32 0.0, %v867
      %869 = vmatmul.f32.gmra.mxu0 %v830
      %v870 = vpop.f32.mrf.mxu0
      %v871 = vadd.f32 0.0, %v870
      %872 = vmatmul.f32.gmra.mxu0 %v833
      %v873 = vpop.f32.mrf.mxu0
      %v874 = vadd.f32 0.0, %v873
      %875 = vmatmul.f32.gmra.mxu0 %v836
      %v876 = vpop.f32.mrf.mxu0
      %v877 = vadd.f32 0.0, %v876
      %878 = vmatmul.f32.gmra.mxu0 %v839
      %v879 = vpop.f32.mrf.mxu0
      %v880 = vadd.f32 0.0, %v879
      %881 = vmatmul.f32.gmra.mxu0 %v842
      %v882 = vpop.f32.mrf.mxu0
      %v883 = vadd.f32 0.0, %v882
      %884 = vdwg.mxu0
      %v885 = vld [vmem:[#allocation2] sm:$0xff]
      %v886 = vld [vmem:[#allocation2 + $0x8] sm:$0xff]
      %v887 = vld [vmem:[#allocation2 + $0x10] sm:$0xff]
      %v888 = vld [vmem:[#allocation2 + $0x18] sm:$0xff]
      %v889 = vld [vmem:[#allocation2 + $0x20] sm:$0xff]
      %v890 = vld [vmem:[#allocation2 + $0x28] sm:$0xff]
      %v891 = vld [vmem:[#allocation2 + $0x30] sm:$0xff]
      %v892 = vld [vmem:[#allocation2 + $0x38] sm:$0xff]
      %v893 = vadd.f32 %v885, %v862
      %v894 = vadd.f32 %v886, %v865
      %v895 = vadd.f32 %v887, %v868
      %v896 = vadd.f32 %v888, %v871
      %v897 = vadd.f32 %v889, %v874
      %v898 = vadd.f32 %v890, %v877
      %v899 = vadd.f32 %v891, %v880
      %v900 = vadd.f32 %v892, %v883
      %901 = vst.msk [vmem:[#allocation2] sm:$0xff] %vm310, %v893
      %902 = vst.msk [vmem:[#allocation2 + $0x8] sm:$0xff] %vm310, %v894
      %903 = vst.msk [vmem:[#allocation2 + $0x10] sm:$0xff] %vm310, %v895
      %904 = vst.msk [vmem:[#allocation2 + $0x18] sm:$0xff] %vm310, %v896
      %905 = vst.msk [vmem:[#allocation2 + $0x20] sm:$0xff] %vm310, %v897
      %906 = vst.msk [vmem:[#allocation2 + $0x28] sm:$0xff] %vm310, %v898
      %907 = vst.msk [vmem:[#allocation2 + $0x30] sm:$0xff] %vm310, %v899
      %908 = vst.msk [vmem:[#allocation2 + $0x38] sm:$0xff] %vm310, %v900
      %v909 = vld [vmem:[%s646 + $0x2] sm:$0xff]
      %v910 = vld [vmem:[%s646 + $0x12] sm:$0xff]
      %v911 = vld [vmem:[%s646 + $0x22] sm:$0xff]
      %v912 = vld [vmem:[%s646 + $0x32] sm:$0xff]
      %v913 = vld [vmem:[%s646 + $0x42] sm:$0xff]
      %v914 = vld [vmem:[%s646 + $0x52] sm:$0xff]
      %v915 = vld [vmem:[%s646 + $0x62] sm:$0xff]
      %v916 = vld [vmem:[%s646 + $0x72] sm:$0xff]
      %v917 = vld [vmem:[%s1] sm:$0x1]
      %v919 = vperm.slane %v917, 0
      %v921 = vmul.f32 %v909, %v919
      %v922 = vmul.f32 %v910, %v919
      %v923 = vmul.f32 %v911, %v919
      %v924 = vmul.f32 %v912, %v919
      %v925 = vmul.f32 %v913, %v919
      %v926 = vmul.f32 %v914, %v919
      %v927 = vmul.f32 %v915, %v919
      %v928 = vmul.f32 %v916, %v919
      %v929 = vld [vmem:[%s2] sm:$0x1]
      %v931 = vperm.slane %v929, 0
      %v933 = vadd.f32 %v921, %v931
      %v934 = vadd.f32 %v922, %v931
      %v935 = vadd.f32 %v923, %v931
      %v936 = vadd.f32 %v924, %v931
      %v937 = vadd.f32 %v925, %v931
      %v938 = vadd.f32 %v926, %v931
      %v939 = vadd.f32 %v927, %v931
      %v940 = vadd.f32 %v928, %v931
      %v941 = vmax.f32 %v933, 0.0
      %v942 = vmax.f32 %v934, 0.0
      %v943 = vmax.f32 %v935, 0.0
      %v944 = vmax.f32 %v936, 0.0
      %v945 = vmax.f32 %v937, 0.0
      %v946 = vmax.f32 %v938, 0.0
      %v947 = vmax.f32 %v939, 0.0
      %v948 = vmax.f32 %v940, 0.0
      %s949 = scalar_lea.vmem %s3, 40
      %v950 = vld [vmem:[%s949] sm:$0xff]
      %v952 = vsel %vm310, %v941, 0
      %v955 = vsel %vm310, %v942, 0
      %v958 = vsel %vm310, %v943, 0
      %v961 = vsel %vm310, %v944, 0
      %v964 = vsel %vm310, %v945, 0
      %v967 = vsel %vm310, %v946, 0
      %v970 = vsel %vm310, %v947, 0
      %v973 = vsel %vm310, %v948, 0
      %975 = vmatpush.msra.mxu0 0.0
      %976 = vmatpush.msra.mxu0 0.0
      %977 = vmatpush.msra.mxu0 0.0
      %978 = vmatpush.msra.mxu0 0.0
      %979 = vmatpush.msra.mxu0 0.0
      %980 = vmatpush.msra.mxu0 0.0
      %981 = vmatpush.msra.mxu0 0.0
      %982 = vmatpush.msra.mxu0 0.0
      %983 = vmatpush.msra.mxu0 0.0
      %984 = vmatpush.msra.mxu0 0.0
      %985 = vmatpush.msra.mxu0 0.0
      %986 = vmatpush.msra.mxu0 0.0
      %987 = vmatpush.msra.mxu0 0.0
      %988 = vmatpush.msra.mxu0 0.0
      %989 = vmatpush.msra.mxu0 0.0
      %990 = vmatpush.msra.mxu0 %v950
      %991 = vmatmul.f32.gmra.mxu0 %v952
      %v992 = vpop.f32.mrf.mxu0
      %v993 = vadd.f32 0.0, %v992
      %994 = vmatmul.f32.gmra.mxu0 %v955
      %v995 = vpop.f32.mrf.mxu0
      %v996 = vadd.f32 0.0, %v995
      %997 = vmatmul.f32.gmra.mxu0 %v958
      %v998 = vpop.f32.mrf.mxu0
      %v999 = vadd.f32 0.0, %v998
      %1000 = vmatmul.f32.gmra.mxu0 %v961
      %v1001 = vpop.f32.mrf.mxu0
      %v1002 = vadd.f32 0.0, %v1001
      %1003 = vmatmul.f32.gmra.mxu0 %v964
      %v1004 = vpop.f32.mrf.mxu0
      %v1005 = vadd.f32 0.0, %v1004
      %1006 = vmatmul.f32.gmra.mxu0 %v967
      %v1007 = vpop.f32.mrf.mxu0
      %v1008 = vadd.f32 0.0, %v1007
      %1009 = vmatmul.f32.gmra.mxu0 %v970
      %v1010 = vpop.f32.mrf.mxu0
      %v1011 = vadd.f32 0.0, %v1010
      %1012 = vmatmul.f32.gmra.mxu0 %v973
      %v1013 = vpop.f32.mrf.mxu0
      %v1014 = vadd.f32 0.0, %v1013
      %1015 = vdwg.mxu0
      %v1016 = vld [vmem:[#allocation2] sm:$0xff]
      %v1017 = vld [vmem:[#allocation2 + $0x8] sm:$0xff]
      %v1018 = vld [vmem:[#allocation2 + $0x10] sm:$0xff]
      %v1019 = vld [vmem:[#allocation2 + $0x18] sm:$0xff]
      %v1020 = vld [vmem:[#allocation2 + $0x20] sm:$0xff]
      %v1021 = vld [vmem:[#allocation2 + $0x28] sm:$0xff]
      %v1022 = vld [vmem:[#allocation2 + $0x30] sm:$0xff]
      %v1023 = vld [vmem:[#allocation2 + $0x38] sm:$0xff]
      %v1024 = vadd.f32 %v1016, %v993
      %v1025 = vadd.f32 %v1017, %v996
      %v1026 = vadd.f32 %v1018, %v999
      %v1027 = vadd.f32 %v1019, %v1002
      %v1028 = vadd.f32 %v1020, %v1005
      %v1029 = vadd.f32 %v1021, %v1008
      %v1030 = vadd.f32 %v1022, %v1011
      %v1031 = vadd.f32 %v1023, %v1014
      %1032 = vst.msk [vmem:[#allocation2] sm:$0xff] %vm310, %v1024
      %1033 = vst.msk [vmem:[#allocation2 + $0x8] sm:$0xff] %vm310, %v1025
      %1034 = vst.msk [vmem:[#allocation2 + $0x10] sm:$0xff] %vm310, %v1026
      %1035 = vst.msk [vmem:[#allocation2 + $0x18] sm:$0xff] %vm310, %v1027
      %1036 = vst.msk [vmem:[#allocation2 + $0x20] sm:$0xff] %vm310, %v1028
      %1037 = vst.msk [vmem:[#allocation2 + $0x28] sm:$0xff] %vm310, %v1029
      %1038 = vst.msk [vmem:[#allocation2 + $0x30] sm:$0xff] %vm310, %v1030
      %1039 = vst.msk [vmem:[#allocation2 + $0x38] sm:$0xff] %vm310, %v1031
      %s1040 = scalar_lea.vmem %s257, 32
      %v1041 = vld [vmem:[%s1040] sm:$0xff]
      %v1042 = vld [vmem:[%s1040 + $0x10] sm:$0xff]
      %v1043 = vld [vmem:[%s1040 + $0x20] sm:$0xff]
      %v1044 = vld [vmem:[%s1040 + $0x30] sm:$0xff]
      %v1045 = vld [vmem:[%s1040 + $0x40] sm:$0xff]
      %v1046 = vld [vmem:[%s1040 + $0x50] sm:$0xff]
      %v1047 = vld [vmem:[%s1040 + $0x60] sm:$0xff]
      %v1048 = vld [vmem:[%s1040 + $0x70] sm:$0xff]
      %v1049 = vld [vmem:[%s1] sm:$0x1]
      %v1051 = vperm.slane %v1049, 0
      %v1053 = vmul.f32 %v1041, %v1051
      %v1054 = vmul.f32 %v1042, %v1051
      %v1055 = vmul.f32 %v1043, %v1051
      %v1056 = vmul.f32 %v1044, %v1051
      %v1057 = vmul.f32 %v1045, %v1051
      %v1058 = vmul.f32 %v1046, %v1051
      %v1059 = vmul.f32 %v1047, %v1051
      %v1060 = vmul.f32 %v1048, %v1051
      %v1061 = vld [vmem:[%s2] sm:$0x1]
      %v1063 = vperm.slane %v1061, 0
      %v1065 = vadd.f32 %v1053, %v1063
      %v1066 = vadd.f32 %v1054, %v1063
      %v1067 = vadd.f32 %v1055, %v1063
      %v1068 = vadd.f32 %v1056, %v1063
      %v1069 = vadd.f32 %v1057, %v1063
      %v1070 = vadd.f32 %v1058, %v1063
      %v1071 = vadd.f32 %v1059, %v1063
      %v1072 = vadd.f32 %v1060, %v1063
      %v1073 = vmax.f32 %v1065, 0.0
      %v1074 = vmax.f32 %v1066, 0.0
      %v1075 = vmax.f32 %v1067, 0.0
      %v1076 = vmax.f32 %v1068, 0.0
      %v1077 = vmax.f32 %v1069, 0.0
      %v1078 = vmax.f32 %v1070, 0.0
      %v1079 = vmax.f32 %v1071, 0.0
      %v1080 = vmax.f32 %v1072, 0.0
      %s1081 = scalar_lea.vmem %s3, 48
      %v1082 = vld [vmem:[%s1081] sm:$0xff]
      %v1084 = vsel %vm310, %v1073, 0
      %v1087 = vsel %vm310, %v1074, 0
      %v1090 = vsel %vm310, %v1075, 0
      %v1093 = vsel %vm310, %v1076, 0
      %v1096 = vsel %vm310, %v1077, 0
      %v1099 = vsel %vm310, %v1078, 0
      %v1102 = vsel %vm310, %v1079, 0
      %v1105 = vsel %vm310, %v1080, 0
      %1107 = vmatpush.msra.mxu0 0.0
      %1108 = vmatpush.msra.mxu0 0.0
      %1109 = vmatpush.msra.mxu0 0.0
      %1110 = vmatpush.msra.mxu0 0.0
      %1111 = vmatpush.msra.mxu0 0.0
      %1112 = vmatpush.msra.mxu0 0.0
      %1113 = vmatpush.msra.mxu0 0.0
      %1114 = vmatpush.msra.mxu0 0.0
      %1115 = vmatpush.msra.mxu0 0.0
      %1116 = vmatpush.msra.mxu0 0.0
      %1117 = vmatpush.msra.mxu0 0.0
      %1118 = vmatpush.msra.mxu0 0.0
      %1119 = vmatpush.msra.mxu0 0.0
      %1120 = vmatpush.msra.mxu0 0.0
      %1121 = vmatpush.msra.mxu0 0.0
      %1122 = vmatpush.msra.mxu0 %v1082
      %1123 = vmatmul.f32.gmra.mxu0 %v1084
      %v1124 = vpop.f32.mrf.mxu0
      %v1125 = vadd.f32 0.0, %v1124
      %1126 = vmatmul.f32.gmra.mxu0 %v1087
      %v1127 = vpop.f32.mrf.mxu0
      %v1128 = vadd.f32 0.0, %v1127
      %1129 = vmatmul.f32.gmra.mxu0 %v1090
      %v1130 = vpop.f32.mrf.mxu0
      %v1131 = vadd.f32 0.0, %v1130
      %1132 = vmatmul.f32.gmra.mxu0 %v1093
      %v1133 = vpop.f32.mrf.mxu0
      %v1134 = vadd.f32 0.0, %v1133
      %1135 = vmatmul.f32.gmra.mxu0 %v1096
      %v1136 = vpop.f32.mrf.mxu0
      %v1137 = vadd.f32 0.0, %v1136
      %1138 = vmatmul.f32.gmra.mxu0 %v1099
      %v1139 = vpop.f32.mrf.mxu0
      %v1140 = vadd.f32 0.0, %v1139
      %1141 = vmatmul.f32.gmra.mxu0 %v1102
      %v1142 = vpop.f32.mrf.mxu0
      %v1143 = vadd.f32 0.0, %v1142
      %1144 = vmatmul.f32.gmra.mxu0 %v1105
      %v1145 = vpop.f32.mrf.mxu0
      %v1146 = vadd.f32 0.0, %v1145
      %1147 = vdwg.mxu0
      %v1148 = vld [vmem:[#allocation2] sm:$0xff]
      %v1149 = vld [vmem:[#allocation2 + $0x8] sm:$0xff]
      %v1150 = vld [vmem:[#allocation2 + $0x10] sm:$0xff]
      %v1151 = vld [vmem:[#allocation2 + $0x18] sm:$0xff]
      %v1152 = vld [vmem:[#allocation2 + $0x20] sm:$0xff]
      %v1153 = vld [vmem:[#allocation2 + $0x28] sm:$0xff]
      %v1154 = vld [vmem:[#allocation2 + $0x30] sm:$0xff]
      %v1155 = vld [vmem:[#allocation2 + $0x38] sm:$0xff]
      %v1156 = vadd.f32 %v1148, %v1125
      %v1157 = vadd.f32 %v1149, %v1128
      %v1158 = vadd.f32 %v1150, %v1131
      %v1159 = vadd.f32 %v1151, %v1134
      %v1160 = vadd.f32 %v1152, %v1137
      %v1161 = vadd.f32 %v1153, %v1140
      %v1162 = vadd.f32 %v1154, %v1143
      %v1163 = vadd.f32 %v1155, %v1146
      %1164 = vst.msk [vmem:[#allocation2] sm:$0xff] %vm310, %v1156
      %1165 = vst.msk [vmem:[#allocation2 + $0x8] sm:$0xff] %vm310, %v1157
      %1166 = vst.msk [vmem:[#allocation2 + $0x10] sm:$0xff] %vm310, %v1158
      %1167 = vst.msk [vmem:[#allocation2 + $0x18] sm:$0xff] %vm310, %v1159
      %1168 = vst.msk [vmem:[#allocation2 + $0x20] sm:$0xff] %vm310, %v1160
      %1169 = vst.msk [vmem:[#allocation2 + $0x28] sm:$0xff] %vm310, %v1161
      %1170 = vst.msk [vmem:[#allocation2 + $0x30] sm:$0xff] %vm310, %v1162
      %1171 = vst.msk [vmem:[#allocation2 + $0x38] sm:$0xff] %vm310, %v1163
      %v1172 = vld [vmem:[%s1040 + $0x1] sm:$0xff]
      %v1173 = vld [vmem:[%s1040 + $0x11] sm:$0xff]
      %v1174 = vld [vmem:[%s1040 + $0x21] sm:$0xff]
      %v1175 = vld [vmem:[%s1040 + $0x31] sm:$0xff]
      %v1176 = vld [vmem:[%s1040 + $0x41] sm:$0xff]
      %v1177 = vld [vmem:[%s1040 + $0x51] sm:$0xff]
      %v1178 = vld [vmem:[%s1040 + $0x61] sm:$0xff]
      %v1179 = vld [vmem:[%s1040 + $0x71] sm:$0xff]
      %v1180 = vld [vmem:[%s1] sm:$0x1]
      %v1182 = vperm.slane %v1180, 0
      %v1184 = vmul.f32 %v1172, %v1182
      %v1185 = vmul.f32 %v1173, %v1182
      %v1186 = vmul.f32 %v1174, %v1182
      %v1187 = vmul.f32 %v1175, %v1182
      %v1188 = vmul.f32 %v1176, %v1182
      %v1189 = vmul.f32 %v1177, %v1182
      %v1190 = vmul.f32 %v1178, %v1182
      %v1191 = vmul.f32 %v1179, %v1182
      %v1192 = vld [vmem:[%s2] sm:$0x1]
      %v1194 = vperm.slane %v1192, 0
      %v1196 = vadd.f32 %v1184, %v1194
      %v1197 = vadd.f32 %v1185, %v1194
      %v1198 = vadd.f32 %v1186, %v1194
      %v1199 = vadd.f32 %v1187, %v1194
      %v1200 = vadd.f32 %v1188, %v1194
      %v1201 = vadd.f32 %v1189, %v1194
      %v1202 = vadd.f32 %v1190, %v1194
      %v1203 = vadd.f32 %v1191, %v1194
      %v1204 = vmax.f32 %v1196, 0.0
      %v1205 = vmax.f32 %v1197, 0.0
      %v1206 = vmax.f32 %v1198, 0.0
      %v1207 = vmax.f32 %v1199, 0.0
      %v1208 = vmax.f32 %v1200, 0.0
      %v1209 = vmax.f32 %v1201, 0.0
      %v1210 = vmax.f32 %v1202, 0.0
      %v1211 = vmax.f32 %v1203, 0.0
      %s1212 = scalar_lea.vmem %s3, 56
      %v1213 = vld [vmem:[%s1212] sm:$0xff]
      %v1215 = vsel %vm310, %v1204, 0
      %v1218 = vsel %vm310, %v1205, 0
      %v1221 = vsel %vm310, %v1206, 0
      %v1224 = vsel %vm310, %v1207, 0
      %v1227 = vsel %vm310, %v1208, 0
      %v1230 = vsel %vm310, %v1209, 0
      %v1233 = vsel %vm310, %v1210, 0
      %v1236 = vsel %vm310, %v1211, 0
      %1238 = vmatpush.msra.mxu0 0.0
      %1239 = vmatpush.msra.mxu0 0.0
      %1240 = vmatpush.msra.mxu0 0.0
      %1241 = vmatpush.msra.mxu0 0.0
      %1242 = vmatpush.msra.mxu0 0.0
      %1243 = vmatpush.msra.mxu0 0.0
      %1244 = vmatpush.msra.mxu0 0.0
      %1245 = vmatpush.msra.mxu0 0.0
      %1246 = vmatpush.msra.mxu0 0.0
      %1247 = vmatpush.msra.mxu0 0.0
      %1248 = vmatpush.msra.mxu0 0.0
      %1249 = vmatpush.msra.mxu0 0.0
      %1250 = vmatpush.msra.mxu0 0.0
      %1251 = vmatpush.msra.mxu0 0.0
      %1252 = vmatpush.msra.mxu0 0.0
      %1253 = vmatpush.msra.mxu0 %v1213
      %1254 = vmatmul.f32.gmra.mxu0 %v1215
      %v1255 = vpop.f32.mrf.mxu0
      %v1256 = vadd.f32 0.0, %v1255
      %1257 = vmatmul.f32.gmra.mxu0 %v1218
      %v1258 = vpop.f32.mrf.mxu0
      %v1259 = vadd.f32 0.0, %v1258
      %1260 = vmatmul.f32.gmra.mxu0 %v1221
      %v1261 = vpop.f32.mrf.mxu0
      %v1262 = vadd.f32 0.0, %v1261
      %1263 = vmatmul.f32.gmra.mxu0 %v1224
      %v1264 = vpop.f32.mrf.mxu0
      %v1265 = vadd.f32 0.0, %v1264
      %1266 = vmatmul.f32.gmra.mxu0 %v1227
      %v1267 = vpop.f32.mrf.mxu0
      %v1268 = vadd.f32 0.0, %v1267
      %1269 = vmatmul.f32.gmra.mxu0 %v1230
      %v1270 = vpop.f32.mrf.mxu0
      %v1271 = vadd.f32 0.0, %v1270
      %1272 = vmatmul.f32.gmra.mxu0 %v1233
      %v1273 = vpop.f32.mrf.mxu0
      %v1274 = vadd.f32 0.0, %v1273
      %1275 = vmatmul.f32.gmra.mxu0 %v1236
      %v1276 = vpop.f32.mrf.mxu0
      %v1277 = vadd.f32 0.0, %v1276
      %1278 = vdwg.mxu0
      %v1279 = vld [vmem:[#allocation2] sm:$0xff]
      %v1280 = vld [vmem:[#allocation2 + $0x8] sm:$0xff]
      %v1281 = vld [vmem:[#allocation2 + $0x10] sm:$0xff]
      %v1282 = vld [vmem:[#allocation2 + $0x18] sm:$0xff]
      %v1283 = vld [vmem:[#allocation2 + $0x20] sm:$0xff]
      %v1284 = vld [vmem:[#allocation2 + $0x28] sm:$0xff]
      %v1285 = vld [vmem:[#allocation2 + $0x30] sm:$0xff]
      %v1286 = vld [vmem:[#allocation2 + $0x38] sm:$0xff]
      %v1287 = vadd.f32 %v1279, %v1256
      %v1288 = vadd.f32 %v1280, %v1259
      %v1289 = vadd.f32 %v1281, %v1262
      %v1290 = vadd.f32 %v1282, %v1265
      %v1291 = vadd.f32 %v1283, %v1268
      %v1292 = vadd.f32 %v1284, %v1271
      %v1293 = vadd.f32 %v1285, %v1274
      %v1294 = vadd.f32 %v1286, %v1277
      %1295 = vst.msk [vmem:[#allocation2] sm:$0xff] %vm310, %v1287
      %1296 = vst.msk [vmem:[#allocation2 + $0x8] sm:$0xff] %vm310, %v1288
      %1297 = vst.msk [vmem:[#allocation2 + $0x10] sm:$0xff] %vm310, %v1289
      %1298 = vst.msk [vmem:[#allocation2 + $0x18] sm:$0xff] %vm310, %v1290
      %1299 = vst.msk [vmem:[#allocation2 + $0x20] sm:$0xff] %vm310, %v1291
      %1300 = vst.msk [vmem:[#allocation2 + $0x28] sm:$0xff] %vm310, %v1292
      %1301 = vst.msk [vmem:[#allocation2 + $0x30] sm:$0xff] %vm310, %v1293
      %1302 = vst.msk [vmem:[#allocation2 + $0x38] sm:$0xff] %vm310, %v1294
      %v1303 = vld [vmem:[%s1040 + $0x2] sm:$0xff]
      %v1304 = vld [vmem:[%s1040 + $0x12] sm:$0xff]
      %v1305 = vld [vmem:[%s1040 + $0x22] sm:$0xff]
      %v1306 = vld [vmem:[%s1040 + $0x32] sm:$0xff]
      %v1307 = vld [vmem:[%s1040 + $0x42] sm:$0xff]
      %v1308 = vld [vmem:[%s1040 + $0x52] sm:$0xff]
      %v1309 = vld [vmem:[%s1040 + $0x62] sm:$0xff]
      %v1310 = vld [vmem:[%s1040 + $0x72] sm:$0xff]
      %v1311 = vld [vmem:[%s1] sm:$0x1]
      %v1313 = vperm.slane %v1311, 0
      %v1315 = vmul.f32 %v1303, %v1313
      %v1316 = vmul.f32 %v1304, %v1313
      %v1317 = vmul.f32 %v1305, %v1313
      %v1318 = vmul.f32 %v1306, %v1313
      %v1319 = vmul.f32 %v1307, %v1313
      %v1320 = vmul.f32 %v1308, %v1313
      %v1321 = vmul.f32 %v1309, %v1313
      %v1322 = vmul.f32 %v1310, %v1313
      %v1323 = vld [vmem:[%s2] sm:$0x1]
      %v1325 = vperm.slane %v1323, 0
      %v1327 = vadd.f32 %v1315, %v1325
      %v1328 = vadd.f32 %v1316, %v1325
      %v1329 = vadd.f32 %v1317, %v1325
      %v1330 = vadd.f32 %v1318, %v1325
      %v1331 = vadd.f32 %v1319, %v1325
      %v1332 = vadd.f32 %v1320, %v1325
      %v1333 = vadd.f32 %v1321, %v1325
      %v1334 = vadd.f32 %v1322, %v1325
      %v1335 = vmax.f32 %v1327, 0.0
      %v1336 = vmax.f32 %v1328, 0.0
      %v1337 = vmax.f32 %v1329, 0.0
      %v1338 = vmax.f32 %v1330, 0.0
      %v1339 = vmax.f32 %v1331, 0.0
      %v1340 = vmax.f32 %v1332, 0.0
      %v1341 = vmax.f32 %v1333, 0.0
      %v1342 = vmax.f32 %v1334, 0.0
      %s1343 = scalar_lea.vmem %s3, 64
      %v1344 = vld [vmem:[%s1343] sm:$0xff]
      %v1346 = vsel %vm310, %v1335, 0
      %v1349 = vsel %vm310, %v1336, 0
      %v1352 = vsel %vm310, %v1337, 0
      %v1355 = vsel %vm310, %v1338, 0
      %v1358 = vsel %vm310, %v1339, 0
      %v1361 = vsel %vm310, %v1340, 0
      %v1364 = vsel %vm310, %v1341, 0
      %v1367 = vsel %vm310, %v1342, 0
      %1369 = vmatpush.msra.mxu0 0.0
      %1370 = vmatpush.msra.mxu0 0.0
      %1371 = vmatpush.msra.mxu0 0.0
      %1372 = vmatpush.msra.mxu0 0.0
      %1373 = vmatpush.msra.mxu0 0.0
      %1374 = vmatpush.msra.mxu0 0.0
      %1375 = vmatpush.msra.mxu0 0.0
      %1376 = vmatpush.msra.mxu0 0.0
      %1377 = vmatpush.msra.mxu0 0.0
      %1378 = vmatpush.msra.mxu0 0.0
      %1379 = vmatpush.msra.mxu0 0.0
      %1380 = vmatpush.msra.mxu0 0.0
      %1381 = vmatpush.msra.mxu0 0.0
      %1382 = vmatpush.msra.mxu0 0.0
      %1383 = vmatpush.msra.mxu0 0.0
      %1384 = vmatpush.msra.mxu0 %v1344
      %1385 = vmatmul.f32.gmra.mxu0 %v1346
      %v1386 = vpop.f32.mrf.mxu0
      %v1387 = vadd.f32 0.0, %v1386
      %1388 = vmatmul.f32.gmra.mxu0 %v1349
      %v1389 = vpop.f32.mrf.mxu0
      %v1390 = vadd.f32 0.0, %v1389
      %1391 = vmatmul.f32.gmra.mxu0 %v1352
      %v1392 = vpop.f32.mrf.mxu0
      %v1393 = vadd.f32 0.0, %v1392
      %1394 = vmatmul.f32.gmra.mxu0 %v1355
      %v1395 = vpop.f32.mrf.mxu0
      %v1396 = vadd.f32 0.0, %v1395
      %1397 = vmatmul.f32.gmra.mxu0 %v1358
      %v1398 = vpop.f32.mrf.mxu0
      %v1399 = vadd.f32 0.0, %v1398
      %1400 = vmatmul.f32.gmra.mxu0 %v1361
      %v1401 = vpop.f32.mrf.mxu0
      %v1402 = vadd.f32 0.0, %v1401
      %1403 = vmatmul.f32.gmra.mxu0 %v1364
      %v1404 = vpop.f32.mrf.mxu0
      %v1405 = vadd.f32 0.0, %v1404
      %1406 = vmatmul.f32.gmra.mxu0 %v1367
      %v1407 = vpop.f32.mrf.mxu0
      %v1408 = vadd.f32 0.0, %v1407
      %1409 = vdwg.mxu0
      %v1410 = vld [vmem:[#allocation2] sm:$0xff]
      %v1411 = vld [vmem:[#allocation2 + $0x8] sm:$0xff]
      %v1412 = vld [vmem:[#allocation2 + $0x10] sm:$0xff]
      %v1413 = vld [vmem:[#allocation2 + $0x18] sm:$0xff]
      %v1414 = vld [vmem:[#allocation2 + $0x20] sm:$0xff]
      %v1415 = vld [vmem:[#allocation2 + $0x28] sm:$0xff]
      %v1416 = vld [vmem:[#allocation2 + $0x30] sm:$0xff]
      %v1417 = vld [vmem:[#allocation2 + $0x38] sm:$0xff]
      %v1418 = vadd.f32 %v1410, %v1387
      %v1419 = vadd.f32 %v1411, %v1390
      %v1420 = vadd.f32 %v1412, %v1393
      %v1421 = vadd.f32 %v1413, %v1396
      %v1422 = vadd.f32 %v1414, %v1399
      %v1423 = vadd.f32 %v1415, %v1402
      %v1424 = vadd.f32 %v1416, %v1405
      %v1425 = vadd.f32 %v1417, %v1408
      %1426 = vst.msk [vmem:[#allocation2] sm:$0xff] %vm310, %v1418
      %1427 = vst.msk [vmem:[#allocation2 + $0x8] sm:$0xff] %vm310, %v1419
      %1428 = vst.msk [vmem:[#allocation2 + $0x10] sm:$0xff] %vm310, %v1420
      %1429 = vst.msk [vmem:[#allocation2 + $0x18] sm:$0xff] %vm310, %v1421
      %1430 = vst.msk [vmem:[#allocation2 + $0x20] sm:$0xff] %vm310, %v1422
      %1431 = vst.msk [vmem:[#allocation2 + $0x28] sm:$0xff] %vm310, %v1423
      %1432 = vst.msk [vmem:[#allocation2 + $0x30] sm:$0xff] %vm310, %v1424
      %1433 = vst.msk [vmem:[#allocation2 + $0x38] sm:$0xff] %vm310, %v1425
      %v1434 = vld [vmem:[#allocation2] sm:$0xff]
      %v1435 = vld [vmem:[#allocation2 + $0x8] sm:$0xff]
      %v1436 = vld [vmem:[#allocation2 + $0x10] sm:$0xff]
      %v1437 = vld [vmem:[#allocation2 + $0x18] sm:$0xff]
      %v1438 = vld [vmem:[#allocation2 + $0x20] sm:$0xff]
      %v1439 = vld [vmem:[#allocation2 + $0x28] sm:$0xff]
      %v1440 = vld [vmem:[#allocation2 + $0x30] sm:$0xff]
      %v1441 = vld [vmem:[#allocation2 + $0x38] sm:$0xff]
      %1442 = vst.msk [vmem:[%s262] sm:$0xff] %vm310, %v1434
      %1443 = vst.msk [vmem:[%s262 + $0x8] sm:$0xff] %vm310, %v1435
      %1444 = vst.msk [vmem:[%s262 + $0x10] sm:$0xff] %vm310, %v1436
      %1445 = vst.msk [vmem:[%s262 + $0x18] sm:$0xff] %vm310, %v1437
      %1446 = vst.msk [vmem:[%s262 + $0x20] sm:$0xff] %vm310, %v1438
      %1447 = vst.msk [vmem:[%s262 + $0x28] sm:$0xff] %vm310, %v1439
      %1448 = vst.msk [vmem:[%s262 + $0x30] sm:$0xff] %vm310, %v1440
      %1449 = vst.msk [vmem:[%s262 + $0x38] sm:$0xff] %vm310, %v1441
      %v1450 = vsel %vm310, %v1434, 0.0
      %v1451 = vsel %vm310, %v1435, 0.0
      %v1452 = vadd.f32 %v1450, %v1451
      %v1453 = vsel %vm310, %v1436, 0.0
      %v1454 = vadd.f32 %v1452, %v1453
      %v1455 = vsel %vm310, %v1437, 0.0
      %v1456 = vadd.f32 %v1454, %v1455
      %v1457 = vsel %vm310, %v1438, 0.0
      %v1458 = vadd.f32 %v1456, %v1457
      %v1459 = vsel %vm310, %v1439, 0.0
      %v1460 = vadd.f32 %v1458, %v1459
      %v1461 = vsel %vm310, %v1440, 0.0
      %v1462 = vadd.f32 %v1460, %v1461
      %v1463 = vsel %vm310, %v1441, 0.0
      %v1464 = vadd.f32 %v1462, %v1463
      %v1465 = vrot.slane %v1464, 4
      %v1466 = vadd.f32 %v1464, %v1465
      %v1467 = vrot.slane %v1466, 2
      %v1468 = vadd.f32 %v1466, %v1467
      %v1469 = vrot.slane %v1468, 1
      %v1470 = vadd.f32 %v1468, %v1469
      %vm1471 = vcmask 57344
      %1472 = vst.msk [vmem:[%s265] sm:$0x1] %vm1471, %v1470
      %v1473 = vmul.f32 %v1434, %v1434
      %v1474 = vmul.f32 %v1435, %v1435
      %v1475 = vmul.f32 %v1436, %v1436
      %v1476 = vmul.f32 %v1437, %v1437
      %v1477 = vmul.f32 %v1438, %v1438
      %v1478 = vmul.f32 %v1439, %v1439
      %v1479 = vmul.f32 %v1440, %v1440
      %v1480 = vmul.f32 %v1441, %v1441
      %v1481 = vsel %vm310, %v1473, 0.0
      %v1482 = vsel %vm310, %v1474, 0.0
      %v1483 = vadd.f32 %v1481, %v1482
      %v1484 = vsel %vm310, %v1475, 0.0
      %v1485 = vadd.f32 %v1483, %v1484
      %v1486 = vsel %vm310, %v1476, 0.0
      %v1487 = vadd.f32 %v1485, %v1486
      %v1488 = vsel %vm310, %v1477, 0.0
      %v1489 = vadd.f32 %v1487, %v1488
      %v1490 = vsel %vm310, %v1478, 0.0
      %v1491 = vadd.f32 %v1489, %v1490
      %v1492 = vsel %vm310, %v1479, 0.0
      %v1493 = vadd.f32 %v1491, %v1492
      %v1494 = vsel %vm310, %v1480, 0.0
      %v1495 = vadd.f32 %v1493, %v1494
      %v1496 = vrot.slane %v1495, 4
      %v1497 = vadd.f32 %v1495, %v1496
      %v1498 = vrot.slane %v1497, 2
      %v1499 = vadd.f32 %v1497, %v1498
      %v1500 = vrot.slane %v1499, 1
      %v1501 = vadd.f32 %v1499, %v1500
      %1502 = vst.msk [vmem:[%s268] sm:$0x1] %vm1471, %v1501
      %p1503 = scmp.lt.s32.totalorder %s18, 1
      %s1504 = scalar_select %p1503, %s18, 1
      %s1505 = smul.addr %s1504, 8
      %s1506 = smul.addr %s1505, 8
      %s1507 = scalar_lea.vmem %s4, %s1506
      %p1508 = scmp.lt.s32.totalorder %s18, 1
      %s1509 = scalar_select %p1508, %s18, 1
      %s1510 = scalar_lea.vmem %s5, %s1509
      %p1511 = scmp.lt.s32.totalorder %s18, 1
      %s1512 = scalar_select %p1511, %s18, 1
      %s1513 = scalar_lea.vmem %s6, %s1512
      // Predicated region
      $region37: #{basic_block_forward.4} parent=35 // pred_check
        %p1514 = pneg %p125
      $region38: #{basic_block_forward.4} parent=35 // pred_check_branch
        %1516 = sbr.rel (%p1514) target = $region40
      $region39: #{basic_block_forward.4} parent=35 // pred_region
        _
      $region40: #{basic_block_forward.4} parent=35 // pred_fallthru
        _
      // Predicated region
      $region41: #{basic_block_forward.4} parent=35 // pred_check
        %p1517 = pneg %p151
      $region42: #{basic_block_forward.4} parent=35 // pred_check_branch
        %1519 = sbr.rel (%p1517) target = $region44
      $region43: #{basic_block_forward.4} parent=35 // pred_region
        _
      $region44: #{basic_block_forward.4} parent=35 // pred_fallthru
        _
      // Predicated region
      $region45: #{basic_block_forward.4} parent=35 // pred_check
        %p1520 = pneg %p177
      $region46: #{basic_block_forward.4} parent=35 // pred_check_branch
        %1522 = sbr.rel (%p1520) target = $region48
      $region47: #{basic_block_forward.4} parent=35 // pred_region
        _
      $region48: #{basic_block_forward.4} parent=35 // pred_fallthru
        _
    $region36: #{basic_block_forward.4} parent=5 // pred_fallthru
      _
    %p1523 = scmp.le.s32.totalorder 2, %s13
    // Predicated region
    $region49: #{basic_block_forward.4} parent=5 // pred_check
      %p1524 = pneg %p1523
    $region50: #{basic_block_forward.4} parent=5 // pred_check_branch
      %1526 = sbr.rel (%p1524) target = $region52
    $region51: #{basic_block_forward.4} parent=5 // pred_region
      %s1527 = ssub.s32 %s13, 2
      // Predicated region
      $region53: #{basic_block_forward.4} parent=51 // pred_check
        %p1528 = pneg %p131
      $region54: #{basic_block_forward.4} parent=51 // pred_check_branch
        %1530 = sbr.rel (%p1528) target = $region56
      $region55: #{basic_block_forward.4} parent=51 // pred_region
        %p1531 = scmp.lt.s32.totalorder %s19, 1
        %s1532 = scalar_select %p1531, %s19, 1
        %s1533 = smul.addr %s1532, 8
        %s1534 = smul.addr %s1533, 8
        %s1535 = scalar_lea.vmem %s4, %s1534
      $region56: #{basic_block_forward.4} parent=51 // pred_fallthru
        _
      // Predicated region
      $region57: #{basic_block_forward.4} parent=51 // pred_check
        %p1536 = pneg %p157
      $region58: #{basic_block_forward.4} parent=51 // pred_check_branch
        %1538 = sbr.rel (%p1536) target = $region60
      $region59: #{basic_block_forward.4} parent=51 // pred_region
        %p1539 = scmp.lt.s32.totalorder %s19, 1
        %s1540 = scalar_select %p1539, %s19, 1
        %s1541 = scalar_lea.vmem %s5, %s1540
      $region60: #{basic_block_forward.4} parent=51 // pred_fallthru
        _
      // Predicated region
      $region61: #{basic_block_forward.4} parent=51 // pred_check
        %p1542 = pneg %p183
      $region62: #{basic_block_forward.4} parent=51 // pred_check_branch
        %1544 = sbr.rel (%p1542) target = $region64
      $region63: #{basic_block_forward.4} parent=51 // pred_region
        %p1545 = scmp.lt.s32.totalorder %s19, 1
        %s1546 = scalar_select %p1545, %s19, 1
        %s1547 = scalar_lea.vmem %s6, %s1546
      $region64: #{basic_block_forward.4} parent=51 // pred_fallthru
        _
    $region52: #{basic_block_forward.4} parent=5 // pred_fallthru
      _
  $region6: #{basic_block_forward.4} parent=0 // loop_footer
    %s17 = sadd.s32 1, %s13
  $region7: #{basic_block_forward.4} parent=0 // loop_footer_branch
    %12 = sbr.rel target = $region3
  $region8: #{basic_block_forward.4} parent=0 // loop_exit
    _

</llo_original>
